<compile_context>
chip_gen: v7x
topology: tpu7x:2x2x1
jax: 0.10.0
libtpu: 0.0.40
codegen_flags: <defaults>
</compile_context>

<pallas_src>
import numpy as np
import jax
import jax.numpy as jnp
from jax.experimental import pallas as pl
from jax.experimental.pallas import tpu as pltpu

NUM_POINTS = 256         # N points (small synthetic size)
OUT_CH = 15              # output_channels
EPS = 1e-5               # BatchNorm eps
PAD_K = 8                # conv1 contraction dim padded 3 -> 8 for the MXU dot
N_CHUNKS = 4             # row chunks for the fused conv5 + max-pool
BIAS_W = 1024            # lane width of the packed bias slab


# ---------------------------------------------------------------------------
# Pallas kernel: per-point MLP (5 x conv1x1 [BN folded] + ReLU)
# -> global max pool -> linear1+BN6+ReLU -> (dropout=identity, eval) -> linear2.
# Single invocation; all operands VMEM-resident except wl1 (manual overlapped DMA).
# ---------------------------------------------------------------------------
def pointnet_kernel(
    x_ref,          # (N, 8)        f32   (points, K padded 3->8)
    w1_ref,         # (8, 64)       bf16
    w23_ref,        # (2, 64, 64)   bf16  (conv2, conv3 stacked)
    w4_ref,         # (64, 128)     bf16
    w5_ref,         # (128, 1024)   bf16
    wl1_hbm_ref,    # (1024, 512)   bf16  raw HBM ref (memory_space=pl.ANY)
    wl2_ref,        # (512, 15)     bf16
    bias_ref,       # (8, 1024)     f32   packed biases b1..b6, bl2 (zero padded)
    out_ref,        # (1, 15)       f32
    wl1_vmem,       # (1024, 512)   bf16  scratch
    wl1_sem,        # ()            DMA semaphore
):
    # ---- Kick off the linear1 weight fetch; it overlaps the entire conv stack.
    wl1_copy = pltpu.make_async_copy(wl1_hbm_ref, wl1_vmem, wl1_sem)
    wl1_copy.start()

    # ---- conv1 (+ folded BN1) + ReLU: (256,8) @ (8,64) on the MXU -----------
    h = jnp.dot(x_ref[...].astype(jnp.bfloat16), w1_ref[...],
                preferred_element_type=jnp.float32)            # (N, 64)
    h = jnp.maximum(h + bias_ref[0:1, 0:64], 0.0)

    # ---- conv2..conv4: bf16 MXU matmuls, f32 bias + ReLU ---------------------
    def dense_relu(h_f32, w_bf16, b_f32):
        y = jnp.dot(h_f32.astype(jnp.bfloat16), w_bf16,
                    preferred_element_type=jnp.float32)
        return jnp.maximum(y + b_f32, 0.0)

    h = dense_relu(h, w23_ref[0], bias_ref[1:2, 0:64])          # (N, 64)
    h = dense_relu(h, w23_ref[1], bias_ref[2:3, 0:64])          # (N, 64)
    h = dense_relu(h, w4_ref[...], bias_ref[3:4, 0:128])        # (N, 128)

    # ---- conv5 (+BN5+ReLU) fused with adaptive_max_pool1d(1) -----------------
    # Row-chunked so the (256, 1024) f32 activation is never fully materialized
    # and re-read through VMEM; only the (1, 1024) running max is kept.
    w5 = w5_ref[...]
    b5 = bias_ref[4:5, 0:1024]
    chunk = NUM_POINTS // N_CHUNKS
    f = None
    for c in range(N_CHUNKS):
        hc = h[c * chunk:(c + 1) * chunk, :].astype(jnp.bfloat16)
        y = jnp.dot(hc, w5, preferred_element_type=jnp.float32)  # (chunk, 1024)
        y = jnp.maximum(y + b5, 0.0)
        cm = jnp.max(y, axis=0, keepdims=True)                    # (1, 1024)
        f = cm if f is None else jnp.maximum(f, cm)
    # f == F.adaptive_max_pool1d(x, 1).squeeze().view(1, 1024)

    # ---- linear1 + folded BN6 + ReLU (weights arrive via the overlapped DMA) -
    wl1_copy.wait()
    g = jnp.dot(f.astype(jnp.bfloat16), wl1_vmem[...],
                preferred_element_type=jnp.float32)               # (1, 512)
    g = jnp.maximum(g + bias_ref[5:6, 0:512], 0.0)

    # TODO(synk): nn.Dropout() is identity in eval mode; training-mode random mask not implemented.

    # ---- linear2 (with bias) --------------------------------------------------
    out_ref[...] = (
        jnp.dot(g.astype(jnp.bfloat16), wl2_ref[...],
                preferred_element_type=jnp.float32)
        + bias_ref[6:7, 0:OUT_CH]
    )                                                             # (1, 15)


def pointnet_forward(x_pad, kernel_params):
    """x_pad: (N, 8) f32 points (K padded). kernel_params: 7 packed arrays."""
    w1, w23, w4, w5, wl1, wl2, biases = kernel_params
    vmem = pl.BlockSpec(memory_space=pltpu.MemorySpace.VMEM)
    hbm = pl.BlockSpec(memory_space=pl.ANY)   # wl1 stays in HBM; manual DMA in-kernel
    return pl.pallas_call(
        pointnet_kernel,
        out_shape=jax.ShapeDtypeStruct((1, OUT_CH), jnp.float32),
        in_specs=[vmem, vmem, vmem, vmem, vmem, hbm, vmem, vmem],
        out_specs=vmem,
        scratch_shapes=[
            pltpu.VMEM((1024, 512), jnp.bfloat16),   # wl1 landing buffer
            pltpu.SemaphoreType.DMA(()),             # its completion semaphore
        ],
    )(x_pad, w1, w23, w4, w5, wl1, wl2, biases)


# ---------------------------------------------------------------------------
# Deterministic parameter construction (matmul-oriented, BN folded).
# make_params() returns the 14 f32 reference arrays; to_kernel_params() packs
# them into the 7 kernel operands (bf16 MXU weights, coalesced f32 bias slab).
# ---------------------------------------------------------------------------
def make_params(key):
    keys = jax.random.split(key, 7)

    def conv_w(k, cin, cout):
        # Conv1d / Linear weight (cout, cin[, 1]) stored transposed as (cin, cout).
        return (jax.random.normal(k, (cin, cout), jnp.float32)
                / np.sqrt(cin)).astype(jnp.float32)

    def bn_fold(k, c):
        k1, k2, k3, k4 = jax.random.split(k, 4)
        gamma = jax.random.uniform(k1, (c,), jnp.float32, 0.5, 1.5)
        beta = 0.1 * jax.random.normal(k2, (c,), jnp.float32)
        mean = 0.1 * jax.random.normal(k3, (c,), jnp.float32)
        var = jax.random.uniform(k4, (c,), jnp.float32, 0.5, 1.5)
        scale = gamma / jnp.sqrt(var + EPS)
        bias = beta - mean * scale
        return scale, bias

    dims = [(3, 64), (64, 64), (64, 64), (64, 128), (128, 1024)]
    params = []
    for idx, (cin, cout) in enumerate(dims):
        kw, kb = jax.random.split(keys[idx], 2)
        w = conv_w(kw, cin, cout)
        s, b = bn_fold(kb, cout)
        params.append(w * s[None, :])       # fold BN scale into weight columns
        params.append(b[None, :])           # (1, cout) bias

    kw1, kb6 = jax.random.split(keys[5], 2)
    wl1 = conv_w(kw1, 1024, 512)            # linear1.weight.T (1024, 512)
    s6, b6 = bn_fold(kb6, 512)
    params += [wl1 * s6[None, :], b6[None, :]]

    kw2, kb2 = jax.random.split(keys[6], 2)
    wl2 = conv_w(kw2, 512, OUT_CH)          # linear2.weight.T (512, 15)
    bl2 = 0.1 * jax.random.normal(kb2, (1, OUT_CH), jnp.float32)
    params += [wl2, bl2]
    return tuple(params)


def pack_biases(bias_list):
    """Pack per-layer (1, c) biases into a single (8, BIAS_W) f32 slab."""
    rows = []
    for b in bias_list:
        c = b.shape[1]
        rows.append(jnp.pad(b, ((0, 0), (0, BIAS_W - c))))
    while len(rows) < 8:
        rows.append(jnp.zeros((1, BIAS_W), jnp.float32))
    return jnp.concatenate(rows, axis=0)     # (8, 1024)


def to_kernel_params(params_f32):
    (w1, b1, w2, b2, w3, b3, w4, b4, w5, b5, wl1, b6, wl2, bl2) = params_f32
    bf = lambda w: w.astype(jnp.bfloat16)
    w1p = jnp.pad(w1, ((0, PAD_K - 3), (0, 0)))      # (8, 64) zero-padded K
    w23 = jnp.stack([w2, w3], axis=0)                # (2, 64, 64)
    biases = pack_biases([b1, b2, b3, b4, b5, b6, bl2])
    # MXU weights go to bf16 (halves weight DMA bytes, doubles MXU throughput);
    # biases and all elementwise math stay f32 (v5e has no bf16 VPU).
    return (bf(w1p), bf(w23), bf(w4), bf(w5), bf(wl1), bf(wl2), biases)


def pointnet_reference(x_n3, params_f32):
    (w1, b1, w2, b2, w3, b3, w4, b4, w5, b5, wl1, b6, wl2, bl2) = params_f32
    h = x_n3
    for w, b in [(w1, b1), (w2, b2), (w3, b3), (w4, b4), (w5, b5)]:
        h = jnp.maximum(h @ w + b, 0.0)
    f = jnp.max(h, axis=0, keepdims=True)             # (1, 1024)
    g = jnp.maximum(f @ wl1 + b6, 0.0)                # (1, 512)
    return g @ wl2 + bl2                              # (1, 15)


if __name__ == "__main__":
    key = jax.random.PRNGKey(0)
    kx, kp = jax.random.split(key)

    # PyTorch input would be (1, 3, NUM_POINTS) in NCW; reshape to (N, 3) and
    # zero-pad the channel (contraction) dim to 8 for the conv1 MXU dot.
    x_ncw = jax.random.normal(kx, (1, 3, NUM_POINTS), jnp.float32)
    x_n3 = jnp.transpose(x_ncw[0], (1, 0))            # (N, 3)
    x_pad = jnp.pad(x_n3, ((0, 0), (0, PAD_K - 3)))   # (N, 8)

    params_f32 = make_params(kp)
    kernel_params = to_kernel_params(params_f32)

    logits = pointnet_forward(x_pad, kernel_params)
    logits = jax.block_until_ready(logits)

    ref = pointnet_reference(x_n3, params_f32)
    np.testing.assert_allclose(np.asarray(logits), np.asarray(ref),
                               rtol=2e-2, atol=1e-1)
    assert logits.shape == (1, OUT_CH)

    print("KERNEL_OK")
</pallas_src>

<mosaic_0001>
module attributes {stable_mosaic.version = 11 : i64} {
  func.func @pointnet_kernel(%arg0: memref<256x8xf32, #tpu.memory_space<vmem>>, %arg1: memref<8x64xbf16, #tpu.memory_space<vmem>>, %arg2: memref<2x64x64xbf16, #tpu.memory_space<vmem>>, %arg3: memref<64x128xbf16, #tpu.memory_space<vmem>>, %arg4: memref<128x1024xbf16, #tpu.memory_space<vmem>>, %arg5: memref<1024x512xbf16, #tpu.memory_space<any>>, %arg6: memref<512x15xbf16, #tpu.memory_space<vmem>>, %arg7: memref<8x1024xf32, #tpu.memory_space<vmem>>, %arg8: memref<1x15xf32, #tpu.memory_space<vmem>>, %arg9: memref<1024x512xbf16, #tpu.memory_space<vmem>>, %arg10: memref<!tpu.dma_semaphore, #tpu.memory_space<semaphore_mem>>) attributes {dimension_semantics = [], scalar_prefetch = 0 : i64, scratch_operands = 2 : i64, tpu.core_type = #tpu.core_type<tc>} {
    tpu.enqueue_dma source(%arg5 : memref<1024x512xbf16, #tpu.memory_space<any>>) target(%arg9 : memref<1024x512xbf16, #tpu.memory_space<vmem>>) target_semaphore(%arg10 : memref<!tpu.dma_semaphore, #tpu.memory_space<semaphore_mem>>)
    %c0 = arith.constant 0 : index
    %c0_0 = arith.constant 0 : index
    %0 = vector.load %arg0[%c0, %c0_0] : memref<256x8xf32, #tpu.memory_space<vmem>>, vector<256x8xf32>
    %1 = arith.truncf %0 : vector<256x8xf32> to vector<256x8xbf16>
    %c0_1 = arith.constant 0 : index
    %c0_2 = arith.constant 0 : index
    %2 = vector.load %arg1[%c0_1, %c0_2] : memref<8x64xbf16, #tpu.memory_space<vmem>>, vector<8x64xbf16>
    %cst = arith.constant dense<0.000000e+00> : vector<256x64xf32>
    %3 = tpu.matmul %1, %2, %cst {dimension_numbers = #tpu.dot_dimension_numbers<[1], [0], [0], [1], [0, 0, 1, 1], [], []>} : vector<256x8xbf16>, vector<8x64xbf16>, vector<256x64xf32> -> vector<256x64xf32>
    %c0_3 = arith.constant 0 : index
    %c0_4 = arith.constant 0 : index
    %4 = vector.load %arg7[%c0_3, %c0_4] : memref<8x1024xf32, #tpu.memory_space<vmem>>, vector<1x64xf32>
    %5 = vector.broadcast %4 : vector<1x64xf32> to vector<256x64xf32>
    %6 = arith.addf %3, %5 : vector<256x64xf32>
    %cst_5 = arith.constant 0.000000e+00 : f32
    %7 = vector.broadcast %cst_5 : f32 to vector<256x64xf32>
    %8 = arith.maximumf %6, %7 : vector<256x64xf32>
    %c0_6 = arith.constant 0 : index
    %c0_7 = arith.constant 0 : index
    %c0_8 = arith.constant 0 : index
    %9 = vector.load %arg2[%c0_6, %c0_7, %c0_8] : memref<2x64x64xbf16, #tpu.memory_space<vmem>>, vector<1x64x64xbf16>
    %10 = vector.shape_cast %9 : vector<1x64x64xbf16> to vector<64x64xbf16>
    %c1 = arith.constant 1 : index
    %c0_9 = arith.constant 0 : index
    %11 = vector.load %arg7[%c1, %c0_9] : memref<8x1024xf32, #tpu.memory_space<vmem>>, vector<1x64xf32>
    %12 = arith.truncf %8 : vector<256x64xf32> to vector<256x64xbf16>
    %cst_10 = arith.constant dense<0.000000e+00> : vector<256x64xf32>
    %13 = tpu.matmul %12, %10, %cst_10 {dimension_numbers = #tpu.dot_dimension_numbers<[1], [0], [0], [1], [0, 0, 1, 1], [], []>} : vector<256x64xbf16>, vector<64x64xbf16>, vector<256x64xf32> -> vector<256x64xf32>
    %14 = vector.broadcast %11 : vector<1x64xf32> to vector<256x64xf32>
    %15 = arith.addf %13, %14 : vector<256x64xf32>
    %cst_11 = arith.constant 0.000000e+00 : f32
    %16 = vector.broadcast %cst_11 : f32 to vector<256x64xf32>
    %17 = arith.maximumf %15, %16 : vector<256x64xf32>
    %c1_12 = arith.constant 1 : index
    %c0_13 = arith.constant 0 : index
    %c0_14 = arith.constant 0 : index
    %18 = vector.load %arg2[%c1_12, %c0_13, %c0_14] : memref<2x64x64xbf16, #tpu.memory_space<vmem>>, vector<1x64x64xbf16>
    %19 = vector.shape_cast %18 : vector<1x64x64xbf16> to vector<64x64xbf16>
    %c2 = arith.constant 2 : index
    %c0_15 = arith.constant 0 : index
    %20 = vector.load %arg7[%c2, %c0_15] : memref<8x1024xf32, #tpu.memory_space<vmem>>, vector<1x64xf32>
    %21 = arith.truncf %17 : vector<256x64xf32> to vector<256x64xbf16>
    %cst_16 = arith.constant dense<0.000000e+00> : vector<256x64xf32>
    %22 = tpu.matmul %21, %19, %cst_16 {dimension_numbers = #tpu.dot_dimension_numbers<[1], [0], [0], [1], [0, 0, 1, 1], [], []>} : vector<256x64xbf16>, vector<64x64xbf16>, vector<256x64xf32> -> vector<256x64xf32>
    %23 = vector.broadcast %20 : vector<1x64xf32> to vector<256x64xf32>
    %24 = arith.addf %22, %23 : vector<256x64xf32>
    %cst_17 = arith.constant 0.000000e+00 : f32
    %25 = vector.broadcast %cst_17 : f32 to vector<256x64xf32>
    %26 = arith.maximumf %24, %25 : vector<256x64xf32>
    %c0_18 = arith.constant 0 : index
    %c0_19 = arith.constant 0 : index
    %27 = vector.load %arg3[%c0_18, %c0_19] : memref<64x128xbf16, #tpu.memory_space<vmem>>, vector<64x128xbf16>
    %c3 = arith.constant 3 : index
    %c0_20 = arith.constant 0 : index
    %28 = vector.load %arg7[%c3, %c0_20] : memref<8x1024xf32, #tpu.memory_space<vmem>>, vector<1x128xf32>
    %29 = arith.truncf %26 : vector<256x64xf32> to vector<256x64xbf16>
    %cst_21 = arith.constant dense<0.000000e+00> : vector<256x128xf32>
    %30 = tpu.matmul %29, %27, %cst_21 {dimension_numbers = #tpu.dot_dimension_numbers<[1], [0], [0], [1], [0, 0, 1, 1], [], []>} : vector<256x64xbf16>, vector<64x128xbf16>, vector<256x128xf32> -> vector<256x128xf32>
    %31 = vector.broadcast %28 : vector<1x128xf32> to vector<256x128xf32>
    %32 = arith.addf %30, %31 : vector<256x128xf32>
    %cst_22 = arith.constant 0.000000e+00 : f32
    %33 = vector.broadcast %cst_22 : f32 to vector<256x128xf32>
    %34 = arith.maximumf %32, %33 : vector<256x128xf32>
    %c0_23 = arith.constant 0 : index
    %c0_24 = arith.constant 0 : index
    %35 = vector.load %arg4[%c0_23, %c0_24] : memref<128x1024xbf16, #tpu.memory_space<vmem>>, vector<128x1024xbf16>
    %c4 = arith.constant 4 : index
    %c0_25 = arith.constant 0 : index
    %36 = vector.load %arg7[%c4, %c0_25] : memref<8x1024xf32, #tpu.memory_space<vmem>>, vector<1x1024xf32>
    %37 = vector.extract_strided_slice %34 {offsets = [0, 0], sizes = [64, 128], strides = [1, 1]} : vector<256x128xf32> to vector<64x128xf32>
    %38 = arith.truncf %37 : vector<64x128xf32> to vector<64x128xbf16>
    %cst_26 = arith.constant dense<0.000000e+00> : vector<64x1024xf32>
    %39 = tpu.matmul %38, %35, %cst_26 {dimension_numbers = #tpu.dot_dimension_numbers<[1], [0], [0], [1], [0, 0, 1, 1], [], []>} : vector<64x128xbf16>, vector<128x1024xbf16>, vector<64x1024xf32> -> vector<64x1024xf32>
    %40 = vector.broadcast %36 : vector<1x1024xf32> to vector<64x1024xf32>
    %41 = arith.addf %39, %40 : vector<64x1024xf32>
    %cst_27 = arith.constant 0.000000e+00 : f32
    %42 = vector.broadcast %cst_27 : f32 to vector<64x1024xf32>
    %43 = arith.maximumf %41, %42 : vector<64x1024xf32>
    %cst_28 = arith.constant dense<0xFF800000> : vector<1024xf32>
    %44 = vector.multi_reduction <maximumf>, %43, %cst_28 [0] : vector<64x1024xf32> to vector<1024xf32>
    %45 = vector.shape_cast %44 : vector<1024xf32> to vector<1x1024xf32>
    %46 = vector.extract_strided_slice %34 {offsets = [64, 0], sizes = [64, 128], strides = [1, 1]} : vector<256x128xf32> to vector<64x128xf32>
    %47 = arith.truncf %46 : vector<64x128xf32> to vector<64x128xbf16>
    %cst_29 = arith.constant dense<0.000000e+00> : vector<64x1024xf32>
    %48 = tpu.matmul %47, %35, %cst_29 {dimension_numbers = #tpu.dot_dimension_numbers<[1], [0], [0], [1], [0, 0, 1, 1], [], []>} : vector<64x128xbf16>, vector<128x1024xbf16>, vector<64x1024xf32> -> vector<64x1024xf32>
    %49 = vector.broadcast %36 : vector<1x1024xf32> to vector<64x1024xf32>
    %50 = arith.addf %48, %49 : vector<64x1024xf32>
    %cst_30 = arith.constant 0.000000e+00 : f32
    %51 = vector.broadcast %cst_30 : f32 to vector<64x1024xf32>
    %52 = arith.maximumf %50, %51 : vector<64x1024xf32>
    %cst_31 = arith.constant dense<0xFF800000> : vector<1024xf32>
    %53 = vector.multi_reduction <maximumf>, %52, %cst_31 [0] : vector<64x1024xf32> to vector<1024xf32>
    %54 = vector.shape_cast %53 : vector<1024xf32> to vector<1x1024xf32>
    %55 = arith.maximumf %45, %54 : vector<1x1024xf32>
    %56 = vector.extract_strided_slice %34 {offsets = [128, 0], sizes = [64, 128], strides = [1, 1]} : vector<256x128xf32> to vector<64x128xf32>
    %57 = arith.truncf %56 : vector<64x128xf32> to vector<64x128xbf16>
    %cst_32 = arith.constant dense<0.000000e+00> : vector<64x1024xf32>
    %58 = tpu.matmul %57, %35, %cst_32 {dimension_numbers = #tpu.dot_dimension_numbers<[1], [0], [0], [1], [0, 0, 1, 1], [], []>} : vector<64x128xbf16>, vector<128x1024xbf16>, vector<64x1024xf32> -> vector<64x1024xf32>
    %59 = vector.broadcast %36 : vector<1x1024xf32> to vector<64x1024xf32>
    %60 = arith.addf %58, %59 : vector<64x1024xf32>
    %cst_33 = arith.constant 0.000000e+00 : f32
    %61 = vector.broadcast %cst_33 : f32 to vector<64x1024xf32>
    %62 = arith.maximumf %60, %61 : vector<64x1024xf32>
    %cst_34 = arith.constant dense<0xFF800000> : vector<1024xf32>
    %63 = vector.multi_reduction <maximumf>, %62, %cst_34 [0] : vector<64x1024xf32> to vector<1024xf32>
    %64 = vector.shape_cast %63 : vector<1024xf32> to vector<1x1024xf32>
    %65 = arith.maximumf %55, %64 : vector<1x1024xf32>
    %66 = vector.extract_strided_slice %34 {offsets = [192, 0], sizes = [64, 128], strides = [1, 1]} : vector<256x128xf32> to vector<64x128xf32>
    %67 = arith.truncf %66 : vector<64x128xf32> to vector<64x128xbf16>
    %cst_35 = arith.constant dense<0.000000e+00> : vector<64x1024xf32>
    %68 = tpu.matmul %67, %35, %cst_35 {dimension_numbers = #tpu.dot_dimension_numbers<[1], [0], [0], [1], [0, 0, 1, 1], [], []>} : vector<64x128xbf16>, vector<128x1024xbf16>, vector<64x1024xf32> -> vector<64x1024xf32>
    %69 = vector.broadcast %36 : vector<1x1024xf32> to vector<64x1024xf32>
    %70 = arith.addf %68, %69 : vector<64x1024xf32>
    %cst_36 = arith.constant 0.000000e+00 : f32
    %71 = vector.broadcast %cst_36 : f32 to vector<64x1024xf32>
    %72 = arith.maximumf %70, %71 : vector<64x1024xf32>
    %cst_37 = arith.constant dense<0xFF800000> : vector<1024xf32>
    %73 = vector.multi_reduction <maximumf>, %72, %cst_37 [0] : vector<64x1024xf32> to vector<1024xf32>
    %74 = vector.shape_cast %73 : vector<1024xf32> to vector<1x1024xf32>
    %75 = arith.maximumf %65, %74 : vector<1x1024xf32>
    tpu.wait_dma2 semaphore(%arg10 : memref<!tpu.dma_semaphore, #tpu.memory_space<semaphore_mem>>) src(%arg5 : memref<1024x512xbf16, #tpu.memory_space<any>>) dst(%arg9 : memref<1024x512xbf16, #tpu.memory_space<vmem>>)
    %76 = arith.truncf %75 : vector<1x1024xf32> to vector<1x1024xbf16>
    %c0_38 = arith.constant 0 : index
    %c0_39 = arith.constant 0 : index
    %77 = vector.load %arg9[%c0_38, %c0_39] : memref<1024x512xbf16, #tpu.memory_space<vmem>>, vector<1024x512xbf16>
    %cst_40 = arith.constant dense<0.000000e+00> : vector<1x512xf32>
    %78 = tpu.matmul %76, %77, %cst_40 {dimension_numbers = #tpu.dot_dimension_numbers<[1], [0], [0], [1], [0, 0, 1, 1], [], []>} : vector<1x1024xbf16>, vector<1024x512xbf16>, vector<1x512xf32> -> vector<1x512xf32>
    %c5 = arith.constant 5 : index
    %c0_41 = arith.constant 0 : index
    %79 = vector.load %arg7[%c5, %c0_41] : memref<8x1024xf32, #tpu.memory_space<vmem>>, vector<1x512xf32>
    %80 = arith.addf %78, %79 : vector<1x512xf32>
    %cst_42 = arith.constant 0.000000e+00 : f32
    %81 = vector.broadcast %cst_42 : f32 to vector<1x512xf32>
    %82 = arith.maximumf %80, %81 : vector<1x512xf32>
    %83 = arith.truncf %82 : vector<1x512xf32> to vector<1x512xbf16>
    %c0_43 = arith.constant 0 : index
    %c0_44 = arith.constant 0 : index
    %84 = vector.load %arg6[%c0_43, %c0_44] : memref<512x15xbf16, #tpu.memory_space<vmem>>, vector<512x15xbf16>
    %cst_45 = arith.constant dense<0.000000e+00> : vector<1x15xf32>
    %85 = tpu.matmul %83, %84, %cst_45 {dimension_numbers = #tpu.dot_dimension_numbers<[1], [0], [0], [1], [0, 0, 1, 1], [], []>} : vector<1x512xbf16>, vector<512x15xbf16>, vector<1x15xf32> -> vector<1x15xf32>
    %c6 = arith.constant 6 : index
    %c0_46 = arith.constant 0 : index
    %86 = vector.load %arg7[%c6, %c0_46] : memref<8x1024xf32, #tpu.memory_space<vmem>>, vector<1x15xf32>
    %87 = arith.addf %85, %86 : vector<1x15xf32>
    %c0_47 = arith.constant 0 : index
    %c0_48 = arith.constant 0 : index
    %88 = vector.load %arg8[%c0_47, %c0_48] : memref<1x15xf32, #tpu.memory_space<vmem>>, vector<1x15xf32>
    tpu.vector_store %arg8[%c0_47, %c0_48], %87 {strides = array<i32>} : memref<1x15xf32, #tpu.memory_space<vmem>>, vector<1x15xf32>,
    return
  }
}

</mosaic_0001>

<llo_original>
// kernel: tpu_custom_call.1
$region0: #{tpu_custom_call.1}
  #allocation0 [shape = 'u32[]', space=smem, size = 0x4, offset = 0x4, fixed_abs, tag = 'smem constant byte address 0x4 - core index']
  #allocation1 [shape = 'u32[144,128]{1,0:T(1,128)}', space=vmem, size = 0x12000, scoped, tag = 'internal scratch']
  #allocation2 [shape = 'bf16[1024,512]{1,0:T(16,128)(2,1)}', space=vmem, size = 0x100000, scoped, tag = 'scratch operand']
  #allocation3 [shape = 's32[1]{0}', space=sflag, size = 0x4, scoped, tag = 'scratch operand']
  #allocation10 [shape = 's32[]', space=sflag, size = 0x4, offset = 0, fixed_abs, tag = 'sflag constant byte address 0x0 - dummy sync flag']
  %s0 = inlined_call_operand.vmem [shape: f32[256,8], index: 0, kind: input, shape index: {}]
  %s1 = inlined_call_operand.vmem [shape: bf16[8,64], index: 1, kind: input, shape index: {}]
  %s2 = inlined_call_operand.hbm [shape: bf16[2,64,64], index: 2, kind: input, shape index: {}]
  %s3 = inlined_call_operand.hbm [shape: bf16[64,128], index: 3, kind: input, shape index: {}]
  %s4 = inlined_call_operand.vmem [shape: bf16[128,1024], index: 4, kind: input, shape index: {}]
  %s5 = inlined_call_operand.hbm [shape: bf16[1024,512], index: 5, kind: input, shape index: {}]
  %s6 = inlined_call_operand.vmem [shape: bf16[512,15], index: 6, kind: input, shape index: {}]
  %s7 = inlined_call_operand.vmem [shape: f32[8,1024], index: 7, kind: input, shape index: {}]
  %s8 = inlined_call_operand.hbm [shape: f32[1,15], index: 8, kind: output, shape index: {}]
  %s9 = sld [smem:[#allocation0]]
  $region46: #{tpu_custom_call.1} parent=0
    _
  %s11 = ssub.s32 1, %s9
  %s12 = scalar_select 0, %s11, %s9
  $region1: #{tpu_custom_call.1} parent=0
    #allocation4 [shape = 'u8[32768]{0}', space=vmem, size = 0x8000, scoped, tag = 'input window, operand 2, single buffered']
    #allocation5 [shape = 's32[1]{0}', space=sflag, size = 0x4, scoped, tag = 'scoped memory for tpu_custom_call.1']
    #allocation6 [shape = 's32[1]{0}', space=sflag, size = 0x4, scoped, tag = 'scoped memory for tpu_custom_call.1']
    #allocation7 [shape = 'u8[16384]{0}', space=vmem, size = 0x4000, scoped, tag = 'input window, operand 3, single buffered']
    #allocation8 [shape = 's32[1]{0}', space=sflag, size = 0x4, scoped, tag = 'scoped memory for tpu_custom_call.1']
    #allocation9 [shape = 'u8[512]{0}', space=vmem, size = 0x400, scoped, tag = 'output window, operand 0, single buffered']
    #allocation11 [shape = 'u32[9]{0}', space=smem, size = 0x24, scoped, tag = 'DMA stride descriptor']
    %13 = vsyncpa [#allocation5], 0
    %14 = vsyncpa [#allocation8], 0
    %15 = vsyncpa [#allocation6], 0
    // Predicated region
    $region2: #{tpu_custom_call.1} parent=1 // pred_check
      _
    $region3: #{tpu_custom_call.1} parent=1 // pred_check_branch
      %17 = sbr.rel (0) target = $region5
    $region4: #{tpu_custom_call.1} parent=1 // pred_region
      _
    $region5: #{tpu_custom_call.1} parent=1 // pred_fallthru
      _
    // Predicated region
    $region6: #{tpu_custom_call.1} parent=1 // pred_check
      _
    $region7: #{tpu_custom_call.1} parent=1 // pred_check_branch
      %19 = sbr.rel (0) target = $region9
    $region8: #{tpu_custom_call.1} parent=1 // pred_region
      _
    $region9: #{tpu_custom_call.1} parent=1 // pred_fallthru
      _
    // Predicated region
    $region10: #{tpu_custom_call.1} parent=1 // pred_check
      _
    $region11: #{tpu_custom_call.1} parent=1 // pred_check_branch
      %21 = sbr.rel (0) target = $region13
    $region12: #{tpu_custom_call.1} parent=1 // pred_region
      %s23 = ssub.s32 1024, 1024
      %24 = vsyncadd [#allocation5], %s23
      %s25 = sshll.u32 [#allocation4], 4
      %s26 = int_to_ptr.vmem [resolvable:$true] %s25
      %31 = dma.hbm_to_vmem [thread:$0]  %s2, 1024, %s26, [#allocation5], 64, 64, 4
    $region13: #{tpu_custom_call.1} parent=1 // pred_fallthru
      _
    // Predicated region
    $region14: #{tpu_custom_call.1} parent=1 // pred_check
      _
    $region15: #{tpu_custom_call.1} parent=1 // pred_check_branch
      %33 = sbr.rel (0) target = $region17
    $region16: #{tpu_custom_call.1} parent=1 // pred_region
      %s35 = ssub.s32 512, 512
      %36 = vsyncadd [#allocation8], %s35
      %s37 = sshll.u32 [#allocation7], 4
      %s38 = int_to_ptr.vmem [resolvable:$true] %s37
      %43 = dma.hbm_to_vmem [thread:$0]  %s3, 512, %s38, [#allocation8], 64, 64, 4
    $region17: #{tpu_custom_call.1} parent=1 // pred_fallthru
      _
    // Predicated region
    $region18: #{tpu_custom_call.1} parent=1 // pred_check
      _
    $region19: #{tpu_custom_call.1} parent=1 // pred_check_branch
      %45 = sbr.rel (0) target = $region21
    $region20: #{tpu_custom_call.1} parent=1 // pred_region
      _
    $region21: #{tpu_custom_call.1} parent=1 // pred_fallthru
      _
    // Predicated region
    $region22: #{tpu_custom_call.1} parent=1 // pred_check
      _
    $region23: #{tpu_custom_call.1} parent=1 // pred_check_branch
      %47 = sbr.rel (0) target = $region25
    $region24: #{tpu_custom_call.1} parent=1 // pred_region
      _
    $region25: #{tpu_custom_call.1} parent=1 // pred_fallthru
      _
    // Predicated region
    $region26: #{tpu_custom_call.1} parent=1 // pred_check
      _
    $region27: #{tpu_custom_call.1} parent=1 // pred_check_branch
      %49 = sbr.rel (0) target = $region29
    $region28: #{tpu_custom_call.1} parent=1 // pred_region
      _
    $region29: #{tpu_custom_call.1} parent=1 // pred_fallthru
      _
    // Predicated region
    $region30: #{tpu_custom_call.1} parent=1 // pred_check
      _
    $region31: #{tpu_custom_call.1} parent=1 // pred_check_branch
      %51 = sbr.rel (0) target = $region33
    $region32: #{tpu_custom_call.1} parent=1 // pred_region
      %52 = dma.done [#allocation5], 1024
    $region33: #{tpu_custom_call.1} parent=1 // pred_fallthru
      _
    // Predicated region
    $region34: #{tpu_custom_call.1} parent=1 // pred_check
      _
    $region35: #{tpu_custom_call.1} parent=1 // pred_check_branch
      %54 = sbr.rel (0) target = $region37
    $region36: #{tpu_custom_call.1} parent=1 // pred_region
      %55 = dma.done [#allocation8], 512
    $region37: #{tpu_custom_call.1} parent=1 // pred_fallthru
      _
    %s58 = sshll.u32 1, 14
    %s59 = sxor.u32 4294967295, %s58
    %s61 = sld [smem:[#allocation0]]
    %s62 = sadd.s32 2, %s61
    %s64 = sshll.u32 7, 26
    %s65 = sxor.u32 4294967295, %s64
    %s66 = sand.u32 0, %s65
    %s67 = sshll.u32 %s62, 26
    %s68 = sor.u32 %s66, %s67
    %s69 = sshll.u32 [#allocation2], 4
    %s70 = int_to_ptr.vmem [resolvable:$true] %s69
    %73 = sst [smem:[#allocation11]] 512
    %s74 = scalar_lea.smem [#allocation11], 1
    %75 = sst [smem:[%s74]] 512
    %s76 = scalar_lea.smem [#allocation11], 2
    %77 = sst [smem:[%s76]] 4
    %s78 = scalar_lea.smem [#allocation11], 3
    %79 = sst [smem:[%s78]] 64
    %s80 = scalar_lea.smem [#allocation11], 4
    %81 = sst [smem:[%s80]] 128
    %s82 = scalar_lea.smem [#allocation11], 5
    %83 = sst [smem:[%s82]] 2
    %s84 = scalar_lea.smem [#allocation11], 6
    %85 = sst [smem:[%s84]] 256
    %s86 = scalar_lea.smem [#allocation11], 7
    %87 = sst [smem:[%s86]] 64
    %s88 = scalar_lea.smem [#allocation11], 8
    %89 = sst [smem:[%s88]] 4
    %91 = dma.general %s5, 32768, %s70, [#allocation3], [#allocation10], [#allocation11], %s68, 0
    %v92 = vld [vmem:[%s0] sm:$0xff]
    %v93 = vld [vmem:[%s0 + $0x8] sm:$0xff]
    %v94 = vld [vmem:[%s0 + $0x10] sm:$0xff]
    %v95 = vld [vmem:[%s0 + $0x18] sm:$0xff]
    %v96 = vld [vmem:[%s0 + $0x20] sm:$0xff]
    %v97 = vld [vmem:[%s0 + $0x28] sm:$0xff]
    %v98 = vld [vmem:[%s0 + $0x30] sm:$0xff]
    %v99 = vld [vmem:[%s0 + $0x38] sm:$0xff]
    %v100 = vld [vmem:[%s0 + $0x40] sm:$0xff]
    %v101 = vld [vmem:[%s0 + $0x48] sm:$0xff]
    %v102 = vld [vmem:[%s0 + $0x50] sm:$0xff]
    %v103 = vld [vmem:[%s0 + $0x58] sm:$0xff]
    %v104 = vld [vmem:[%s0 + $0x60] sm:$0xff]
    %v105 = vld [vmem:[%s0 + $0x68] sm:$0xff]
    %v106 = vld [vmem:[%s0 + $0x70] sm:$0xff]
    %v107 = vld [vmem:[%s0 + $0x78] sm:$0xff]
    %v108 = vld [vmem:[%s0 + $0x80] sm:$0xff]
    %v109 = vld [vmem:[%s0 + $0x88] sm:$0xff]
    %v110 = vld [vmem:[%s0 + $0x90] sm:$0xff]
    %v111 = vld [vmem:[%s0 + $0x98] sm:$0xff]
    %v112 = vld [vmem:[%s0 + $0xa0] sm:$0xff]
    %v113 = vld [vmem:[%s0 + $0xa8] sm:$0xff]
    %v114 = vld [vmem:[%s0 + $0xb0] sm:$0xff]
    %v115 = vld [vmem:[%s0 + $0xb8] sm:$0xff]
    %v116 = vld [vmem:[%s0 + $0xc0] sm:$0xff]
    %v117 = vld [vmem:[%s0 + $0xc8] sm:$0xff]
    %v118 = vld [vmem:[%s0 + $0xd0] sm:$0xff]
    %v119 = vld [vmem:[%s0 + $0xd8] sm:$0xff]
    %v120 = vld [vmem:[%s0 + $0xe0] sm:$0xff]
    %v121 = vld [vmem:[%s0 + $0xe8] sm:$0xff]
    %v122 = vld [vmem:[%s0 + $0xf0] sm:$0xff]
    %v123 = vld [vmem:[%s0 + $0xf8] sm:$0xff]
    %v124 = vpack.c.bf16 %v93, %v92
    %v125 = vpack.c.bf16 %v95, %v94
    %v126 = vpack.c.bf16 %v97, %v96
    %v127 = vpack.c.bf16 %v99, %v98
    %v128 = vpack.c.bf16 %v101, %v100
    %v129 = vpack.c.bf16 %v103, %v102
    %v130 = vpack.c.bf16 %v105, %v104
    %v131 = vpack.c.bf16 %v107, %v106
    %v132 = vpack.c.bf16 %v109, %v108
    %v133 = vpack.c.bf16 %v111, %v110
    %v134 = vpack.c.bf16 %v113, %v112
    %v135 = vpack.c.bf16 %v115, %v114
    %v136 = vpack.c.bf16 %v117, %v116
    %v137 = vpack.c.bf16 %v119, %v118
    %v138 = vpack.c.bf16 %v121, %v120
    %v139 = vpack.c.bf16 %v123, %v122
    %v140 = vld [vmem:[%s1] sm:$0xf]
    %v141 = vld [vmem:[%s7] ss:$0 sm:$0xff]
    %vm142 = vcmask 64512
    %v144 = vsel %vm142, %v124, 0
    %v147 = vsel %vm142, %v125, 0
    %v150 = vsel %vm142, %v126, 0
    %v153 = vsel %vm142, %v127, 0
    %v156 = vsel %vm142, %v128, 0
    %v159 = vsel %vm142, %v129, 0
    %v162 = vsel %vm142, %v130, 0
    %v165 = vsel %vm142, %v131, 0
    %v168 = vsel %vm142, %v132, 0
    %v171 = vsel %vm142, %v133, 0
    %v174 = vsel %vm142, %v134, 0
    %v177 = vsel %vm142, %v135, 0
    %v180 = vsel %vm142, %v136, 0
    %v183 = vsel %vm142, %v137, 0
    %v186 = vsel %vm142, %v138, 0
    %v189 = vsel %vm142, %v139, 0
    %vm191 = vcmask 1043456
    %v193 = vsel %vm191, %v140, 0
    %195 = vmatprep.subr.bf16.mxu0 0
    %196 = vmatpush1.bf16.msra.mxu0 %v193
    %197 = vmatprep.subr.bf16.mxu0 0
    %198 = vmatpush1.bf16.msra.mxu0 0
    %199 = vmatprep.subr.bf16.mxu0 0
    %200 = vmatpush1.bf16.msra.mxu0 0
    %201 = vmatprep.subr.bf16.mxu0 0
    %202 = vmatpush1.bf16.msra.mxu0 0
    %203 = vmatprep.subr.bf16.mxu0 0
    %204 = vmatpush1.bf16.msra.mxu0 0
    %205 = vmatprep.subr.bf16.mxu0 0
    %206 = vmatpush1.bf16.msra.mxu0 0
    %207 = vmatprep.subr.bf16.mxu0 0
    %208 = vmatpush1.bf16.msra.mxu0 0
    %209 = vmatprep.subr.bf16.mxu0 0
    %210 = vmatpush1.bf16.msra.mxu0 0
    %211 = vmatprep.subr.bf16.mxu0 0
    %212 = vmatpush1.bf16.msra.mxu0 0
    %213 = vmatprep.subr.bf16.mxu0 0
    %214 = vmatpush1.bf16.msra.mxu0 0
    %215 = vmatprep.subr.bf16.mxu0 0
    %216 = vmatpush1.bf16.msra.mxu0 0
    %217 = vmatprep.subr.bf16.mxu0 0
    %218 = vmatpush1.bf16.msra.mxu0 0
    %219 = vmatprep.subr.bf16.mxu0 0
    %220 = vmatpush1.bf16.msra.mxu0 0
    %221 = vmatprep.subr.bf16.mxu0 0
    %222 = vmatpush1.bf16.msra.mxu0 0
    %223 = vmatprep.subr.bf16.mxu0 0
    %224 = vmatpush1.bf16.msra.mxu0 0
    %225 = vmatprep.subr.bf16.mxu0 0
    %226 = vmatpush1.bf16.msra.mxu0 0
    %227 = vmatprep.mubr.bf16.mxu0 0
    %228 = vmatmul.mubr.bf16.gmra.mrb[0].mxu0 %v144
    %v229 = vpop.f32.mrb[0].mxu0
    %v230 = vadd.f32 %v141, %v229
    %v231 = vpop.f32.mrb[0].mxu0
    %v232 = vpop.f32.mrb[0].mxu0
    %v233 = vadd.f32 %v141, %v232
    %v234 = vpop.f32.mrb[0].mxu0
    %235 = vmatprep.mubr.bf16.mxu0 0
    %236 = vmatmul.mubr.bf16.gmra.mrb[0].mxu0 %v147
    %v237 = vpop.f32.mrb[0].mxu0
    %v238 = vadd.f32 %v141, %v237
    %v239 = vpop.f32.mrb[0].mxu0
    %v240 = vpop.f32.mrb[0].mxu0
    %v241 = vadd.f32 %v141, %v240
    %v242 = vpop.f32.mrb[0].mxu0
    %243 = vmatprep.mubr.bf16.mxu0 0
    %244 = vmatmul.mubr.bf16.gmra.mrb[0].mxu0 %v150
    %v245 = vpop.f32.mrb[0].mxu0
    %v246 = vadd.f32 %v141, %v245
    %v247 = vpop.f32.mrb[0].mxu0
    %v248 = vpop.f32.mrb[0].mxu0
    %v249 = vadd.f32 %v141, %v248
    %v250 = vpop.f32.mrb[0].mxu0
    %251 = vmatprep.mubr.bf16.mxu0 0
    %252 = vmatmul.mubr.bf16.gmra.mrb[0].mxu0 %v153
    %v253 = vpop.f32.mrb[0].mxu0
    %v254 = vadd.f32 %v141, %v253
    %v255 = vpop.f32.mrb[0].mxu0
    %v256 = vpop.f32.mrb[0].mxu0
    %v257 = vadd.f32 %v141, %v256
    %v258 = vpop.f32.mrb[0].mxu0
    %259 = vmatprep.mubr.bf16.mxu0 0
    %260 = vmatmul.mubr.bf16.gmra.mrb[0].mxu0 %v156
    %v261 = vpop.f32.mrb[0].mxu0
    %v262 = vadd.f32 %v141, %v261
    %v263 = vpop.f32.mrb[0].mxu0
    %v264 = vpop.f32.mrb[0].mxu0
    %v265 = vadd.f32 %v141, %v264
    %v266 = vpop.f32.mrb[0].mxu0
    %267 = vmatprep.mubr.bf16.mxu0 0
    %268 = vmatmul.mubr.bf16.gmra.mrb[0].mxu0 %v159
    %v269 = vpop.f32.mrb[0].mxu0
    %v270 = vadd.f32 %v141, %v269
    %v271 = vpop.f32.mrb[0].mxu0
    %v272 = vpop.f32.mrb[0].mxu0
    %v273 = vadd.f32 %v141, %v272
    %v274 = vpop.f32.mrb[0].mxu0
    %275 = vmatprep.mubr.bf16.mxu0 0
    %276 = vmatmul.mubr.bf16.gmra.mrb[0].mxu0 %v162
    %v277 = vpop.f32.mrb[0].mxu0
    %v278 = vadd.f32 %v141, %v277
    %v279 = vpop.f32.mrb[0].mxu0
    %v280 = vpop.f32.mrb[0].mxu0
    %v281 = vadd.f32 %v141, %v280
    %v282 = vpop.f32.mrb[0].mxu0
    %283 = vmatprep.mubr.bf16.mxu0 0
    %284 = vmatmul.mubr.bf16.gmra.mrb[0].mxu0 %v165
    %v285 = vpop.f32.mrb[0].mxu0
    %v286 = vadd.f32 %v141, %v285
    %v287 = vpop.f32.mrb[0].mxu0
    %v288 = vpop.f32.mrb[0].mxu0
    %v289 = vadd.f32 %v141, %v288
    %v290 = vpop.f32.mrb[0].mxu0
    %291 = vmatprep.mubr.bf16.mxu0 0
    %292 = vmatmul.mubr.bf16.gmra.mrb[0].mxu0 %v168
    %v293 = vpop.f32.mrb[0].mxu0
    %v294 = vadd.f32 %v141, %v293
    %v295 = vpop.f32.mrb[0].mxu0
    %v296 = vpop.f32.mrb[0].mxu0
    %v297 = vadd.f32 %v141, %v296
    %v298 = vpop.f32.mrb[0].mxu0
    %299 = vmatprep.mubr.bf16.mxu0 0
    %300 = vmatmul.mubr.bf16.gmra.mrb[0].mxu0 %v171
    %v301 = vpop.f32.mrb[0].mxu0
    %v302 = vadd.f32 %v141, %v301
    %v303 = vpop.f32.mrb[0].mxu0
    %v304 = vpop.f32.mrb[0].mxu0
    %v305 = vadd.f32 %v141, %v304
    %v306 = vpop.f32.mrb[0].mxu0
    %307 = vmatprep.mubr.bf16.mxu0 0
    %308 = vmatmul.mubr.bf16.gmra.mrb[0].mxu0 %v174
    %v309 = vpop.f32.mrb[0].mxu0
    %v310 = vadd.f32 %v141, %v309
    %v311 = vpop.f32.mrb[0].mxu0
    %v312 = vpop.f32.mrb[0].mxu0
    %v313 = vadd.f32 %v141, %v312
    %v314 = vpop.f32.mrb[0].mxu0
    %315 = vmatprep.mubr.bf16.mxu0 0
    %316 = vmatmul.mubr.bf16.gmra.mrb[0].mxu0 %v177
    %v317 = vpop.f32.mrb[0].mxu0
    %v318 = vadd.f32 %v141, %v317
    %v319 = vpop.f32.mrb[0].mxu0
    %v320 = vpop.f32.mrb[0].mxu0
    %v321 = vadd.f32 %v141, %v320
    %v322 = vpop.f32.mrb[0].mxu0
    %323 = vmatprep.mubr.bf16.mxu0 0
    %324 = vmatmul.mubr.bf16.gmra.mrb[0].mxu0 %v180
    %v325 = vpop.f32.mrb[0].mxu0
    %v326 = vadd.f32 %v141, %v325
    %v327 = vpop.f32.mrb[0].mxu0
    %v328 = vpop.f32.mrb[0].mxu0
    %v329 = vadd.f32 %v141, %v328
    %v330 = vpop.f32.mrb[0].mxu0
    %331 = vmatprep.mubr.bf16.mxu0 0
    %332 = vmatmul.mubr.bf16.gmra.mrb[0].mxu0 %v183
    %v333 = vpop.f32.mrb[0].mxu0
    %v334 = vadd.f32 %v141, %v333
    %v335 = vpop.f32.mrb[0].mxu0
    %v336 = vpop.f32.mrb[0].mxu0
    %v337 = vadd.f32 %v141, %v336
    %v338 = vpop.f32.mrb[0].mxu0
    %339 = vmatprep.mubr.bf16.mxu0 0
    %340 = vmatmul.mubr.bf16.gmra.mrb[0].mxu0 %v186
    %v341 = vpop.f32.mrb[0].mxu0
    %v342 = vadd.f32 %v141, %v341
    %v343 = vpop.f32.mrb[0].mxu0
    %v344 = vpop.f32.mrb[0].mxu0
    %v345 = vadd.f32 %v141, %v344
    %v346 = vpop.f32.mrb[0].mxu0
    %347 = vmatprep.mubr.bf16.mxu0 0
    %348 = vmatmul.mubr.bf16.gmra.mrb[0].mxu0 %v189
    %v349 = vpop.f32.mrb[0].mxu0
    %v350 = vadd.f32 %v141, %v349
    %v351 = vpop.f32.mrb[0].mxu0
    %v352 = vpop.f32.mrb[0].mxu0
    %v353 = vadd.f32 %v141, %v352
    %v354 = vpop.f32.mrb[0].mxu0
    %355 = vdwg.mxu0
    %v356 = vmax.f32 %v230, 0.0
    %v357 = vmax.f32 %v233, 0.0
    %v358 = vmax.f32 %v238, 0.0
    %v359 = vmax.f32 %v241, 0.0
    %v360 = vmax.f32 %v246, 0.0
    %v361 = vmax.f32 %v249, 0.0
    %v362 = vmax.f32 %v254, 0.0
    %v363 = vmax.f32 %v257, 0.0
    %v364 = vmax.f32 %v262, 0.0
    %v365 = vmax.f32 %v265, 0.0
    %v366 = vmax.f32 %v270, 0.0
    %v367 = vmax.f32 %v273, 0.0
    %v368 = vmax.f32 %v278, 0.0
    %v369 = vmax.f32 %v281, 0.0
    %v370 = vmax.f32 %v286, 0.0
    %v371 = vmax.f32 %v289, 0.0
    %v372 = vmax.f32 %v294, 0.0
    %v373 = vmax.f32 %v297, 0.0
    %v374 = vmax.f32 %v302, 0.0
    %v375 = vmax.f32 %v305, 0.0
    %v376 = vmax.f32 %v310, 0.0
    %v377 = vmax.f32 %v313, 0.0
    %v378 = vmax.f32 %v318, 0.0
    %v379 = vmax.f32 %v321, 0.0
    %v380 = vmax.f32 %v326, 0.0
    %v381 = vmax.f32 %v329, 0.0
    %v382 = vmax.f32 %v334, 0.0
    %v383 = vmax.f32 %v337, 0.0
    %v384 = vmax.f32 %v342, 0.0
    %v385 = vmax.f32 %v345, 0.0
    %v386 = vmax.f32 %v350, 0.0
    %v387 = vmax.f32 %v353, 0.0
    %v388 = vld [vmem:[#allocation4] sm:$0xf]
    %v389 = vld [vmem:[#allocation4 + $0x4] sm:$0xf]
    %v390 = vld [vmem:[#allocation4 + $0x8] sm:$0xf]
    %v391 = vld [vmem:[#allocation4 + $0xc] sm:$0xf]
    %v392 = vld [vmem:[#allocation4 + $0x10] sm:$0xf]
    %v393 = vld [vmem:[#allocation4 + $0x14] sm:$0xf]
    %v394 = vld [vmem:[#allocation4 + $0x18] sm:$0xf]
    %v395 = vld [vmem:[#allocation4 + $0x1c] sm:$0xf]
    %v396 = vld [vmem:[%s7 + $0x1] ss:$0 sm:$0xff]
    %v397 = vpack.c.bf16 %v357, %v356
    %v398 = vpack.c.bf16 %v359, %v358
    %v399 = vpack.c.bf16 %v361, %v360
    %v400 = vpack.c.bf16 %v363, %v362
    %v401 = vpack.c.bf16 %v365, %v364
    %v402 = vpack.c.bf16 %v367, %v366
    %v403 = vpack.c.bf16 %v369, %v368
    %v404 = vpack.c.bf16 %v371, %v370
    %v405 = vpack.c.bf16 %v373, %v372
    %v406 = vpack.c.bf16 %v375, %v374
    %v407 = vpack.c.bf16 %v377, %v376
    %v408 = vpack.c.bf16 %v379, %v378
    %v409 = vpack.c.bf16 %v381, %v380
    %v410 = vpack.c.bf16 %v383, %v382
    %v411 = vpack.c.bf16 %v385, %v384
    %v412 = vpack.c.bf16 %v387, %v386
    %v421 = vunpack.c.l.b16 %v388
    %v422 = vunpack.c.l.b16 %v389
    %v423 = vunpack.c.l.b16 %v390
    %v424 = vunpack.c.l.b16 %v391
    %v425 = vunpack.c.l.b16 %v392
    %v426 = vunpack.c.l.b16 %v393
    %v427 = vunpack.c.l.b16 %v394
    %v428 = vunpack.c.l.b16 %v395
    %v429 = vpack.c.b16 %v422, %v421
    %v430 = vpack.c.b16 %v424, %v423
    %v431 = vpack.c.b16 %v426, %v425
    %v432 = vpack.c.b16 %v428, %v427
    %vm437 = vcmask 523264
    %v439 = vsel %vm437, %v397, 0
    %v442 = vsel %vm437, %v398, 0
    %v445 = vsel %vm437, %v399, 0
    %v448 = vsel %vm437, %v400, 0
    %v451 = vsel %vm437, %v401, 0
    %v454 = vsel %vm437, %v402, 0
    %v457 = vsel %vm437, %v403, 0
    %v460 = vsel %vm437, %v404, 0
    %v463 = vsel %vm437, %v405, 0
    %v466 = vsel %vm437, %v406, 0
    %v469 = vsel %vm437, %v407, 0
    %v472 = vsel %vm437, %v408, 0
    %v475 = vsel %vm437, %v409, 0
    %v478 = vsel %vm437, %v410, 0
    %v481 = vsel %vm437, %v411, 0
    %v484 = vsel %vm437, %v412, 0
    %486 = vmatprep.subr.bf16.mxu0 0
    %487 = vmatpush1.bf16.msra.mxu0 %v429
    %488 = vmatprep.subr.bf16.mxu0 0
    %489 = vmatpush1.bf16.msra.mxu0 %v430
    %490 = vmatprep.subr.bf16.mxu0 0
    %491 = vmatpush1.bf16.msra.mxu0 %v431
    %492 = vmatprep.subr.bf16.mxu0 0
    %493 = vmatpush1.bf16.msra.mxu0 %v432
    %494 = vmatprep.subr.bf16.mxu0 0
    %495 = vmatpush1.bf16.msra.mxu0 0
    %496 = vmatprep.subr.bf16.mxu0 0
    %497 = vmatpush1.bf16.msra.mxu0 0
    %498 = vmatprep.subr.bf16.mxu0 0
    %499 = vmatpush1.bf16.msra.mxu0 0
    %500 = vmatprep.subr.bf16.mxu0 0
    %501 = vmatpush1.bf16.msra.mxu0 0
    %502 = vmatprep.subr.bf16.mxu0 0
    %503 = vmatpush1.bf16.msra.mxu0 0
    %504 = vmatprep.subr.bf16.mxu0 0
    %505 = vmatpush1.bf16.msra.mxu0 0
    %506 = vmatprep.subr.bf16.mxu0 0
    %507 = vmatpush1.bf16.msra.mxu0 0
    %508 = vmatprep.subr.bf16.mxu0 0
    %509 = vmatpush1.bf16.msra.mxu0 0
    %510 = vmatprep.subr.bf16.mxu0 0
    %511 = vmatpush1.bf16.msra.mxu0 0
    %512 = vmatprep.subr.bf16.mxu0 0
    %513 = vmatpush1.bf16.msra.mxu0 0
    %514 = vmatprep.subr.bf16.mxu0 0
    %515 = vmatpush1.bf16.msra.mxu0 0
    %516 = vmatprep.subr.bf16.mxu0 0
    %517 = vmatpush1.bf16.msra.mxu0 0
    %518 = vmatprep.mubr.bf16.mxu0 0
    %519 = vmatmul.mubr.bf16.gmra.mrb[0].mxu0 %v439
    %v520 = vpop.f32.mrb[0].mxu0
    %v521 = vadd.f32 %v396, %v520
    %v522 = vpop.f32.mrb[0].mxu0
    %v523 = vpop.f32.mrb[0].mxu0
    %v524 = vadd.f32 %v396, %v523
    %v525 = vpop.f32.mrb[0].mxu0
    %526 = vmatprep.mubr.bf16.mxu0 0
    %527 = vmatmul.mubr.bf16.gmra.mrb[0].mxu0 %v442
    %v528 = vpop.f32.mrb[0].mxu0
    %v529 = vadd.f32 %v396, %v528
    %v530 = vpop.f32.mrb[0].mxu0
    %v531 = vpop.f32.mrb[0].mxu0
    %v532 = vadd.f32 %v396, %v531
    %v533 = vpop.f32.mrb[0].mxu0
    %534 = vmatprep.mubr.bf16.mxu0 0
    %535 = vmatmul.mubr.bf16.gmra.mrb[0].mxu0 %v445
    %v536 = vpop.f32.mrb[0].mxu0
    %v537 = vadd.f32 %v396, %v536
    %v538 = vpop.f32.mrb[0].mxu0
    %v539 = vpop.f32.mrb[0].mxu0
    %v540 = vadd.f32 %v396, %v539
    %v541 = vpop.f32.mrb[0].mxu0
    %542 = vmatprep.mubr.bf16.mxu0 0
    %543 = vmatmul.mubr.bf16.gmra.mrb[0].mxu0 %v448
    %v544 = vpop.f32.mrb[0].mxu0
    %v545 = vadd.f32 %v396, %v544
    %v546 = vpop.f32.mrb[0].mxu0
    %v547 = vpop.f32.mrb[0].mxu0
    %v548 = vadd.f32 %v396, %v547
    %v549 = vpop.f32.mrb[0].mxu0
    %550 = vmatprep.mubr.bf16.mxu0 0
    %551 = vmatmul.mubr.bf16.gmra.mrb[0].mxu0 %v451
    %v552 = vpop.f32.mrb[0].mxu0
    %v553 = vadd.f32 %v396, %v552
    %v554 = vpop.f32.mrb[0].mxu0
    %v555 = vpop.f32.mrb[0].mxu0
    %v556 = vadd.f32 %v396, %v555
    %v557 = vpop.f32.mrb[0].mxu0
    %558 = vmatprep.mubr.bf16.mxu0 0
    %559 = vmatmul.mubr.bf16.gmra.mrb[0].mxu0 %v454
    %v560 = vpop.f32.mrb[0].mxu0
    %v561 = vadd.f32 %v396, %v560
    %v562 = vpop.f32.mrb[0].mxu0
    %v563 = vpop.f32.mrb[0].mxu0
    %v564 = vadd.f32 %v396, %v563
    %v565 = vpop.f32.mrb[0].mxu0
    %566 = vmatprep.mubr.bf16.mxu0 0
    %567 = vmatmul.mubr.bf16.gmra.mrb[0].mxu0 %v457
    %v568 = vpop.f32.mrb[0].mxu0
    %v569 = vadd.f32 %v396, %v568
    %v570 = vpop.f32.mrb[0].mxu0
    %v571 = vpop.f32.mrb[0].mxu0
    %v572 = vadd.f32 %v396, %v571
    %v573 = vpop.f32.mrb[0].mxu0
    %574 = vmatprep.mubr.bf16.mxu0 0
    %575 = vmatmul.mubr.bf16.gmra.mrb[0].mxu0 %v460
    %v576 = vpop.f32.mrb[0].mxu0
    %v577 = vadd.f32 %v396, %v576
    %v578 = vpop.f32.mrb[0].mxu0
    %v579 = vpop.f32.mrb[0].mxu0
    %v580 = vadd.f32 %v396, %v579
    %v581 = vpop.f32.mrb[0].mxu0
    %582 = vmatprep.mubr.bf16.mxu0 0
    %583 = vmatmul.mubr.bf16.gmra.mrb[0].mxu0 %v463
    %v584 = vpop.f32.mrb[0].mxu0
    %v585 = vadd.f32 %v396, %v584
    %v586 = vpop.f32.mrb[0].mxu0
    %v587 = vpop.f32.mrb[0].mxu0
    %v588 = vadd.f32 %v396, %v587
    %v589 = vpop.f32.mrb[0].mxu0
    %590 = vmatprep.mubr.bf16.mxu0 0
    %591 = vmatmul.mubr.bf16.gmra.mrb[0].mxu0 %v466
    %v592 = vpop.f32.mrb[0].mxu0
    %v593 = vadd.f32 %v396, %v592
    %v594 = vpop.f32.mrb[0].mxu0
    %v595 = vpop.f32.mrb[0].mxu0
    %v596 = vadd.f32 %v396, %v595
    %v597 = vpop.f32.mrb[0].mxu0
    %598 = vmatprep.mubr.bf16.mxu0 0
    %599 = vmatmul.mubr.bf16.gmra.mrb[0].mxu0 %v469
    %v600 = vpop.f32.mrb[0].mxu0
    %v601 = vadd.f32 %v396, %v600
    %v602 = vpop.f32.mrb[0].mxu0
    %v603 = vpop.f32.mrb[0].mxu0
    %v604 = vadd.f32 %v396, %v603
    %v605 = vpop.f32.mrb[0].mxu0
    %606 = vmatprep.mubr.bf16.mxu0 0
    %607 = vmatmul.mubr.bf16.gmra.mrb[0].mxu0 %v472
    %v608 = vpop.f32.mrb[0].mxu0
    %v609 = vadd.f32 %v396, %v608
    %v610 = vpop.f32.mrb[0].mxu0
    %v611 = vpop.f32.mrb[0].mxu0
    %v612 = vadd.f32 %v396, %v611
    %v613 = vpop.f32.mrb[0].mxu0
    %614 = vmatprep.mubr.bf16.mxu0 0
    %615 = vmatmul.mubr.bf16.gmra.mrb[0].mxu0 %v475
    %v616 = vpop.f32.mrb[0].mxu0
    %v617 = vadd.f32 %v396, %v616
    %v618 = vpop.f32.mrb[0].mxu0
    %v619 = vpop.f32.mrb[0].mxu0
    %v620 = vadd.f32 %v396, %v619
    %v621 = vpop.f32.mrb[0].mxu0
    %622 = vmatprep.mubr.bf16.mxu0 0
    %623 = vmatmul.mubr.bf16.gmra.mrb[0].mxu0 %v478
    %v624 = vpop.f32.mrb[0].mxu0
    %v625 = vadd.f32 %v396, %v624
    %v626 = vpop.f32.mrb[0].mxu0
    %v627 = vpop.f32.mrb[0].mxu0
    %v628 = vadd.f32 %v396, %v627
    %v629 = vpop.f32.mrb[0].mxu0
    %630 = vmatprep.mubr.bf16.mxu0 0
    %631 = vmatmul.mubr.bf16.gmra.mrb[0].mxu0 %v481
    %v632 = vpop.f32.mrb[0].mxu0
    %v633 = vadd.f32 %v396, %v632
    %v634 = vpop.f32.mrb[0].mxu0
    %v635 = vpop.f32.mrb[0].mxu0
    %v636 = vadd.f32 %v396, %v635
    %v637 = vpop.f32.mrb[0].mxu0
    %638 = vmatprep.mubr.bf16.mxu0 0
    %639 = vmatmul.mubr.bf16.gmra.mrb[0].mxu0 %v484
    %v640 = vpop.f32.mrb[0].mxu0
    %v641 = vadd.f32 %v396, %v640
    %v642 = vpop.f32.mrb[0].mxu0
    %v643 = vpop.f32.mrb[0].mxu0
    %v644 = vadd.f32 %v396, %v643
    %v645 = vpop.f32.mrb[0].mxu0
    %646 = vdwg.mxu0
    %v647 = vmax.f32 %v521, 0.0
    %v648 = vmax.f32 %v524, 0.0
    %v649 = vmax.f32 %v529, 0.0
    %v650 = vmax.f32 %v532, 0.0
    %v651 = vmax.f32 %v537, 0.0
    %v652 = vmax.f32 %v540, 0.0
    %v653 = vmax.f32 %v545, 0.0
    %v654 = vmax.f32 %v548, 0.0
    %v655 = vmax.f32 %v553, 0.0
    %v656 = vmax.f32 %v556, 0.0
    %v657 = vmax.f32 %v561, 0.0
    %v658 = vmax.f32 %v564, 0.0
    %v659 = vmax.f32 %v569, 0.0
    %v660 = vmax.f32 %v572, 0.0
    %v661 = vmax.f32 %v577, 0.0
    %v662 = vmax.f32 %v580, 0.0
    %v663 = vmax.f32 %v585, 0.0
    %v664 = vmax.f32 %v588, 0.0
    %v665 = vmax.f32 %v593, 0.0
    %v666 = vmax.f32 %v596, 0.0
    %v667 = vmax.f32 %v601, 0.0
    %v668 = vmax.f32 %v604, 0.0
    %v669 = vmax.f32 %v609, 0.0
    %v670 = vmax.f32 %v612, 0.0
    %v671 = vmax.f32 %v617, 0.0
    %v672 = vmax.f32 %v620, 0.0
    %v673 = vmax.f32 %v625, 0.0
    %v674 = vmax.f32 %v628, 0.0
    %v675 = vmax.f32 %v633, 0.0
    %v676 = vmax.f32 %v636, 0.0
    %v677 = vmax.f32 %v641, 0.0
    %v678 = vmax.f32 %v644, 0.0
    %s679 = scalar_lea.vmem [#allocation4], 32
    %v680 = vld [vmem:[%s679] sm:$0xf]
    %v681 = vld [vmem:[%s679 + $0x4] sm:$0xf]
    %v682 = vld [vmem:[%s679 + $0x8] sm:$0xf]
    %v683 = vld [vmem:[%s679 + $0xc] sm:$0xf]
    %v684 = vld [vmem:[%s679 + $0x10] sm:$0xf]
    %v685 = vld [vmem:[%s679 + $0x14] sm:$0xf]
    %v686 = vld [vmem:[%s679 + $0x18] sm:$0xf]
    %v687 = vld [vmem:[%s679 + $0x1c] sm:$0xf]
    %v688 = vld [vmem:[%s7 + $0x2] ss:$0 sm:$0xff]
    %v689 = vpack.c.bf16 %v648, %v647
    %v690 = vpack.c.bf16 %v650, %v649
    %v691 = vpack.c.bf16 %v652, %v651
    %v692 = vpack.c.bf16 %v654, %v653
    %v693 = vpack.c.bf16 %v656, %v655
    %v694 = vpack.c.bf16 %v658, %v657
    %v695 = vpack.c.bf16 %v660, %v659
    %v696 = vpack.c.bf16 %v662, %v661
    %v697 = vpack.c.bf16 %v664, %v663
    %v698 = vpack.c.bf16 %v666, %v665
    %v699 = vpack.c.bf16 %v668, %v667
    %v700 = vpack.c.bf16 %v670, %v669
    %v701 = vpack.c.bf16 %v672, %v671
    %v702 = vpack.c.bf16 %v674, %v673
    %v703 = vpack.c.bf16 %v676, %v675
    %v704 = vpack.c.bf16 %v678, %v677
    %v713 = vunpack.c.l.b16 %v680
    %v714 = vunpack.c.l.b16 %v681
    %v715 = vunpack.c.l.b16 %v682
    %v716 = vunpack.c.l.b16 %v683
    %v717 = vunpack.c.l.b16 %v684
    %v718 = vunpack.c.l.b16 %v685
    %v719 = vunpack.c.l.b16 %v686
    %v720 = vunpack.c.l.b16 %v687
    %v721 = vpack.c.b16 %v714, %v713
    %v722 = vpack.c.b16 %v716, %v715
    %v723 = vpack.c.b16 %v718, %v717
    %v724 = vpack.c.b16 %v720, %v719
    %v730 = vsel %vm437, %v689, 0
    %v733 = vsel %vm437, %v690, 0
    %v736 = vsel %vm437, %v691, 0
    %v739 = vsel %vm437, %v692, 0
    %v742 = vsel %vm437, %v693, 0
    %v745 = vsel %vm437, %v694, 0
    %v748 = vsel %vm437, %v695, 0
    %v751 = vsel %vm437, %v696, 0
    %v754 = vsel %vm437, %v697, 0
    %v757 = vsel %vm437, %v698, 0
    %v760 = vsel %vm437, %v699, 0
    %v763 = vsel %vm437, %v700, 0
    %v766 = vsel %vm437, %v701, 0
    %v769 = vsel %vm437, %v702, 0
    %v772 = vsel %vm437, %v703, 0
    %v775 = vsel %vm437, %v704, 0
    %777 = vmatprep.subr.bf16.mxu0 0
    %778 = vmatpush1.bf16.msra.mxu0 %v721
    %779 = vmatprep.subr.bf16.mxu0 0
    %780 = vmatpush1.bf16.msra.mxu0 %v722
    %781 = vmatprep.subr.bf16.mxu0 0
    %782 = vmatpush1.bf16.msra.mxu0 %v723
    %783 = vmatprep.subr.bf16.mxu0 0
    %784 = vmatpush1.bf16.msra.mxu0 %v724
    %785 = vmatprep.subr.bf16.mxu0 0
    %786 = vmatpush1.bf16.msra.mxu0 0
    %787 = vmatprep.subr.bf16.mxu0 0
    %788 = vmatpush1.bf16.msra.mxu0 0
    %789 = vmatprep.subr.bf16.mxu0 0
    %790 = vmatpush1.bf16.msra.mxu0 0
    %791 = vmatprep.subr.bf16.mxu0 0
    %792 = vmatpush1.bf16.msra.mxu0 0
    %793 = vmatprep.subr.bf16.mxu0 0
    %794 = vmatpush1.bf16.msra.mxu0 0
    %795 = vmatprep.subr.bf16.mxu0 0
    %796 = vmatpush1.bf16.msra.mxu0 0
    %797 = vmatprep.subr.bf16.mxu0 0
    %798 = vmatpush1.bf16.msra.mxu0 0
    %799 = vmatprep.subr.bf16.mxu0 0
    %800 = vmatpush1.bf16.msra.mxu0 0
    %801 = vmatprep.subr.bf16.mxu0 0
    %802 = vmatpush1.bf16.msra.mxu0 0
    %803 = vmatprep.subr.bf16.mxu0 0
    %804 = vmatpush1.bf16.msra.mxu0 0
    %805 = vmatprep.subr.bf16.mxu0 0
    %806 = vmatpush1.bf16.msra.mxu0 0
    %807 = vmatprep.subr.bf16.mxu0 0
    %808 = vmatpush1.bf16.msra.mxu0 0
    %809 = vmatprep.mubr.bf16.mxu0 0
    %810 = vmatmul.mubr.bf16.gmra.mrb[0].mxu0 %v730
    %v811 = vpop.f32.mrb[0].mxu0
    %v812 = vadd.f32 %v688, %v811
    %v813 = vpop.f32.mrb[0].mxu0
    %v814 = vpop.f32.mrb[0].mxu0
    %v815 = vadd.f32 %v688, %v814
    %v816 = vpop.f32.mrb[0].mxu0
    %817 = vmatprep.mubr.bf16.mxu0 0
    %818 = vmatmul.mubr.bf16.gmra.mrb[0].mxu0 %v733
    %v819 = vpop.f32.mrb[0].mxu0
    %v820 = vadd.f32 %v688, %v819
    %v821 = vpop.f32.mrb[0].mxu0
    %v822 = vpop.f32.mrb[0].mxu0
    %v823 = vadd.f32 %v688, %v822
    %v824 = vpop.f32.mrb[0].mxu0
    %825 = vmatprep.mubr.bf16.mxu0 0
    %826 = vmatmul.mubr.bf16.gmra.mrb[0].mxu0 %v736
    %v827 = vpop.f32.mrb[0].mxu0
    %v828 = vadd.f32 %v688, %v827
    %v829 = vpop.f32.mrb[0].mxu0
    %v830 = vpop.f32.mrb[0].mxu0
    %v831 = vadd.f32 %v688, %v830
    %v832 = vpop.f32.mrb[0].mxu0
    %833 = vmatprep.mubr.bf16.mxu0 0
    %834 = vmatmul.mubr.bf16.gmra.mrb[0].mxu0 %v739
    %v835 = vpop.f32.mrb[0].mxu0
    %v836 = vadd.f32 %v688, %v835
    %v837 = vpop.f32.mrb[0].mxu0
    %v838 = vpop.f32.mrb[0].mxu0
    %v839 = vadd.f32 %v688, %v838
    %v840 = vpop.f32.mrb[0].mxu0
    %841 = vmatprep.mubr.bf16.mxu0 0
    %842 = vmatmul.mubr.bf16.gmra.mrb[0].mxu0 %v742
    %v843 = vpop.f32.mrb[0].mxu0
    %v844 = vadd.f32 %v688, %v843
    %v845 = vpop.f32.mrb[0].mxu0
    %v846 = vpop.f32.mrb[0].mxu0
    %v847 = vadd.f32 %v688, %v846
    %v848 = vpop.f32.mrb[0].mxu0
    %849 = vmatprep.mubr.bf16.mxu0 0
    %850 = vmatmul.mubr.bf16.gmra.mrb[0].mxu0 %v745
    %v851 = vpop.f32.mrb[0].mxu0
    %v852 = vadd.f32 %v688, %v851
    %v853 = vpop.f32.mrb[0].mxu0
    %v854 = vpop.f32.mrb[0].mxu0
    %v855 = vadd.f32 %v688, %v854
    %v856 = vpop.f32.mrb[0].mxu0
    %857 = vmatprep.mubr.bf16.mxu0 0
    %858 = vmatmul.mubr.bf16.gmra.mrb[0].mxu0 %v748
    %v859 = vpop.f32.mrb[0].mxu0
    %v860 = vadd.f32 %v688, %v859
    %v861 = vpop.f32.mrb[0].mxu0
    %v862 = vpop.f32.mrb[0].mxu0
    %v863 = vadd.f32 %v688, %v862
    %v864 = vpop.f32.mrb[0].mxu0
    %865 = vmatprep.mubr.bf16.mxu0 0
    %866 = vmatmul.mubr.bf16.gmra.mrb[0].mxu0 %v751
    %v867 = vpop.f32.mrb[0].mxu0
    %v868 = vadd.f32 %v688, %v867
    %v869 = vpop.f32.mrb[0].mxu0
    %v870 = vpop.f32.mrb[0].mxu0
    %v871 = vadd.f32 %v688, %v870
    %v872 = vpop.f32.mrb[0].mxu0
    %873 = vmatprep.mubr.bf16.mxu0 0
    %874 = vmatmul.mubr.bf16.gmra.mrb[0].mxu0 %v754
    %v875 = vpop.f32.mrb[0].mxu0
    %v876 = vadd.f32 %v688, %v875
    %v877 = vpop.f32.mrb[0].mxu0
    %v878 = vpop.f32.mrb[0].mxu0
    %v879 = vadd.f32 %v688, %v878
    %v880 = vpop.f32.mrb[0].mxu0
    %881 = vmatprep.mubr.bf16.mxu0 0
    %882 = vmatmul.mubr.bf16.gmra.mrb[0].mxu0 %v757
    %v883 = vpop.f32.mrb[0].mxu0
    %v884 = vadd.f32 %v688, %v883
    %v885 = vpop.f32.mrb[0].mxu0
    %v886 = vpop.f32.mrb[0].mxu0
    %v887 = vadd.f32 %v688, %v886
    %v888 = vpop.f32.mrb[0].mxu0
    %889 = vmatprep.mubr.bf16.mxu0 0
    %890 = vmatmul.mubr.bf16.gmra.mrb[0].mxu0 %v760
    %v891 = vpop.f32.mrb[0].mxu0
    %v892 = vadd.f32 %v688, %v891
    %v893 = vpop.f32.mrb[0].mxu0
    %v894 = vpop.f32.mrb[0].mxu0
    %v895 = vadd.f32 %v688, %v894
    %v896 = vpop.f32.mrb[0].mxu0
    %897 = vmatprep.mubr.bf16.mxu0 0
    %898 = vmatmul.mubr.bf16.gmra.mrb[0].mxu0 %v763
    %v899 = vpop.f32.mrb[0].mxu0
    %v900 = vadd.f32 %v688, %v899
    %v901 = vpop.f32.mrb[0].mxu0
    %v902 = vpop.f32.mrb[0].mxu0
    %v903 = vadd.f32 %v688, %v902
    %v904 = vpop.f32.mrb[0].mxu0
    %905 = vmatprep.mubr.bf16.mxu0 0
    %906 = vmatmul.mubr.bf16.gmra.mrb[0].mxu0 %v766
    %v907 = vpop.f32.mrb[0].mxu0
    %v908 = vadd.f32 %v688, %v907
    %v909 = vpop.f32.mrb[0].mxu0
    %v910 = vpop.f32.mrb[0].mxu0
    %v911 = vadd.f32 %v688, %v910
    %v912 = vpop.f32.mrb[0].mxu0
    %913 = vmatprep.mubr.bf16.mxu0 0
    %914 = vmatmul.mubr.bf16.gmra.mrb[0].mxu0 %v769
    %v915 = vpop.f32.mrb[0].mxu0
    %v916 = vadd.f32 %v688, %v915
    %v917 = vpop.f32.mrb[0].mxu0
    %v918 = vpop.f32.mrb[0].mxu0
    %v919 = vadd.f32 %v688, %v918
    %v920 = vpop.f32.mrb[0].mxu0
    %921 = vmatprep.mubr.bf16.mxu0 0
    %922 = vmatmul.mubr.bf16.gmra.mrb[0].mxu0 %v772
    %v923 = vpop.f32.mrb[0].mxu0
    %v924 = vadd.f32 %v688, %v923
    %v925 = vpop.f32.mrb[0].mxu0
    %v926 = vpop.f32.mrb[0].mxu0
    %v927 = vadd.f32 %v688, %v926
    %v928 = vpop.f32.mrb[0].mxu0
    %929 = vmatprep.mubr.bf16.mxu0 0
    %930 = vmatmul.mubr.bf16.gmra.mrb[0].mxu0 %v775
    %v931 = vpop.f32.mrb[0].mxu0
    %v932 = vadd.f32 %v688, %v931
    %v933 = vpop.f32.mrb[0].mxu0
    %v934 = vpop.f32.mrb[0].mxu0
    %v935 = vadd.f32 %v688, %v934
    %v936 = vpop.f32.mrb[0].mxu0
    %937 = vdwg.mxu0
    %v938 = vmax.f32 %v812, 0.0
    %v939 = vmax.f32 %v815, 0.0
    %v940 = vmax.f32 %v820, 0.0
    %v941 = vmax.f32 %v823, 0.0
    %v942 = vmax.f32 %v828, 0.0
    %v943 = vmax.f32 %v831, 0.0
    %v944 = vmax.f32 %v836, 0.0
    %v945 = vmax.f32 %v839, 0.0
    %v946 = vmax.f32 %v844, 0.0
    %v947 = vmax.f32 %v847, 0.0
    %v948 = vmax.f32 %v852, 0.0
    %v949 = vmax.f32 %v855, 0.0
    %v950 = vmax.f32 %v860, 0.0
    %v951 = vmax.f32 %v863, 0.0
    %v952 = vmax.f32 %v868, 0.0
    %v953 = vmax.f32 %v871, 0.0
    %v954 = vmax.f32 %v876, 0.0
    %v955 = vmax.f32 %v879, 0.0
    %v956 = vmax.f32 %v884, 0.0
    %v957 = vmax.f32 %v887, 0.0
    %v958 = vmax.f32 %v892, 0.0
    %v959 = vmax.f32 %v895, 0.0
    %v960 = vmax.f32 %v900, 0.0
    %v961 = vmax.f32 %v903, 0.0
    %v962 = vmax.f32 %v908, 0.0
    %v963 = vmax.f32 %v911, 0.0
    %v964 = vmax.f32 %v916, 0.0
    %v965 = vmax.f32 %v919, 0.0
    %v966 = vmax.f32 %v924, 0.0
    %v967 = vmax.f32 %v927, 0.0
    %v968 = vmax.f32 %v932, 0.0
    %v969 = vmax.f32 %v935, 0.0
    %v970 = vld [vmem:[#allocation7] sm:$0xf]
    %v971 = vld [vmem:[#allocation7 + $0x4] sm:$0xf]
    %v972 = vld [vmem:[#allocation7 + $0x8] sm:$0xf]
    %v973 = vld [vmem:[#allocation7 + $0xc] sm:$0xf]
    %v974 = vld [vmem:[#allocation7 + $0x10] sm:$0xf]
    %v975 = vld [vmem:[#allocation7 + $0x14] sm:$0xf]
    %v976 = vld [vmem:[#allocation7 + $0x18] sm:$0xf]
    %v977 = vld [vmem:[#allocation7 + $0x1c] sm:$0xf]
    %v978 = vld [vmem:[%s7 + $0x3] ss:$0 sm:$0xff]
    %v979 = vpack.c.bf16 %v939, %v938
    %v980 = vpack.c.bf16 %v941, %v940
    %v981 = vpack.c.bf16 %v943, %v942
    %v982 = vpack.c.bf16 %v945, %v944
    %v983 = vpack.c.bf16 %v947, %v946
    %v984 = vpack.c.bf16 %v949, %v948
    %v985 = vpack.c.bf16 %v951, %v950
    %v986 = vpack.c.bf16 %v953, %v952
    %v987 = vpack.c.bf16 %v955, %v954
    %v988 = vpack.c.bf16 %v957, %v956
    %v989 = vpack.c.bf16 %v959, %v958
    %v990 = vpack.c.bf16 %v961, %v960
    %v991 = vpack.c.bf16 %v963, %v962
    %v992 = vpack.c.bf16 %v965, %v964
    %v993 = vpack.c.bf16 %v967, %v966
    %v994 = vpack.c.bf16 %v969, %v968
    %v1003 = vunpack.c.l.b16 %v970
    %v1004 = vunpack.c.l.b16 %v971
    %v1005 = vunpack.c.l.b16 %v972
    %v1006 = vunpack.c.l.b16 %v973
    %v1007 = vunpack.c.l.b16 %v974
    %v1008 = vunpack.c.l.b16 %v975
    %v1009 = vunpack.c.l.b16 %v976
    %v1010 = vunpack.c.l.b16 %v977
    %v1011 = vpack.c.b16 %v1004, %v1003
    %v1012 = vpack.c.b16 %v1006, %v1005
    %v1013 = vpack.c.b16 %v1008, %v1007
    %v1014 = vpack.c.b16 %v1010, %v1009
    %v1020 = vsel %vm437, %v979, 0
    %v1023 = vsel %vm437, %v980, 0
    %v1026 = vsel %vm437, %v981, 0
    %v1029 = vsel %vm437, %v982, 0
    %v1032 = vsel %vm437, %v983, 0
    %v1035 = vsel %vm437, %v984, 0
    %v1038 = vsel %vm437, %v985, 0
    %v1041 = vsel %vm437, %v986, 0
    %v1044 = vsel %vm437, %v987, 0
    %v1047 = vsel %vm437, %v988, 0
    %v1050 = vsel %vm437, %v989, 0
    %v1053 = vsel %vm437, %v990, 0
    %v1056 = vsel %vm437, %v991, 0
    %v1059 = vsel %vm437, %v992, 0
    %v1062 = vsel %vm437, %v993, 0
    %v1065 = vsel %vm437, %v994, 0
    %1067 = vmatprep.subr.bf16.mxu0 0
    %1068 = vmatpush1.bf16.msra.mxu0 %v1011
    %1069 = vmatprep.subr.bf16.mxu0 0
    %1070 = vmatpush1.bf16.msra.mxu0 %v1012
    %1071 = vmatprep.subr.bf16.mxu0 0
    %1072 = vmatpush1.bf16.msra.mxu0 %v1013
    %1073 = vmatprep.subr.bf16.mxu0 0
    %1074 = vmatpush1.bf16.msra.mxu0 %v1014
    %1075 = vmatprep.subr.bf16.mxu0 0
    %1076 = vmatpush1.bf16.msra.mxu0 0
    %1077 = vmatprep.subr.bf16.mxu0 0
    %1078 = vmatpush1.bf16.msra.mxu0 0
    %1079 = vmatprep.subr.bf16.mxu0 0
    %1080 = vmatpush1.bf16.msra.mxu0 0
    %1081 = vmatprep.subr.bf16.mxu0 0
    %1082 = vmatpush1.bf16.msra.mxu0 0
    %1083 = vmatprep.subr.bf16.mxu0 0
    %1084 = vmatpush1.bf16.msra.mxu0 0
    %1085 = vmatprep.subr.bf16.mxu0 0
    %1086 = vmatpush1.bf16.msra.mxu0 0
    %1087 = vmatprep.subr.bf16.mxu0 0
    %1088 = vmatpush1.bf16.msra.mxu0 0
    %1089 = vmatprep.subr.bf16.mxu0 0
    %1090 = vmatpush1.bf16.msra.mxu0 0
    %1091 = vmatprep.subr.bf16.mxu0 0
    %1092 = vmatpush1.bf16.msra.mxu0 0
    %1093 = vmatprep.subr.bf16.mxu0 0
    %1094 = vmatpush1.bf16.msra.mxu0 0
    %1095 = vmatprep.subr.bf16.mxu0 0
    %1096 = vmatpush1.bf16.msra.mxu0 0
    %1097 = vmatprep.subr.bf16.mxu0 0
    %1098 = vmatpush1.bf16.msra.mxu0 0
    %1099 = vmatprep.mubr.bf16.mxu0 0
    %1100 = vmatmul.mubr.bf16.gmra.mrb[0].mxu0 %v1020
    %v1101 = vpop.f32.mrb[0].mxu0
    %v1102 = vadd.f32 %v978, %v1101
    %v1103 = vpop.f32.mrb[0].mxu0
    %v1104 = vpop.f32.mrb[0].mxu0
    %v1105 = vadd.f32 %v978, %v1104
    %v1106 = vpop.f32.mrb[0].mxu0
    %1107 = vmatprep.mubr.bf16.mxu0 0
    %1108 = vmatmul.mubr.bf16.gmra.mrb[0].mxu0 %v1023
    %v1109 = vpop.f32.mrb[0].mxu0
    %v1110 = vadd.f32 %v978, %v1109
    %v1111 = vpop.f32.mrb[0].mxu0
    %v1112 = vpop.f32.mrb[0].mxu0
    %v1113 = vadd.f32 %v978, %v1112
    %v1114 = vpop.f32.mrb[0].mxu0
    %1115 = vmatprep.mubr.bf16.mxu0 0
    %1116 = vmatmul.mubr.bf16.gmra.mrb[0].mxu0 %v1026
    %v1117 = vpop.f32.mrb[0].mxu0
    %v1118 = vadd.f32 %v978, %v1117
    %v1119 = vpop.f32.mrb[0].mxu0
    %v1120 = vpop.f32.mrb[0].mxu0
    %v1121 = vadd.f32 %v978, %v1120
    %v1122 = vpop.f32.mrb[0].mxu0
    %1123 = vmatprep.mubr.bf16.mxu0 0
    %1124 = vmatmul.mubr.bf16.gmra.mrb[0].mxu0 %v1029
    %v1125 = vpop.f32.mrb[0].mxu0
    %v1126 = vadd.f32 %v978, %v1125
    %v1127 = vpop.f32.mrb[0].mxu0
    %v1128 = vpop.f32.mrb[0].mxu0
    %v1129 = vadd.f32 %v978, %v1128
    %v1130 = vpop.f32.mrb[0].mxu0
    %1131 = vmatprep.mubr.bf16.mxu0 0
    %1132 = vmatmul.mubr.bf16.gmra.mrb[0].mxu0 %v1032
    %v1133 = vpop.f32.mrb[0].mxu0
    %v1134 = vadd.f32 %v978, %v1133
    %v1135 = vpop.f32.mrb[0].mxu0
    %v1136 = vpop.f32.mrb[0].mxu0
    %v1137 = vadd.f32 %v978, %v1136
    %v1138 = vpop.f32.mrb[0].mxu0
    %1139 = vmatprep.mubr.bf16.mxu0 0
    %1140 = vmatmul.mubr.bf16.gmra.mrb[0].mxu0 %v1035
    %v1141 = vpop.f32.mrb[0].mxu0
    %v1142 = vadd.f32 %v978, %v1141
    %v1143 = vpop.f32.mrb[0].mxu0
    %v1144 = vpop.f32.mrb[0].mxu0
    %v1145 = vadd.f32 %v978, %v1144
    %v1146 = vpop.f32.mrb[0].mxu0
    %1147 = vmatprep.mubr.bf16.mxu0 0
    %1148 = vmatmul.mubr.bf16.gmra.mrb[0].mxu0 %v1038
    %v1149 = vpop.f32.mrb[0].mxu0
    %v1150 = vadd.f32 %v978, %v1149
    %v1151 = vpop.f32.mrb[0].mxu0
    %v1152 = vpop.f32.mrb[0].mxu0
    %v1153 = vadd.f32 %v978, %v1152
    %v1154 = vpop.f32.mrb[0].mxu0
    %1155 = vmatprep.mubr.bf16.mxu0 0
    %1156 = vmatmul.mubr.bf16.gmra.mrb[0].mxu0 %v1041
    %v1157 = vpop.f32.mrb[0].mxu0
    %v1158 = vadd.f32 %v978, %v1157
    %v1159 = vpop.f32.mrb[0].mxu0
    %v1160 = vpop.f32.mrb[0].mxu0
    %v1161 = vadd.f32 %v978, %v1160
    %v1162 = vpop.f32.mrb[0].mxu0
    %1163 = vmatprep.mubr.bf16.mxu0 0
    %1164 = vmatmul.mubr.bf16.gmra.mrb[0].mxu0 %v1044
    %v1165 = vpop.f32.mrb[0].mxu0
    %v1166 = vadd.f32 %v978, %v1165
    %v1167 = vpop.f32.mrb[0].mxu0
    %v1168 = vpop.f32.mrb[0].mxu0
    %v1169 = vadd.f32 %v978, %v1168
    %v1170 = vpop.f32.mrb[0].mxu0
    %1171 = vmatprep.mubr.bf16.mxu0 0
    %1172 = vmatmul.mubr.bf16.gmra.mrb[0].mxu0 %v1047
    %v1173 = vpop.f32.mrb[0].mxu0
    %v1174 = vadd.f32 %v978, %v1173
    %v1175 = vpop.f32.mrb[0].mxu0
    %v1176 = vpop.f32.mrb[0].mxu0
    %v1177 = vadd.f32 %v978, %v1176
    %v1178 = vpop.f32.mrb[0].mxu0
    %1179 = vmatprep.mubr.bf16.mxu0 0
    %1180 = vmatmul.mubr.bf16.gmra.mrb[0].mxu0 %v1050
    %v1181 = vpop.f32.mrb[0].mxu0
    %v1182 = vadd.f32 %v978, %v1181
    %v1183 = vpop.f32.mrb[0].mxu0
    %v1184 = vpop.f32.mrb[0].mxu0
    %v1185 = vadd.f32 %v978, %v1184
    %v1186 = vpop.f32.mrb[0].mxu0
    %1187 = vmatprep.mubr.bf16.mxu0 0
    %1188 = vmatmul.mubr.bf16.gmra.mrb[0].mxu0 %v1053
    %v1189 = vpop.f32.mrb[0].mxu0
    %v1190 = vadd.f32 %v978, %v1189
    %v1191 = vpop.f32.mrb[0].mxu0
    %v1192 = vpop.f32.mrb[0].mxu0
    %v1193 = vadd.f32 %v978, %v1192
    %v1194 = vpop.f32.mrb[0].mxu0
    %1195 = vmatprep.mubr.bf16.mxu0 0
    %1196 = vmatmul.mubr.bf16.gmra.mrb[0].mxu0 %v1056
    %v1197 = vpop.f32.mrb[0].mxu0
    %v1198 = vadd.f32 %v978, %v1197
    %v1199 = vpop.f32.mrb[0].mxu0
    %v1200 = vpop.f32.mrb[0].mxu0
    %v1201 = vadd.f32 %v978, %v1200
    %v1202 = vpop.f32.mrb[0].mxu0
    %1203 = vmatprep.mubr.bf16.mxu0 0
    %1204 = vmatmul.mubr.bf16.gmra.mrb[0].mxu0 %v1059
    %v1205 = vpop.f32.mrb[0].mxu0
    %v1206 = vadd.f32 %v978, %v1205
    %v1207 = vpop.f32.mrb[0].mxu0
    %v1208 = vpop.f32.mrb[0].mxu0
    %v1209 = vadd.f32 %v978, %v1208
    %v1210 = vpop.f32.mrb[0].mxu0
    %1211 = vmatprep.mubr.bf16.mxu0 0
    %1212 = vmatmul.mubr.bf16.gmra.mrb[0].mxu0 %v1062
    %v1213 = vpop.f32.mrb[0].mxu0
    %v1214 = vadd.f32 %v978, %v1213
    %v1215 = vpop.f32.mrb[0].mxu0
    %v1216 = vpop.f32.mrb[0].mxu0
    %v1217 = vadd.f32 %v978, %v1216
    %v1218 = vpop.f32.mrb[0].mxu0
    %1219 = vmatprep.mubr.bf16.mxu0 0
    %1220 = vmatmul.mubr.bf16.gmra.mrb[0].mxu0 %v1065
    %v1221 = vpop.f32.mrb[0].mxu0
    %v1222 = vadd.f32 %v978, %v1221
    %v1223 = vpop.f32.mrb[0].mxu0
    %v1224 = vpop.f32.mrb[0].mxu0
    %v1225 = vadd.f32 %v978, %v1224
    %v1226 = vpop.f32.mrb[0].mxu0
    %1227 = vdwg.mxu0
    %v1228 = vmax.f32 %v1102, 0.0
    %v1229 = vmax.f32 %v1105, 0.0
    %v1230 = vmax.f32 %v1110, 0.0
    %v1231 = vmax.f32 %v1113, 0.0
    %v1232 = vmax.f32 %v1118, 0.0
    %v1233 = vmax.f32 %v1121, 0.0
    %v1234 = vmax.f32 %v1126, 0.0
    %v1235 = vmax.f32 %v1129, 0.0
    %v1236 = vmax.f32 %v1134, 0.0
    %v1237 = vmax.f32 %v1137, 0.0
    %v1238 = vmax.f32 %v1142, 0.0
    %v1239 = vmax.f32 %v1145, 0.0
    %v1240 = vmax.f32 %v1150, 0.0
    %v1241 = vmax.f32 %v1153, 0.0
    %v1242 = vmax.f32 %v1158, 0.0
    %v1243 = vmax.f32 %v1161, 0.0
    %v1244 = vmax.f32 %v1166, 0.0
    %v1245 = vmax.f32 %v1169, 0.0
    %v1246 = vmax.f32 %v1174, 0.0
    %v1247 = vmax.f32 %v1177, 0.0
    %v1248 = vmax.f32 %v1182, 0.0
    %v1249 = vmax.f32 %v1185, 0.0
    %v1250 = vmax.f32 %v1190, 0.0
    %v1251 = vmax.f32 %v1193, 0.0
    %v1252 = vmax.f32 %v1198, 0.0
    %v1253 = vmax.f32 %v1201, 0.0
    %v1254 = vmax.f32 %v1206, 0.0
    %v1255 = vmax.f32 %v1209, 0.0
    %v1256 = vmax.f32 %v1214, 0.0
    %v1257 = vmax.f32 %v1217, 0.0
    %v1258 = vmax.f32 %v1222, 0.0
    %v1259 = vmax.f32 %v1225, 0.0
    %v1260 = vld [vmem:[%s4] sm:$0xff]
    %v1261 = vld [vmem:[%s4 + $0x8] sm:$0xff]
    %v1262 = vld [vmem:[%s4 + $0x10] sm:$0xff]
    %v1263 = vld [vmem:[%s4 + $0x18] sm:$0xff]
    %v1264 = vld [vmem:[%s4 + $0x20] sm:$0xff]
    %v1265 = vld [vmem:[%s4 + $0x28] sm:$0xff]
    %v1266 = vld [vmem:[%s4 + $0x30] sm:$0xff]
    %v1267 = vld [vmem:[%s4 + $0x38] sm:$0xff]
    %v1268 = vld [vmem:[%s4 + $0x40] sm:$0xff]
    %v1269 = vld [vmem:[%s4 + $0x48] sm:$0xff]
    %v1270 = vld [vmem:[%s4 + $0x50] sm:$0xff]
    %v1271 = vld [vmem:[%s4 + $0x58] sm:$0xff]
    %v1272 = vld [vmem:[%s4 + $0x60] sm:$0xff]
    %v1273 = vld [vmem:[%s4 + $0x68] sm:$0xff]
    %v1274 = vld [vmem:[%s4 + $0x70] sm:$0xff]
    %v1275 = vld [vmem:[%s4 + $0x78] sm:$0xff]
    %v1276 = vld [vmem:[%s4 + $0x80] sm:$0xff]
    %v1277 = vld [vmem:[%s4 + $0x88] sm:$0xff]
    %v1278 = vld [vmem:[%s4 + $0x90] sm:$0xff]
    %v1279 = vld [vmem:[%s4 + $0x98] sm:$0xff]
    %v1280 = vld [vmem:[%s4 + $0xa0] sm:$0xff]
    %v1281 = vld [vmem:[%s4 + $0xa8] sm:$0xff]
    %v1282 = vld [vmem:[%s4 + $0xb0] sm:$0xff]
    %v1283 = vld [vmem:[%s4 + $0xb8] sm:$0xff]
    %v1284 = vld [vmem:[%s4 + $0xc0] sm:$0xff]
    %v1285 = vld [vmem:[%s4 + $0xc8] sm:$0xff]
    %v1286 = vld [vmem:[%s4 + $0xd0] sm:$0xff]
    %v1287 = vld [vmem:[%s4 + $0xd8] sm:$0xff]
    %v1288 = vld [vmem:[%s4 + $0xe0] sm:$0xff]
    %v1289 = vld [vmem:[%s4 + $0xe8] sm:$0xff]
    %v1290 = vld [vmem:[%s4 + $0xf0] sm:$0xff]
    %v1291 = vld [vmem:[%s4 + $0xf8] sm:$0xff]
    %v1292 = vld [vmem:[%s4 + $0x100] sm:$0xff]
    %v1293 = vld [vmem:[%s4 + $0x108] sm:$0xff]
    %v1294 = vld [vmem:[%s4 + $0x110] sm:$0xff]
    %v1295 = vld [vmem:[%s4 + $0x118] sm:$0xff]
    %v1296 = vld [vmem:[%s4 + $0x120] sm:$0xff]
    %v1297 = vld [vmem:[%s4 + $0x128] sm:$0xff]
    %v1298 = vld [vmem:[%s4 + $0x130] sm:$0xff]
    %v1299 = vld [vmem:[%s4 + $0x138] sm:$0xff]
    %v1300 = vld [vmem:[%s4 + $0x140] sm:$0xff]
    %v1301 = vld [vmem:[%s4 + $0x148] sm:$0xff]
    %v1302 = vld [vmem:[%s4 + $0x150] sm:$0xff]
    %v1303 = vld [vmem:[%s4 + $0x158] sm:$0xff]
    %v1304 = vld [vmem:[%s4 + $0x160] sm:$0xff]
    %v1305 = vld [vmem:[%s4 + $0x168] sm:$0xff]
    %v1306 = vld [vmem:[%s4 + $0x170] sm:$0xff]
    %v1307 = vld [vmem:[%s4 + $0x178] sm:$0xff]
    %v1308 = vld [vmem:[%s4 + $0x180] sm:$0xff]
    %v1309 = vld [vmem:[%s4 + $0x188] sm:$0xff]
    %v1310 = vld [vmem:[%s4 + $0x190] sm:$0xff]
    %v1311 = vld [vmem:[%s4 + $0x198] sm:$0xff]
    %v1312 = vld [vmem:[%s4 + $0x1a0] sm:$0xff]
    %v1313 = vld [vmem:[%s4 + $0x1a8] sm:$0xff]
    %v1314 = vld [vmem:[%s4 + $0x1b0] sm:$0xff]
    %v1315 = vld [vmem:[%s4 + $0x1b8] sm:$0xff]
    %v1316 = vld [vmem:[%s4 + $0x1c0] sm:$0xff]
    %v1317 = vld [vmem:[%s4 + $0x1c8] sm:$0xff]
    %v1318 = vld [vmem:[%s4 + $0x1d0] sm:$0xff]
    %v1319 = vld [vmem:[%s4 + $0x1d8] sm:$0xff]
    %v1320 = vld [vmem:[%s4 + $0x1e0] sm:$0xff]
    %v1321 = vld [vmem:[%s4 + $0x1e8] sm:$0xff]
    %v1322 = vld [vmem:[%s4 + $0x1f0] sm:$0xff]
    %v1323 = vld [vmem:[%s4 + $0x1f8] sm:$0xff]
    %s1324 = scalar_lea.vmem %s7, 4
    %v1325 = vld [vmem:[%s1324] ss:$8 sm:$0xf]
    %v1326 = vld [vmem:[%s1324] ss:$8 sm:$0xf0]
    %v1327 = vor.u32 %v1325, %v1326
    %v1328 = vpack.c.bf16 %v1229, %v1228
    %v1329 = vpack.c.bf16 %v1231, %v1230
    %v1330 = vpack.c.bf16 %v1233, %v1232
    %v1331 = vpack.c.bf16 %v1235, %v1234
    %v1333 = vlaneseq
    %v1334 = vshrl.u32 %v1333, 7
    %v1335 = vsub.s32 0, %v1334
    %v1336 = vrot.slane %v1327, %v1335
    %v1337 = vlaneseq
    %v1338 = vshrl.u32 %v1337, 7
    %v1339 = vsub.s32 1, %v1338
    %v1340 = vrot.slane %v1327, %v1339
    %v1341 = vlaneseq
    %v1342 = vshrl.u32 %v1341, 7
    %v1343 = vsub.s32 2, %v1342
    %v1344 = vrot.slane %v1327, %v1343
    %v1345 = vlaneseq
    %v1346 = vshrl.u32 %v1345, 7
    %v1347 = vsub.s32 3, %v1346
    %v1348 = vrot.slane %v1327, %v1347
    %v1349 = vlaneseq
    %v1350 = vshrl.u32 %v1349, 7
    %v1351 = vsub.s32 4, %v1350
    %v1352 = vrot.slane %v1327, %v1351
    %v1353 = vlaneseq
    %v1354 = vshrl.u32 %v1353, 7
    %v1355 = vsub.s32 5, %v1354
    %v1356 = vrot.slane %v1327, %v1355
    %v1357 = vlaneseq
    %v1358 = vshrl.u32 %v1357, 7
    %v1359 = vsub.s32 6, %v1358
    %v1360 = vrot.slane %v1327, %v1359
    %v1361 = vlaneseq
    %v1362 = vshrl.u32 %v1361, 7
    %v1363 = vsub.s32 7, %v1362
    %v1364 = vrot.slane %v1327, %v1363
    %v1437 = vunpack.c.l.b16 %v1260
    %v1438 = vunpack.c.h.b16 %v1260
    %v1439 = vunpack.c.l.b16 %v1261
    %v1440 = vunpack.c.h.b16 %v1261
    %v1441 = vunpack.c.l.b16 %v1262
    %v1442 = vunpack.c.h.b16 %v1262
    %v1443 = vunpack.c.l.b16 %v1263
    %v1444 = vunpack.c.h.b16 %v1263
    %v1445 = vunpack.c.l.b16 %v1264
    %v1446 = vunpack.c.h.b16 %v1264
    %v1447 = vunpack.c.l.b16 %v1265
    %v1448 = vunpack.c.h.b16 %v1265
    %v1449 = vunpack.c.l.b16 %v1266
    %v1450 = vunpack.c.h.b16 %v1266
    %v1451 = vunpack.c.l.b16 %v1267
    %v1452 = vunpack.c.h.b16 %v1267
    %v1453 = vunpack.c.l.b16 %v1268
    %v1454 = vunpack.c.h.b16 %v1268
    %v1455 = vunpack.c.l.b16 %v1269
    %v1456 = vunpack.c.h.b16 %v1269
    %v1457 = vunpack.c.l.b16 %v1270
    %v1458 = vunpack.c.h.b16 %v1270
    %v1459 = vunpack.c.l.b16 %v1271
    %v1460 = vunpack.c.h.b16 %v1271
    %v1461 = vunpack.c.l.b16 %v1272
    %v1462 = vunpack.c.h.b16 %v1272
    %v1463 = vunpack.c.l.b16 %v1273
    %v1464 = vunpack.c.h.b16 %v1273
    %v1465 = vunpack.c.l.b16 %v1274
    %v1466 = vunpack.c.h.b16 %v1274
    %v1467 = vunpack.c.l.b16 %v1275
    %v1468 = vunpack.c.h.b16 %v1275
    %v1469 = vunpack.c.l.b16 %v1276
    %v1470 = vunpack.c.h.b16 %v1276
    %v1471 = vunpack.c.l.b16 %v1277
    %v1472 = vunpack.c.h.b16 %v1277
    %v1473 = vunpack.c.l.b16 %v1278
    %v1474 = vunpack.c.h.b16 %v1278
    %v1475 = vunpack.c.l.b16 %v1279
    %v1476 = vunpack.c.h.b16 %v1279
    %v1477 = vunpack.c.l.b16 %v1280
    %v1478 = vunpack.c.h.b16 %v1280
    %v1479 = vunpack.c.l.b16 %v1281
    %v1480 = vunpack.c.h.b16 %v1281
    %v1481 = vunpack.c.l.b16 %v1282
    %v1482 = vunpack.c.h.b16 %v1282
    %v1483 = vunpack.c.l.b16 %v1283
    %v1484 = vunpack.c.h.b16 %v1283
    %v1485 = vunpack.c.l.b16 %v1284
    %v1486 = vunpack.c.h.b16 %v1284
    %v1487 = vunpack.c.l.b16 %v1285
    %v1488 = vunpack.c.h.b16 %v1285
    %v1489 = vunpack.c.l.b16 %v1286
    %v1490 = vunpack.c.h.b16 %v1286
    %v1491 = vunpack.c.l.b16 %v1287
    %v1492 = vunpack.c.h.b16 %v1287
    %v1493 = vunpack.c.l.b16 %v1288
    %v1494 = vunpack.c.h.b16 %v1288
    %v1495 = vunpack.c.l.b16 %v1289
    %v1496 = vunpack.c.h.b16 %v1289
    %v1497 = vunpack.c.l.b16 %v1290
    %v1498 = vunpack.c.h.b16 %v1290
    %v1499 = vunpack.c.l.b16 %v1291
    %v1500 = vunpack.c.h.b16 %v1291
    %v1501 = vunpack.c.l.b16 %v1292
    %v1502 = vunpack.c.h.b16 %v1292
    %v1503 = vunpack.c.l.b16 %v1293
    %v1504 = vunpack.c.h.b16 %v1293
    %v1505 = vunpack.c.l.b16 %v1294
    %v1506 = vunpack.c.h.b16 %v1294
    %v1507 = vunpack.c.l.b16 %v1295
    %v1508 = vunpack.c.h.b16 %v1295
    %v1509 = vunpack.c.l.b16 %v1296
    %v1510 = vunpack.c.h.b16 %v1296
    %v1511 = vunpack.c.l.b16 %v1297
    %v1512 = vunpack.c.h.b16 %v1297
    %v1513 = vunpack.c.l.b16 %v1298
    %v1514 = vunpack.c.h.b16 %v1298
    %v1515 = vunpack.c.l.b16 %v1299
    %v1516 = vunpack.c.h.b16 %v1299
    %v1517 = vunpack.c.l.b16 %v1300
    %v1518 = vunpack.c.h.b16 %v1300
    %v1519 = vunpack.c.l.b16 %v1301
    %v1520 = vunpack.c.h.b16 %v1301
    %v1521 = vunpack.c.l.b16 %v1302
    %v1522 = vunpack.c.h.b16 %v1302
    %v1523 = vunpack.c.l.b16 %v1303
    %v1524 = vunpack.c.h.b16 %v1303
    %v1525 = vunpack.c.l.b16 %v1304
    %v1526 = vunpack.c.h.b16 %v1304
    %v1527 = vunpack.c.l.b16 %v1305
    %v1528 = vunpack.c.h.b16 %v1305
    %v1529 = vunpack.c.l.b16 %v1306
    %v1530 = vunpack.c.h.b16 %v1306
    %v1531 = vunpack.c.l.b16 %v1307
    %v1532 = vunpack.c.h.b16 %v1307
    %v1533 = vunpack.c.l.b16 %v1308
    %v1534 = vunpack.c.h.b16 %v1308
    %v1535 = vunpack.c.l.b16 %v1309
    %v1536 = vunpack.c.h.b16 %v1309
    %v1537 = vunpack.c.l.b16 %v1310
    %v1538 = vunpack.c.h.b16 %v1310
    %v1539 = vunpack.c.l.b16 %v1311
    %v1540 = vunpack.c.h.b16 %v1311
    %v1541 = vunpack.c.l.b16 %v1312
    %v1542 = vunpack.c.h.b16 %v1312
    %v1543 = vunpack.c.l.b16 %v1313
    %v1544 = vunpack.c.h.b16 %v1313
    %v1545 = vunpack.c.l.b16 %v1314
    %v1546 = vunpack.c.h.b16 %v1314
    %v1547 = vunpack.c.l.b16 %v1315
    %v1548 = vunpack.c.h.b16 %v1315
    %v1549 = vunpack.c.l.b16 %v1316
    %v1550 = vunpack.c.h.b16 %v1316
    %v1551 = vunpack.c.l.b16 %v1317
    %v1552 = vunpack.c.h.b16 %v1317
    %v1553 = vunpack.c.l.b16 %v1318
    %v1554 = vunpack.c.h.b16 %v1318
    %v1555 = vunpack.c.l.b16 %v1319
    %v1556 = vunpack.c.h.b16 %v1319
    %v1557 = vunpack.c.l.b16 %v1320
    %v1558 = vunpack.c.h.b16 %v1320
    %v1559 = vunpack.c.l.b16 %v1321
    %v1560 = vunpack.c.h.b16 %v1321
    %v1561 = vunpack.c.l.b16 %v1322
    %v1562 = vunpack.c.h.b16 %v1322
    %v1563 = vunpack.c.l.b16 %v1323
    %v1564 = vunpack.c.h.b16 %v1323
    %v1565 = vpack.c.b16 %v1445, %v1437
    %v1566 = vpack.c.b16 %v1446, %v1438
    %v1567 = vpack.c.b16 %v1447, %v1439
    %v1568 = vpack.c.b16 %v1448, %v1440
    %v1569 = vpack.c.b16 %v1449, %v1441
    %v1570 = vpack.c.b16 %v1450, %v1442
    %v1571 = vpack.c.b16 %v1451, %v1443
    %v1572 = vpack.c.b16 %v1452, %v1444
    %v1573 = vpack.c.b16 %v1461, %v1453
    %v1574 = vpack.c.b16 %v1462, %v1454
    %v1575 = vpack.c.b16 %v1463, %v1455
    %v1576 = vpack.c.b16 %v1464, %v1456
    %v1577 = vpack.c.b16 %v1465, %v1457
    %v1578 = vpack.c.b16 %v1466, %v1458
    %v1579 = vpack.c.b16 %v1467, %v1459
    %v1580 = vpack.c.b16 %v1468, %v1460
    %v1581 = vpack.c.b16 %v1477, %v1469
    %v1582 = vpack.c.b16 %v1478, %v1470
    %v1583 = vpack.c.b16 %v1479, %v1471
    %v1584 = vpack.c.b16 %v1480, %v1472
    %v1585 = vpack.c.b16 %v1481, %v1473
    %v1586 = vpack.c.b16 %v1482, %v1474
    %v1587 = vpack.c.b16 %v1483, %v1475
    %v1588 = vpack.c.b16 %v1484, %v1476
    %v1589 = vpack.c.b16 %v1493, %v1485
    %v1590 = vpack.c.b16 %v1494, %v1486
    %v1591 = vpack.c.b16 %v1495, %v1487
    %v1592 = vpack.c.b16 %v1496, %v1488
    %v1593 = vpack.c.b16 %v1497, %v1489
    %v1594 = vpack.c.b16 %v1498, %v1490
    %v1595 = vpack.c.b16 %v1499, %v1491
    %v1596 = vpack.c.b16 %v1500, %v1492
    %v1597 = vpack.c.b16 %v1509, %v1501
    %v1598 = vpack.c.b16 %v1510, %v1502
    %v1599 = vpack.c.b16 %v1511, %v1503
    %v1600 = vpack.c.b16 %v1512, %v1504
    %v1601 = vpack.c.b16 %v1513, %v1505
    %v1602 = vpack.c.b16 %v1514, %v1506
    %v1603 = vpack.c.b16 %v1515, %v1507
    %v1604 = vpack.c.b16 %v1516, %v1508
    %v1605 = vpack.c.b16 %v1525, %v1517
    %v1606 = vpack.c.b16 %v1526, %v1518
    %v1607 = vpack.c.b16 %v1527, %v1519
    %v1608 = vpack.c.b16 %v1528, %v1520
    %v1609 = vpack.c.b16 %v1529, %v1521
    %v1610 = vpack.c.b16 %v1530, %v1522
    %v1611 = vpack.c.b16 %v1531, %v1523
    %v1612 = vpack.c.b16 %v1532, %v1524
    %v1613 = vpack.c.b16 %v1541, %v1533
    %v1614 = vpack.c.b16 %v1542, %v1534
    %v1615 = vpack.c.b16 %v1543, %v1535
    %v1616 = vpack.c.b16 %v1544, %v1536
    %v1617 = vpack.c.b16 %v1545, %v1537
    %v1618 = vpack.c.b16 %v1546, %v1538
    %v1619 = vpack.c.b16 %v1547, %v1539
    %v1620 = vpack.c.b16 %v1548, %v1540
    %v1621 = vpack.c.b16 %v1557, %v1549
    %v1622 = vpack.c.b16 %v1558, %v1550
    %v1623 = vpack.c.b16 %v1559, %v1551
    %v1624 = vpack.c.b16 %v1560, %v1552
    %v1625 = vpack.c.b16 %v1561, %v1553
    %v1626 = vpack.c.b16 %v1562, %v1554
    %v1627 = vpack.c.b16 %v1563, %v1555
    %v1628 = vpack.c.b16 %v1564, %v1556
    %1693 = vmatprep.subr.bf16.mxu0 %v1566
    %1694 = vmatpush1.bf16.msra.mxu0 %v1565
    %1695 = vmatprep.subr.bf16.mxu0 %v1574
    %1696 = vmatpush1.bf16.msra.mxu0 %v1573
    %1697 = vmatprep.subr.bf16.mxu0 %v1582
    %1698 = vmatpush1.bf16.msra.mxu0 %v1581
    %1699 = vmatprep.subr.bf16.mxu0 %v1590
    %1700 = vmatpush1.bf16.msra.mxu0 %v1589
    %1701 = vmatprep.subr.bf16.mxu0 %v1598
    %1702 = vmatpush1.bf16.msra.mxu0 %v1597
    %1703 = vmatprep.subr.bf16.mxu0 %v1606
    %1704 = vmatpush1.bf16.msra.mxu0 %v1605
    %1705 = vmatprep.subr.bf16.mxu0 %v1614
    %1706 = vmatpush1.bf16.msra.mxu0 %v1613
    %1707 = vmatprep.subr.bf16.mxu0 %v1622
    %1708 = vmatpush1.bf16.msra.mxu0 %v1621
    %1709 = vmatprep.subr.bf16.mxu0 0
    %1710 = vmatpush1.bf16.msra.mxu0 0
    %1711 = vmatprep.subr.bf16.mxu0 0
    %1712 = vmatpush1.bf16.msra.mxu0 0
    %1713 = vmatprep.subr.bf16.mxu0 0
    %1714 = vmatpush1.bf16.msra.mxu0 0
    %1715 = vmatprep.subr.bf16.mxu0 0
    %1716 = vmatpush1.bf16.msra.mxu0 0
    %1717 = vmatprep.subr.bf16.mxu0 0
    %1718 = vmatpush1.bf16.msra.mxu0 0
    %1719 = vmatprep.subr.bf16.mxu0 0
    %1720 = vmatpush1.bf16.msra.mxu0 0
    %1721 = vmatprep.subr.bf16.mxu0 0
    %1722 = vmatpush1.bf16.msra.mxu0 0
    %1723 = vmatprep.subr.bf16.mxu0 0
    %1724 = vmatpush1.bf16.msra.mxu0 0
    %1725 = vmatprep.mubr.bf16.mxu0 0
    %1726 = vmatmul.mubr.bf16.gmra.mrb[0].mxu0 %v1328
    %v1727 = vpop.f32.mrb[0].mxu0
    %v1728 = vadd.f32 %v1336, %v1727
    %v1729 = vpop.f32.mrb[0].mxu0
    %v1730 = vadd.f32 %v1340, %v1729
    %v1731 = vpop.f32.mrb[0].mxu0
    %v1732 = vadd.f32 %v1336, %v1731
    %v1733 = vpop.f32.mrb[0].mxu0
    %v1734 = vadd.f32 %v1340, %v1733
    %1735 = vmatprep.mubr.bf16.mxu0 0
    %1736 = vmatmul.mubr.bf16.gmra.mrb[0].mxu0 %v1329
    %v1737 = vpop.f32.mrb[0].mxu0
    %v1738 = vadd.f32 %v1336, %v1737
    %v1739 = vpop.f32.mrb[0].mxu0
    %v1740 = vadd.f32 %v1340, %v1739
    %v1741 = vpop.f32.mrb[0].mxu0
    %v1742 = vadd.f32 %v1336, %v1741
    %v1743 = vpop.f32.mrb[0].mxu0
    %v1744 = vadd.f32 %v1340, %v1743
    %1745 = vmatprep.mubr.bf16.mxu0 0
    %1746 = vmatmul.mubr.bf16.gmra.mrb[0].mxu0 %v1330
    %v1747 = vpop.f32.mrb[0].mxu0
    %v1748 = vadd.f32 %v1336, %v1747
    %v1749 = vpop.f32.mrb[0].mxu0
    %v1750 = vadd.f32 %v1340, %v1749
    %v1751 = vpop.f32.mrb[0].mxu0
    %v1752 = vadd.f32 %v1336, %v1751
    %v1753 = vpop.f32.mrb[0].mxu0
    %v1754 = vadd.f32 %v1340, %v1753
    %1755 = vmatprep.mubr.bf16.mxu0 0
    %1756 = vmatmul.mubr.bf16.gmra.mrb[0].mxu0 %v1331
    %v1757 = vpop.f32.mrb[0].mxu0
    %v1758 = vadd.f32 %v1336, %v1757
    %v1759 = vpop.f32.mrb[0].mxu0
    %v1760 = vadd.f32 %v1340, %v1759
    %v1761 = vpop.f32.mrb[0].mxu0
    %v1762 = vadd.f32 %v1336, %v1761
    %v1763 = vpop.f32.mrb[0].mxu0
    %v1764 = vadd.f32 %v1340, %v1763
    %1765 = vdwg.mxu0
    %1766 = vmatprep.subr.bf16.mxu0 %v1568
    %1767 = vmatpush1.bf16.msra.mxu0 %v1567
    %1768 = vmatprep.subr.bf16.mxu0 %v1576
    %1769 = vmatpush1.bf16.msra.mxu0 %v1575
    %1770 = vmatprep.subr.bf16.mxu0 %v1584
    %1771 = vmatpush1.bf16.msra.mxu0 %v1583
    %1772 = vmatprep.subr.bf16.mxu0 %v1592
    %1773 = vmatpush1.bf16.msra.mxu0 %v1591
    %1774 = vmatprep.subr.bf16.mxu0 %v1600
    %1775 = vmatpush1.bf16.msra.mxu0 %v1599
    %1776 = vmatprep.subr.bf16.mxu0 %v1608
    %1777 = vmatpush1.bf16.msra.mxu0 %v1607
    %1778 = vmatprep.subr.bf16.mxu0 %v1616
    %1779 = vmatpush1.bf16.msra.mxu0 %v1615
    %1780 = vmatprep.subr.bf16.mxu0 %v1624
    %1781 = vmatpush1.bf16.msra.mxu0 %v1623
    %1782 = vmatprep.subr.bf16.mxu0 0
    %1783 = vmatpush1.bf16.msra.mxu0 0
    %1784 = vmatprep.subr.bf16.mxu0 0
    %1785 = vmatpush1.bf16.msra.mxu0 0
    %1786 = vmatprep.subr.bf16.mxu0 0
    %1787 = vmatpush1.bf16.msra.mxu0 0
    %1788 = vmatprep.subr.bf16.mxu0 0
    %1789 = vmatpush1.bf16.msra.mxu0 0
    %1790 = vmatprep.subr.bf16.mxu0 0
    %1791 = vmatpush1.bf16.msra.mxu0 0
    %1792 = vmatprep.subr.bf16.mxu0 0
    %1793 = vmatpush1.bf16.msra.mxu0 0
    %1794 = vmatprep.subr.bf16.mxu0 0
    %1795 = vmatpush1.bf16.msra.mxu0 0
    %1796 = vmatprep.subr.bf16.mxu0 0
    %1797 = vmatpush1.bf16.msra.mxu0 0
    %1798 = vmatprep.mubr.bf16.mxu0 0
    %1799 = vmatmul.mubr.bf16.gmra.mrb[0].mxu0 %v1328
    %v1800 = vpop.f32.mrb[0].mxu0
    %v1801 = vadd.f32 %v1344, %v1800
    %v1802 = vpop.f32.mrb[0].mxu0
    %v1803 = vadd.f32 %v1348, %v1802
    %v1804 = vpop.f32.mrb[0].mxu0
    %v1805 = vadd.f32 %v1344, %v1804
    %v1806 = vpop.f32.mrb[0].mxu0
    %v1807 = vadd.f32 %v1348, %v1806
    %1808 = vmatprep.mubr.bf16.mxu0 0
    %1809 = vmatmul.mubr.bf16.gmra.mrb[0].mxu0 %v1329
    %v1810 = vpop.f32.mrb[0].mxu0
    %v1811 = vadd.f32 %v1344, %v1810
    %v1812 = vpop.f32.mrb[0].mxu0
    %v1813 = vadd.f32 %v1348, %v1812
    %v1814 = vpop.f32.mrb[0].mxu0
    %v1815 = vadd.f32 %v1344, %v1814
    %v1816 = vpop.f32.mrb[0].mxu0
    %v1817 = vadd.f32 %v1348, %v1816
    %1818 = vmatprep.mubr.bf16.mxu0 0
    %1819 = vmatmul.mubr.bf16.gmra.mrb[0].mxu0 %v1330
    %v1820 = vpop.f32.mrb[0].mxu0
    %v1821 = vadd.f32 %v1344, %v1820
    %v1822 = vpop.f32.mrb[0].mxu0
    %v1823 = vadd.f32 %v1348, %v1822
    %v1824 = vpop.f32.mrb[0].mxu0
    %v1825 = vadd.f32 %v1344, %v1824
    %v1826 = vpop.f32.mrb[0].mxu0
    %v1827 = vadd.f32 %v1348, %v1826
    %1828 = vmatprep.mubr.bf16.mxu0 0
    %1829 = vmatmul.mubr.bf16.gmra.mrb[0].mxu0 %v1331
    %v1830 = vpop.f32.mrb[0].mxu0
    %v1831 = vadd.f32 %v1344, %v1830
    %v1832 = vpop.f32.mrb[0].mxu0
    %v1833 = vadd.f32 %v1348, %v1832
    %v1834 = vpop.f32.mrb[0].mxu0
    %v1835 = vadd.f32 %v1344, %v1834
    %v1836 = vpop.f32.mrb[0].mxu0
    %v1837 = vadd.f32 %v1348, %v1836
    %1838 = vdwg.mxu0
    %1839 = vmatprep.subr.bf16.mxu0 %v1570
    %1840 = vmatpush1.bf16.msra.mxu0 %v1569
    %1841 = vmatprep.subr.bf16.mxu0 %v1578
    %1842 = vmatpush1.bf16.msra.mxu0 %v1577
    %1843 = vmatprep.subr.bf16.mxu0 %v1586
    %1844 = vmatpush1.bf16.msra.mxu0 %v1585
    %1845 = vmatprep.subr.bf16.mxu0 %v1594
    %1846 = vmatpush1.bf16.msra.mxu0 %v1593
    %1847 = vmatprep.subr.bf16.mxu0 %v1602
    %1848 = vmatpush1.bf16.msra.mxu0 %v1601
    %1849 = vmatprep.subr.bf16.mxu0 %v1610
    %1850 = vmatpush1.bf16.msra.mxu0 %v1609
    %1851 = vmatprep.subr.bf16.mxu0 %v1618
    %1852 = vmatpush1.bf16.msra.mxu0 %v1617
    %1853 = vmatprep.subr.bf16.mxu0 %v1626
    %1854 = vmatpush1.bf16.msra.mxu0 %v1625
    %1855 = vmatprep.subr.bf16.mxu0 0
    %1856 = vmatpush1.bf16.msra.mxu0 0
    %1857 = vmatprep.subr.bf16.mxu0 0
    %1858 = vmatpush1.bf16.msra.mxu0 0
    %1859 = vmatprep.subr.bf16.mxu0 0
    %1860 = vmatpush1.bf16.msra.mxu0 0
    %1861 = vmatprep.subr.bf16.mxu0 0
    %1862 = vmatpush1.bf16.msra.mxu0 0
    %1863 = vmatprep.subr.bf16.mxu0 0
    %1864 = vmatpush1.bf16.msra.mxu0 0
    %1865 = vmatprep.subr.bf16.mxu0 0
    %1866 = vmatpush1.bf16.msra.mxu0 0
    %1867 = vmatprep.subr.bf16.mxu0 0
    %1868 = vmatpush1.bf16.msra.mxu0 0
    %1869 = vmatprep.subr.bf16.mxu0 0
    %1870 = vmatpush1.bf16.msra.mxu0 0
    %1871 = vmatprep.mubr.bf16.mxu0 0
    %1872 = vmatmul.mubr.bf16.gmra.mrb[0].mxu0 %v1328
    %v1873 = vpop.f32.mrb[0].mxu0
    %v1874 = vadd.f32 %v1352, %v1873
    %v1875 = vpop.f32.mrb[0].mxu0
    %v1876 = vadd.f32 %v1356, %v1875
    %v1877 = vpop.f32.mrb[0].mxu0
    %v1878 = vadd.f32 %v1352, %v1877
    %v1879 = vpop.f32.mrb[0].mxu0
    %v1880 = vadd.f32 %v1356, %v1879
    %1881 = vmatprep.mubr.bf16.mxu0 0
    %1882 = vmatmul.mubr.bf16.gmra.mrb[0].mxu0 %v1329
    %v1883 = vpop.f32.mrb[0].mxu0
    %v1884 = vadd.f32 %v1352, %v1883
    %v1885 = vpop.f32.mrb[0].mxu0
    %v1886 = vadd.f32 %v1356, %v1885
    %v1887 = vpop.f32.mrb[0].mxu0
    %v1888 = vadd.f32 %v1352, %v1887
    %v1889 = vpop.f32.mrb[0].mxu0
    %v1890 = vadd.f32 %v1356, %v1889
    %1891 = vmatprep.mubr.bf16.mxu0 0
    %1892 = vmatmul.mubr.bf16.gmra.mrb[0].mxu0 %v1330
    %v1893 = vpop.f32.mrb[0].mxu0
    %v1894 = vadd.f32 %v1352, %v1893
    %v1895 = vpop.f32.mrb[0].mxu0
    %v1896 = vadd.f32 %v1356, %v1895
    %v1897 = vpop.f32.mrb[0].mxu0
    %v1898 = vadd.f32 %v1352, %v1897
    %v1899 = vpop.f32.mrb[0].mxu0
    %v1900 = vadd.f32 %v1356, %v1899
    %1901 = vmatprep.mubr.bf16.mxu0 0
    %1902 = vmatmul.mubr.bf16.gmra.mrb[0].mxu0 %v1331
    %v1903 = vpop.f32.mrb[0].mxu0
    %v1904 = vadd.f32 %v1352, %v1903
    %v1905 = vpop.f32.mrb[0].mxu0
    %v1906 = vadd.f32 %v1356, %v1905
    %v1907 = vpop.f32.mrb[0].mxu0
    %v1908 = vadd.f32 %v1352, %v1907
    %v1909 = vpop.f32.mrb[0].mxu0
    %v1910 = vadd.f32 %v1356, %v1909
    %1911 = vdwg.mxu0
    %1912 = vmatprep.subr.bf16.mxu0 %v1572
    %1913 = vmatpush1.bf16.msra.mxu0 %v1571
    %1914 = vmatprep.subr.bf16.mxu0 %v1580
    %1915 = vmatpush1.bf16.msra.mxu0 %v1579
    %1916 = vmatprep.subr.bf16.mxu0 %v1588
    %1917 = vmatpush1.bf16.msra.mxu0 %v1587
    %1918 = vmatprep.subr.bf16.mxu0 %v1596
    %1919 = vmatpush1.bf16.msra.mxu0 %v1595
    %1920 = vmatprep.subr.bf16.mxu0 %v1604
    %1921 = vmatpush1.bf16.msra.mxu0 %v1603
    %1922 = vmatprep.subr.bf16.mxu0 %v1612
    %1923 = vmatpush1.bf16.msra.mxu0 %v1611
    %1924 = vmatprep.subr.bf16.mxu0 %v1620
    %1925 = vmatpush1.bf16.msra.mxu0 %v1619
    %1926 = vmatprep.subr.bf16.mxu0 %v1628
    %1927 = vmatpush1.bf16.msra.mxu0 %v1627
    %1928 = vmatprep.subr.bf16.mxu0 0
    %1929 = vmatpush1.bf16.msra.mxu0 0
    %1930 = vmatprep.subr.bf16.mxu0 0
    %1931 = vmatpush1.bf16.msra.mxu0 0
    %1932 = vmatprep.subr.bf16.mxu0 0
    %1933 = vmatpush1.bf16.msra.mxu0 0
    %1934 = vmatprep.subr.bf16.mxu0 0
    %1935 = vmatpush1.bf16.msra.mxu0 0
    %1936 = vmatprep.subr.bf16.mxu0 0
    %1937 = vmatpush1.bf16.msra.mxu0 0
    %1938 = vmatprep.subr.bf16.mxu0 0
    %1939 = vmatpush1.bf16.msra.mxu0 0
    %1940 = vmatprep.subr.bf16.mxu0 0
    %1941 = vmatpush1.bf16.msra.mxu0 0
    %1942 = vmatprep.subr.bf16.mxu0 0
    %1943 = vmatpush1.bf16.msra.mxu0 0
    %1944 = vmatprep.mubr.bf16.mxu0 0
    %1945 = vmatmul.mubr.bf16.gmra.mrb[0].mxu0 %v1328
    %v1946 = vpop.f32.mrb[0].mxu0
    %v1947 = vadd.f32 %v1360, %v1946
    %v1948 = vpop.f32.mrb[0].mxu0
    %v1949 = vadd.f32 %v1364, %v1948
    %v1950 = vpop.f32.mrb[0].mxu0
    %v1951 = vadd.f32 %v1360, %v1950
    %v1952 = vpop.f32.mrb[0].mxu0
    %v1953 = vadd.f32 %v1364, %v1952
    %1954 = vmatprep.mubr.bf16.mxu0 0
    %1955 = vmatmul.mubr.bf16.gmra.mrb[0].mxu0 %v1329
    %v1956 = vpop.f32.mrb[0].mxu0
    %v1957 = vadd.f32 %v1360, %v1956
    %v1958 = vpop.f32.mrb[0].mxu0
    %v1959 = vadd.f32 %v1364, %v1958
    %v1960 = vpop.f32.mrb[0].mxu0
    %v1961 = vadd.f32 %v1360, %v1960
    %v1962 = vpop.f32.mrb[0].mxu0
    %v1963 = vadd.f32 %v1364, %v1962
    %1964 = vmatprep.mubr.bf16.mxu0 0
    %1965 = vmatmul.mubr.bf16.gmra.mrb[0].mxu0 %v1330
    %v1966 = vpop.f32.mrb[0].mxu0
    %v1967 = vadd.f32 %v1360, %v1966
    %v1968 = vpop.f32.mrb[0].mxu0
    %v1969 = vadd.f32 %v1364, %v1968
    %v1970 = vpop.f32.mrb[0].mxu0
    %v1971 = vadd.f32 %v1360, %v1970
    %v1972 = vpop.f32.mrb[0].mxu0
    %v1973 = vadd.f32 %v1364, %v1972
    %1974 = vmatprep.mubr.bf16.mxu0 0
    %1975 = vmatmul.mubr.bf16.gmra.mrb[0].mxu0 %v1331
    %v1976 = vpop.f32.mrb[0].mxu0
    %v1977 = vadd.f32 %v1360, %v1976
    %v1978 = vpop.f32.mrb[0].mxu0
    %v1979 = vadd.f32 %v1364, %v1978
    %v1980 = vpop.f32.mrb[0].mxu0
    %v1981 = vadd.f32 %v1360, %v1980
    %v1982 = vpop.f32.mrb[0].mxu0
    %v1983 = vadd.f32 %v1364, %v1982
    %1984 = vdwg.mxu0
    %v1985 = vmax.f32 %v1728, 0.0
    %v1986 = vmax.f32 %v1730, 0.0
    %v1987 = vmax.f32 %v1801, 0.0
    %v1988 = vmax.f32 %v1803, 0.0
    %v1989 = vmax.f32 %v1874, 0.0
    %v1990 = vmax.f32 %v1876, 0.0
    %v1991 = vmax.f32 %v1947, 0.0
    %v1992 = vmax.f32 %v1949, 0.0
    %v1993 = vmax.f32 %v1732, 0.0
    %v1994 = vmax.f32 %v1734, 0.0
    %v1995 = vmax.f32 %v1805, 0.0
    %v1996 = vmax.f32 %v1807, 0.0
    %v1997 = vmax.f32 %v1878, 0.0
    %v1998 = vmax.f32 %v1880, 0.0
    %v1999 = vmax.f32 %v1951, 0.0
    %v2000 = vmax.f32 %v1953, 0.0
    %v2001 = vmax.f32 %v1738, 0.0
    %v2002 = vmax.f32 %v1740, 0.0
    %v2003 = vmax.f32 %v1811, 0.0
    %v2004 = vmax.f32 %v1813, 0.0
    %v2005 = vmax.f32 %v1884, 0.0
    %v2006 = vmax.f32 %v1886, 0.0
    %v2007 = vmax.f32 %v1957, 0.0
    %v2008 = vmax.f32 %v1959, 0.0
    %v2009 = vmax.f32 %v1742, 0.0
    %v2010 = vmax.f32 %v1744, 0.0
    %v2011 = vmax.f32 %v1815, 0.0
    %v2012 = vmax.f32 %v1817, 0.0
    %v2013 = vmax.f32 %v1888, 0.0
    %v2014 = vmax.f32 %v1890, 0.0
    %v2015 = vmax.f32 %v1961, 0.0
    %v2016 = vmax.f32 %v1963, 0.0
    %v2017 = vmax.f32 %v1748, 0.0
    %v2018 = vmax.f32 %v1750, 0.0
    %v2019 = vmax.f32 %v1821, 0.0
    %v2020 = vmax.f32 %v1823, 0.0
    %v2021 = vmax.f32 %v1894, 0.0
    %v2022 = vmax.f32 %v1896, 0.0
    %v2023 = vmax.f32 %v1967, 0.0
    %v2024 = vmax.f32 %v1969, 0.0
    %v2025 = vmax.f32 %v1752, 0.0
    %v2026 = vmax.f32 %v1754, 0.0
    %v2027 = vmax.f32 %v1825, 0.0
    %v2028 = vmax.f32 %v1827, 0.0
    %v2029 = vmax.f32 %v1898, 0.0
    %v2030 = vmax.f32 %v1900, 0.0
    %v2031 = vmax.f32 %v1971, 0.0
    %v2032 = vmax.f32 %v1973, 0.0
    %v2033 = vmax.f32 %v1758, 0.0
    %v2034 = vmax.f32 %v1760, 0.0
    %v2035 = vmax.f32 %v1831, 0.0
    %v2036 = vmax.f32 %v1833, 0.0
    %v2037 = vmax.f32 %v1904, 0.0
    %v2038 = vmax.f32 %v1906, 0.0
    %v2039 = vmax.f32 %v1977, 0.0
    %v2040 = vmax.f32 %v1979, 0.0
    %v2041 = vmax.f32 %v1762, 0.0
    %v2042 = vmax.f32 %v1764, 0.0
    %v2043 = vmax.f32 %v1835, 0.0
    %v2044 = vmax.f32 %v1837, 0.0
    %v2045 = vmax.f32 %v1908, 0.0
    %v2046 = vmax.f32 %v1910, 0.0
    %v2047 = vmax.f32 %v1981, 0.0
    %v2048 = vmax.f32 %v1983, 0.0
    %v2049 = vmax.f32 %v1985, %v1993
    %v2050 = vmax.f32 %v2049, %v2001
    %v2051 = vmax.f32 %v2050, %v2009
    %v2052 = vmax.f32 %v2051, %v2017
    %v2053 = vmax.f32 %v2052, %v2025
    %v2054 = vmax.f32 %v2053, %v2033
    %v2055 = vmax.f32 %v2054, %v2041
    %v2056 = vrot.slane %v2055, 4
    %v2057 = vmax.f32 %v2055, %v2056
    %v2058 = vrot.slane %v2057, 2
    %v2059 = vmax.f32 %v2057, %v2058
    %v2060 = vrot.slane %v2059, 1
    %v2061 = vmax.f32 %v2059, %v2060
    %v2062 = vmax.f32 %v1986, %v1994
    %v2063 = vmax.f32 %v2062, %v2002
    %v2064 = vmax.f32 %v2063, %v2010
    %v2065 = vmax.f32 %v2064, %v2018
    %v2066 = vmax.f32 %v2065, %v2026
    %v2067 = vmax.f32 %v2066, %v2034
    %v2068 = vmax.f32 %v2067, %v2042
    %v2069 = vrot.slane %v2068, 4
    %v2070 = vmax.f32 %v2068, %v2069
    %v2071 = vrot.slane %v2070, 2
    %v2072 = vmax.f32 %v2070, %v2071
    %v2073 = vrot.slane %v2072, 1
    %v2074 = vmax.f32 %v2072, %v2073
    %v2075 = vmax.f32 %v1987, %v1995
    %v2076 = vmax.f32 %v2075, %v2003
    %v2077 = vmax.f32 %v2076, %v2011
    %v2078 = vmax.f32 %v2077, %v2019
    %v2079 = vmax.f32 %v2078, %v2027
    %v2080 = vmax.f32 %v2079, %v2035
    %v2081 = vmax.f32 %v2080, %v2043
    %v2082 = vrot.slane %v2081, 4
    %v2083 = vmax.f32 %v2081, %v2082
    %v2084 = vrot.slane %v2083, 2
    %v2085 = vmax.f32 %v2083, %v2084
    %v2086 = vrot.slane %v2085, 1
    %v2087 = vmax.f32 %v2085, %v2086
    %v2088 = vmax.f32 %v1988, %v1996
    %v2089 = vmax.f32 %v2088, %v2004
    %v2090 = vmax.f32 %v2089, %v2012
    %v2091 = vmax.f32 %v2090, %v2020
    %v2092 = vmax.f32 %v2091, %v2028
    %v2093 = vmax.f32 %v2092, %v2036
    %v2094 = vmax.f32 %v2093, %v2044
    %v2095 = vrot.slane %v2094, 4
    %v2096 = vmax.f32 %v2094, %v2095
    %v2097 = vrot.slane %v2096, 2
    %v2098 = vmax.f32 %v2096, %v2097
    %v2099 = vrot.slane %v2098, 1
    %v2100 = vmax.f32 %v2098, %v2099
    %v2101 = vmax.f32 %v1989, %v1997
    %v2102 = vmax.f32 %v2101, %v2005
    %v2103 = vmax.f32 %v2102, %v2013
    %v2104 = vmax.f32 %v2103, %v2021
    %v2105 = vmax.f32 %v2104, %v2029
    %v2106 = vmax.f32 %v2105, %v2037
    %v2107 = vmax.f32 %v2106, %v2045
    %v2108 = vrot.slane %v2107, 4
    %v2109 = vmax.f32 %v2107, %v2108
    %v2110 = vrot.slane %v2109, 2
    %v2111 = vmax.f32 %v2109, %v2110
    %v2112 = vrot.slane %v2111, 1
    %v2113 = vmax.f32 %v2111, %v2112
    %v2114 = vmax.f32 %v1990, %v1998
    %v2115 = vmax.f32 %v2114, %v2006
    %v2116 = vmax.f32 %v2115, %v2014
    %v2117 = vmax.f32 %v2116, %v2022
    %v2118 = vmax.f32 %v2117, %v2030
    %v2119 = vmax.f32 %v2118, %v2038
    %v2120 = vmax.f32 %v2119, %v2046
    %v2121 = vrot.slane %v2120, 4
    %v2122 = vmax.f32 %v2120, %v2121
    %v2123 = vrot.slane %v2122, 2
    %v2124 = vmax.f32 %v2122, %v2123
    %v2125 = vrot.slane %v2124, 1
    %v2126 = vmax.f32 %v2124, %v2125
    %v2127 = vmax.f32 %v1991, %v1999
    %v2128 = vmax.f32 %v2127, %v2007
    %v2129 = vmax.f32 %v2128, %v2015
    %v2130 = vmax.f32 %v2129, %v2023
    %v2131 = vmax.f32 %v2130, %v2031
    %v2132 = vmax.f32 %v2131, %v2039
    %v2133 = vmax.f32 %v2132, %v2047
    %v2134 = vrot.slane %v2133, 4
    %v2135 = vmax.f32 %v2133, %v2134
    %v2136 = vrot.slane %v2135, 2
    %v2137 = vmax.f32 %v2135, %v2136
    %v2138 = vrot.slane %v2137, 1
    %v2139 = vmax.f32 %v2137, %v2138
    %v2140 = vmax.f32 %v1992, %v2000
    %v2141 = vmax.f32 %v2140, %v2008
    %v2142 = vmax.f32 %v2141, %v2016
    %v2143 = vmax.f32 %v2142, %v2024
    %v2144 = vmax.f32 %v2143, %v2032
    %v2145 = vmax.f32 %v2144, %v2040
    %v2146 = vmax.f32 %v2145, %v2048
    %v2147 = vrot.slane %v2146, 4
    %v2148 = vmax.f32 %v2146, %v2147
    %v2149 = vrot.slane %v2148, 2
    %v2150 = vmax.f32 %v2148, %v2149
    %v2151 = vrot.slane %v2150, 1
    %v2152 = vmax.f32 %v2150, %v2151
    %v2153 = vpack.c.bf16 %v1237, %v1236
    %v2154 = vpack.c.bf16 %v1239, %v1238
    %v2155 = vpack.c.bf16 %v1241, %v1240
    %v2156 = vpack.c.bf16 %v1243, %v1242
    %2157 = vmatprep.subr.bf16.mxu0 %v1566
    %2158 = vmatpush1.bf16.msra.mxu0 %v1565
    %2159 = vmatprep.subr.bf16.mxu0 %v1574
    %2160 = vmatpush1.bf16.msra.mxu0 %v1573
    %2161 = vmatprep.subr.bf16.mxu0 %v1582
    %2162 = vmatpush1.bf16.msra.mxu0 %v1581
    %2163 = vmatprep.subr.bf16.mxu0 %v1590
    %2164 = vmatpush1.bf16.msra.mxu0 %v1589
    %2165 = vmatprep.subr.bf16.mxu0 %v1598
    %2166 = vmatpush1.bf16.msra.mxu0 %v1597
    %2167 = vmatprep.subr.bf16.mxu0 %v1606
    %2168 = vmatpush1.bf16.msra.mxu0 %v1605
    %2169 = vmatprep.subr.bf16.mxu0 %v1614
    %2170 = vmatpush1.bf16.msra.mxu0 %v1613
    %2171 = vmatprep.subr.bf16.mxu0 %v1622
    %2172 = vmatpush1.bf16.msra.mxu0 %v1621
    %2173 = vmatprep.subr.bf16.mxu0 0
    %2174 = vmatpush1.bf16.msra.mxu0 0
    %2175 = vmatprep.subr.bf16.mxu0 0
    %2176 = vmatpush1.bf16.msra.mxu0 0
    %2177 = vmatprep.subr.bf16.mxu0 0
    %2178 = vmatpush1.bf16.msra.mxu0 0
    %2179 = vmatprep.subr.bf16.mxu0 0
    %2180 = vmatpush1.bf16.msra.mxu0 0
    %2181 = vmatprep.subr.bf16.mxu0 0
    %2182 = vmatpush1.bf16.msra.mxu0 0
    %2183 = vmatprep.subr.bf16.mxu0 0
    %2184 = vmatpush1.bf16.msra.mxu0 0
    %2185 = vmatprep.subr.bf16.mxu0 0
    %2186 = vmatpush1.bf16.msra.mxu0 0
    %2187 = vmatprep.subr.bf16.mxu0 0
    %2188 = vmatpush1.bf16.msra.mxu0 0
    %2189 = vmatprep.mubr.bf16.mxu0 0
    %2190 = vmatmul.mubr.bf16.gmra.mrb[0].mxu0 %v2153
    %v2191 = vpop.f32.mrb[0].mxu0
    %v2192 = vadd.f32 %v1336, %v2191
    %v2193 = vpop.f32.mrb[0].mxu0
    %v2194 = vadd.f32 %v1340, %v2193
    %v2195 = vpop.f32.mrb[0].mxu0
    %v2196 = vadd.f32 %v1336, %v2195
    %v2197 = vpop.f32.mrb[0].mxu0
    %v2198 = vadd.f32 %v1340, %v2197
    %2199 = vmatprep.mubr.bf16.mxu0 0
    %2200 = vmatmul.mubr.bf16.gmra.mrb[0].mxu0 %v2154
    %v2201 = vpop.f32.mrb[0].mxu0
    %v2202 = vadd.f32 %v1336, %v2201
    %v2203 = vpop.f32.mrb[0].mxu0
    %v2204 = vadd.f32 %v1340, %v2203
    %v2205 = vpop.f32.mrb[0].mxu0
    %v2206 = vadd.f32 %v1336, %v2205
    %v2207 = vpop.f32.mrb[0].mxu0
    %v2208 = vadd.f32 %v1340, %v2207
    %2209 = vmatprep.mubr.bf16.mxu0 0
    %2210 = vmatmul.mubr.bf16.gmra.mrb[0].mxu0 %v2155
    %v2211 = vpop.f32.mrb[0].mxu0
    %v2212 = vadd.f32 %v1336, %v2211
    %v2213 = vpop.f32.mrb[0].mxu0
    %v2214 = vadd.f32 %v1340, %v2213
    %v2215 = vpop.f32.mrb[0].mxu0
    %v2216 = vadd.f32 %v1336, %v2215
    %v2217 = vpop.f32.mrb[0].mxu0
    %v2218 = vadd.f32 %v1340, %v2217
    %2219 = vmatprep.mubr.bf16.mxu0 0
    %2220 = vmatmul.mubr.bf16.gmra.mrb[0].mxu0 %v2156
    %v2221 = vpop.f32.mrb[0].mxu0
    %v2222 = vadd.f32 %v1336, %v2221
    %v2223 = vpop.f32.mrb[0].mxu0
    %v2224 = vadd.f32 %v1340, %v2223
    %v2225 = vpop.f32.mrb[0].mxu0
    %v2226 = vadd.f32 %v1336, %v2225
    %v2227 = vpop.f32.mrb[0].mxu0
    %v2228 = vadd.f32 %v1340, %v2227
    %2229 = vdwg.mxu0
    %2230 = vmatprep.subr.bf16.mxu0 %v1568
    %2231 = vmatpush1.bf16.msra.mxu0 %v1567
    %2232 = vmatprep.subr.bf16.mxu0 %v1576
    %2233 = vmatpush1.bf16.msra.mxu0 %v1575
    %2234 = vmatprep.subr.bf16.mxu0 %v1584
    %2235 = vmatpush1.bf16.msra.mxu0 %v1583
    %2236 = vmatprep.subr.bf16.mxu0 %v1592
    %2237 = vmatpush1.bf16.msra.mxu0 %v1591
    %2238 = vmatprep.subr.bf16.mxu0 %v1600
    %2239 = vmatpush1.bf16.msra.mxu0 %v1599
    %2240 = vmatprep.subr.bf16.mxu0 %v1608
    %2241 = vmatpush1.bf16.msra.mxu0 %v1607
    %2242 = vmatprep.subr.bf16.mxu0 %v1616
    %2243 = vmatpush1.bf16.msra.mxu0 %v1615
    %2244 = vmatprep.subr.bf16.mxu0 %v1624
    %2245 = vmatpush1.bf16.msra.mxu0 %v1623
    %2246 = vmatprep.subr.bf16.mxu0 0
    %2247 = vmatpush1.bf16.msra.mxu0 0
    %2248 = vmatprep.subr.bf16.mxu0 0
    %2249 = vmatpush1.bf16.msra.mxu0 0
    %2250 = vmatprep.subr.bf16.mxu0 0
    %2251 = vmatpush1.bf16.msra.mxu0 0
    %2252 = vmatprep.subr.bf16.mxu0 0
    %2253 = vmatpush1.bf16.msra.mxu0 0
    %2254 = vmatprep.subr.bf16.mxu0 0
    %2255 = vmatpush1.bf16.msra.mxu0 0
    %2256 = vmatprep.subr.bf16.mxu0 0
    %2257 = vmatpush1.bf16.msra.mxu0 0
    %2258 = vmatprep.subr.bf16.mxu0 0
    %2259 = vmatpush1.bf16.msra.mxu0 0
    %2260 = vmatprep.subr.bf16.mxu0 0
    %2261 = vmatpush1.bf16.msra.mxu0 0
    %2262 = vmatprep.mubr.bf16.mxu0 0
    %2263 = vmatmul.mubr.bf16.gmra.mrb[0].mxu0 %v2153
    %v2264 = vpop.f32.mrb[0].mxu0
    %v2265 = vadd.f32 %v1344, %v2264
    %v2266 = vpop.f32.mrb[0].mxu0
    %v2267 = vadd.f32 %v1348, %v2266
    %v2268 = vpop.f32.mrb[0].mxu0
    %v2269 = vadd.f32 %v1344, %v2268
    %v2270 = vpop.f32.mrb[0].mxu0
    %v2271 = vadd.f32 %v1348, %v2270
    %2272 = vmatprep.mubr.bf16.mxu0 0
    %2273 = vmatmul.mubr.bf16.gmra.mrb[0].mxu0 %v2154
    %v2274 = vpop.f32.mrb[0].mxu0
    %v2275 = vadd.f32 %v1344, %v2274
    %v2276 = vpop.f32.mrb[0].mxu0
    %v2277 = vadd.f32 %v1348, %v2276
    %v2278 = vpop.f32.mrb[0].mxu0
    %v2279 = vadd.f32 %v1344, %v2278
    %v2280 = vpop.f32.mrb[0].mxu0
    %v2281 = vadd.f32 %v1348, %v2280
    %2282 = vmatprep.mubr.bf16.mxu0 0
    %2283 = vmatmul.mubr.bf16.gmra.mrb[0].mxu0 %v2155
    %v2284 = vpop.f32.mrb[0].mxu0
    %v2285 = vadd.f32 %v1344, %v2284
    %v2286 = vpop.f32.mrb[0].mxu0
    %v2287 = vadd.f32 %v1348, %v2286
    %v2288 = vpop.f32.mrb[0].mxu0
    %v2289 = vadd.f32 %v1344, %v2288
    %v2290 = vpop.f32.mrb[0].mxu0
    %v2291 = vadd.f32 %v1348, %v2290
    %2292 = vmatprep.mubr.bf16.mxu0 0
    %2293 = vmatmul.mubr.bf16.gmra.mrb[0].mxu0 %v2156
    %v2294 = vpop.f32.mrb[0].mxu0
    %v2295 = vadd.f32 %v1344, %v2294
    %v2296 = vpop.f32.mrb[0].mxu0
    %v2297 = vadd.f32 %v1348, %v2296
    %v2298 = vpop.f32.mrb[0].mxu0
    %v2299 = vadd.f32 %v1344, %v2298
    %v2300 = vpop.f32.mrb[0].mxu0
    %v2301 = vadd.f32 %v1348, %v2300
    %2302 = vdwg.mxu0
    %2303 = vmatprep.subr.bf16.mxu0 %v1570
    %2304 = vmatpush1.bf16.msra.mxu0 %v1569
    %2305 = vmatprep.subr.bf16.mxu0 %v1578
    %2306 = vmatpush1.bf16.msra.mxu0 %v1577
    %2307 = vmatprep.subr.bf16.mxu0 %v1586
    %2308 = vmatpush1.bf16.msra.mxu0 %v1585
    %2309 = vmatprep.subr.bf16.mxu0 %v1594
    %2310 = vmatpush1.bf16.msra.mxu0 %v1593
    %2311 = vmatprep.subr.bf16.mxu0 %v1602
    %2312 = vmatpush1.bf16.msra.mxu0 %v1601
    %2313 = vmatprep.subr.bf16.mxu0 %v1610
    %2314 = vmatpush1.bf16.msra.mxu0 %v1609
    %2315 = vmatprep.subr.bf16.mxu0 %v1618
    %2316 = vmatpush1.bf16.msra.mxu0 %v1617
    %2317 = vmatprep.subr.bf16.mxu0 %v1626
    %2318 = vmatpush1.bf16.msra.mxu0 %v1625
    %2319 = vmatprep.subr.bf16.mxu0 0
    %2320 = vmatpush1.bf16.msra.mxu0 0
    %2321 = vmatprep.subr.bf16.mxu0 0
    %2322 = vmatpush1.bf16.msra.mxu0 0
    %2323 = vmatprep.subr.bf16.mxu0 0
    %2324 = vmatpush1.bf16.msra.mxu0 0
    %2325 = vmatprep.subr.bf16.mxu0 0
    %2326 = vmatpush1.bf16.msra.mxu0 0
    %2327 = vmatprep.subr.bf16.mxu0 0
    %2328 = vmatpush1.bf16.msra.mxu0 0
    %2329 = vmatprep.subr.bf16.mxu0 0
    %2330 = vmatpush1.bf16.msra.mxu0 0
    %2331 = vmatprep.subr.bf16.mxu0 0
    %2332 = vmatpush1.bf16.msra.mxu0 0
    %2333 = vmatprep.subr.bf16.mxu0 0
    %2334 = vmatpush1.bf16.msra.mxu0 0
    %2335 = vmatprep.mubr.bf16.mxu0 0
    %2336 = vmatmul.mubr.bf16.gmra.mrb[0].mxu0 %v2153
    %v2337 = vpop.f32.mrb[0].mxu0
    %v2338 = vadd.f32 %v1352, %v2337
    %v2339 = vpop.f32.mrb[0].mxu0
    %v2340 = vadd.f32 %v1356, %v2339
    %v2341 = vpop.f32.mrb[0].mxu0
    %v2342 = vadd.f32 %v1352, %v2341
    %v2343 = vpop.f32.mrb[0].mxu0
    %v2344 = vadd.f32 %v1356, %v2343
    %2345 = vmatprep.mubr.bf16.mxu0 0
    %2346 = vmatmul.mubr.bf16.gmra.mrb[0].mxu0 %v2154
    %v2347 = vpop.f32.mrb[0].mxu0
    %v2348 = vadd.f32 %v1352, %v2347
    %v2349 = vpop.f32.mrb[0].mxu0
    %v2350 = vadd.f32 %v1356, %v2349
    %v2351 = vpop.f32.mrb[0].mxu0
    %v2352 = vadd.f32 %v1352, %v2351
    %v2353 = vpop.f32.mrb[0].mxu0
    %v2354 = vadd.f32 %v1356, %v2353
    %2355 = vmatprep.mubr.bf16.mxu0 0
    %2356 = vmatmul.mubr.bf16.gmra.mrb[0].mxu0 %v2155
    %v2357 = vpop.f32.mrb[0].mxu0
    %v2358 = vadd.f32 %v1352, %v2357
    %v2359 = vpop.f32.mrb[0].mxu0
    %v2360 = vadd.f32 %v1356, %v2359
    %v2361 = vpop.f32.mrb[0].mxu0
    %v2362 = vadd.f32 %v1352, %v2361
    %v2363 = vpop.f32.mrb[0].mxu0
    %v2364 = vadd.f32 %v1356, %v2363
    %2365 = vmatprep.mubr.bf16.mxu0 0
    %2366 = vmatmul.mubr.bf16.gmra.mrb[0].mxu0 %v2156
    %v2367 = vpop.f32.mrb[0].mxu0
    %v2368 = vadd.f32 %v1352, %v2367
    %v2369 = vpop.f32.mrb[0].mxu0
    %v2370 = vadd.f32 %v1356, %v2369
    %v2371 = vpop.f32.mrb[0].mxu0
    %v2372 = vadd.f32 %v1352, %v2371
    %v2373 = vpop.f32.mrb[0].mxu0
    %v2374 = vadd.f32 %v1356, %v2373
    %2375 = vdwg.mxu0
    %2376 = vmatprep.subr.bf16.mxu0 %v1572
    %2377 = vmatpush1.bf16.msra.mxu0 %v1571
    %2378 = vmatprep.subr.bf16.mxu0 %v1580
    %2379 = vmatpush1.bf16.msra.mxu0 %v1579
    %2380 = vmatprep.subr.bf16.mxu0 %v1588
    %2381 = vmatpush1.bf16.msra.mxu0 %v1587
    %2382 = vmatprep.subr.bf16.mxu0 %v1596
    %2383 = vmatpush1.bf16.msra.mxu0 %v1595
    %2384 = vmatprep.subr.bf16.mxu0 %v1604
    %2385 = vmatpush1.bf16.msra.mxu0 %v1603
    %2386 = vmatprep.subr.bf16.mxu0 %v1612
    %2387 = vmatpush1.bf16.msra.mxu0 %v1611
    %2388 = vmatprep.subr.bf16.mxu0 %v1620
    %2389 = vmatpush1.bf16.msra.mxu0 %v1619
    %2390 = vmatprep.subr.bf16.mxu0 %v1628
    %2391 = vmatpush1.bf16.msra.mxu0 %v1627
    %2392 = vmatprep.subr.bf16.mxu0 0
    %2393 = vmatpush1.bf16.msra.mxu0 0
    %2394 = vmatprep.subr.bf16.mxu0 0
    %2395 = vmatpush1.bf16.msra.mxu0 0
    %2396 = vmatprep.subr.bf16.mxu0 0
    %2397 = vmatpush1.bf16.msra.mxu0 0
    %2398 = vmatprep.subr.bf16.mxu0 0
    %2399 = vmatpush1.bf16.msra.mxu0 0
    %2400 = vmatprep.subr.bf16.mxu0 0
    %2401 = vmatpush1.bf16.msra.mxu0 0
    %2402 = vmatprep.subr.bf16.mxu0 0
    %2403 = vmatpush1.bf16.msra.mxu0 0
    %2404 = vmatprep.subr.bf16.mxu0 0
    %2405 = vmatpush1.bf16.msra.mxu0 0
    %2406 = vmatprep.subr.bf16.mxu0 0
    %2407 = vmatpush1.bf16.msra.mxu0 0
    %2408 = vmatprep.mubr.bf16.mxu0 0
    %2409 = vmatmul.mubr.bf16.gmra.mrb[0].mxu0 %v2153
    %v2410 = vpop.f32.mrb[0].mxu0
    %v2411 = vadd.f32 %v1360, %v2410
    %v2412 = vpop.f32.mrb[0].mxu0
    %v2413 = vadd.f32 %v1364, %v2412
    %v2414 = vpop.f32.mrb[0].mxu0
    %v2415 = vadd.f32 %v1360, %v2414
    %v2416 = vpop.f32.mrb[0].mxu0
    %v2417 = vadd.f32 %v1364, %v2416
    %2418 = vmatprep.mubr.bf16.mxu0 0
    %2419 = vmatmul.mubr.bf16.gmra.mrb[0].mxu0 %v2154
    %v2420 = vpop.f32.mrb[0].mxu0
    %v2421 = vadd.f32 %v1360, %v2420
    %v2422 = vpop.f32.mrb[0].mxu0
    %v2423 = vadd.f32 %v1364, %v2422
    %v2424 = vpop.f32.mrb[0].mxu0
    %v2425 = vadd.f32 %v1360, %v2424
    %v2426 = vpop.f32.mrb[0].mxu0
    %v2427 = vadd.f32 %v1364, %v2426
    %2428 = vmatprep.mubr.bf16.mxu0 0
    %2429 = vmatmul.mubr.bf16.gmra.mrb[0].mxu0 %v2155
    %v2430 = vpop.f32.mrb[0].mxu0
    %v2431 = vadd.f32 %v1360, %v2430
    %v2432 = vpop.f32.mrb[0].mxu0
    %v2433 = vadd.f32 %v1364, %v2432
    %v2434 = vpop.f32.mrb[0].mxu0
    %v2435 = vadd.f32 %v1360, %v2434
    %v2436 = vpop.f32.mrb[0].mxu0
    %v2437 = vadd.f32 %v1364, %v2436
    %2438 = vmatprep.mubr.bf16.mxu0 0
    %2439 = vmatmul.mubr.bf16.gmra.mrb[0].mxu0 %v2156
    %v2440 = vpop.f32.mrb[0].mxu0
    %v2441 = vadd.f32 %v1360, %v2440
    %v2442 = vpop.f32.mrb[0].mxu0
    %v2443 = vadd.f32 %v1364, %v2442
    %v2444 = vpop.f32.mrb[0].mxu0
    %v2445 = vadd.f32 %v1360, %v2444
    %v2446 = vpop.f32.mrb[0].mxu0
    %v2447 = vadd.f32 %v1364, %v2446
    %2448 = vdwg.mxu0
    %v2449 = vmax.f32 %v2192, 0.0
    %v2450 = vmax.f32 %v2194, 0.0
    %v2451 = vmax.f32 %v2265, 0.0
    %v2452 = vmax.f32 %v2267, 0.0
    %v2453 = vmax.f32 %v2338, 0.0
    %v2454 = vmax.f32 %v2340, 0.0
    %v2455 = vmax.f32 %v2411, 0.0
    %v2456 = vmax.f32 %v2413, 0.0
    %v2457 = vmax.f32 %v2196, 0.0
    %v2458 = vmax.f32 %v2198, 0.0
    %v2459 = vmax.f32 %v2269, 0.0
    %v2460 = vmax.f32 %v2271, 0.0
    %v2461 = vmax.f32 %v2342, 0.0
    %v2462 = vmax.f32 %v2344, 0.0
    %v2463 = vmax.f32 %v2415, 0.0
    %v2464 = vmax.f32 %v2417, 0.0
    %v2465 = vmax.f32 %v2202, 0.0
    %v2466 = vmax.f32 %v2204, 0.0
    %v2467 = vmax.f32 %v2275, 0.0
    %v2468 = vmax.f32 %v2277, 0.0
    %v2469 = vmax.f32 %v2348, 0.0
    %v2470 = vmax.f32 %v2350, 0.0
    %v2471 = vmax.f32 %v2421, 0.0
    %v2472 = vmax.f32 %v2423, 0.0
    %v2473 = vmax.f32 %v2206, 0.0
    %v2474 = vmax.f32 %v2208, 0.0
    %v2475 = vmax.f32 %v2279, 0.0
    %v2476 = vmax.f32 %v2281, 0.0
    %v2477 = vmax.f32 %v2352, 0.0
    %v2478 = vmax.f32 %v2354, 0.0
    %v2479 = vmax.f32 %v2425, 0.0
    %v2480 = vmax.f32 %v2427, 0.0
    %v2481 = vmax.f32 %v2212, 0.0
    %v2482 = vmax.f32 %v2214, 0.0
    %v2483 = vmax.f32 %v2285, 0.0
    %v2484 = vmax.f32 %v2287, 0.0
    %v2485 = vmax.f32 %v2358, 0.0
    %v2486 = vmax.f32 %v2360, 0.0
    %v2487 = vmax.f32 %v2431, 0.0
    %v2488 = vmax.f32 %v2433, 0.0
    %v2489 = vmax.f32 %v2216, 0.0
    %v2490 = vmax.f32 %v2218, 0.0
    %v2491 = vmax.f32 %v2289, 0.0
    %v2492 = vmax.f32 %v2291, 0.0
    %v2493 = vmax.f32 %v2362, 0.0
    %v2494 = vmax.f32 %v2364, 0.0
    %v2495 = vmax.f32 %v2435, 0.0
    %v2496 = vmax.f32 %v2437, 0.0
    %v2497 = vmax.f32 %v2222, 0.0
    %v2498 = vmax.f32 %v2224, 0.0
    %v2499 = vmax.f32 %v2295, 0.0
    %v2500 = vmax.f32 %v2297, 0.0
    %v2501 = vmax.f32 %v2368, 0.0
    %v2502 = vmax.f32 %v2370, 0.0
    %v2503 = vmax.f32 %v2441, 0.0
    %v2504 = vmax.f32 %v2443, 0.0
    %v2505 = vmax.f32 %v2226, 0.0
    %v2506 = vmax.f32 %v2228, 0.0
    %v2507 = vmax.f32 %v2299, 0.0
    %v2508 = vmax.f32 %v2301, 0.0
    %v2509 = vmax.f32 %v2372, 0.0
    %v2510 = vmax.f32 %v2374, 0.0
    %v2511 = vmax.f32 %v2445, 0.0
    %v2512 = vmax.f32 %v2447, 0.0
    %v2513 = vmax.f32 %v2449, %v2457
    %v2514 = vmax.f32 %v2513, %v2465
    %v2515 = vmax.f32 %v2514, %v2473
    %v2516 = vmax.f32 %v2515, %v2481
    %v2517 = vmax.f32 %v2516, %v2489
    %v2518 = vmax.f32 %v2517, %v2497
    %v2519 = vmax.f32 %v2518, %v2505
    %v2520 = vrot.slane %v2519, 4
    %v2521 = vmax.f32 %v2519, %v2520
    %v2522 = vrot.slane %v2521, 2
    %v2523 = vmax.f32 %v2521, %v2522
    %v2524 = vrot.slane %v2523, 1
    %v2525 = vmax.f32 %v2523, %v2524
    %v2526 = vmax.f32 %v2450, %v2458
    %v2527 = vmax.f32 %v2526, %v2466
    %v2528 = vmax.f32 %v2527, %v2474
    %v2529 = vmax.f32 %v2528, %v2482
    %v2530 = vmax.f32 %v2529, %v2490
    %v2531 = vmax.f32 %v2530, %v2498
    %v2532 = vmax.f32 %v2531, %v2506
    %v2533 = vrot.slane %v2532, 4
    %v2534 = vmax.f32 %v2532, %v2533
    %v2535 = vrot.slane %v2534, 2
    %v2536 = vmax.f32 %v2534, %v2535
    %v2537 = vrot.slane %v2536, 1
    %v2538 = vmax.f32 %v2536, %v2537
    %v2539 = vmax.f32 %v2451, %v2459
    %v2540 = vmax.f32 %v2539, %v2467
    %v2541 = vmax.f32 %v2540, %v2475
    %v2542 = vmax.f32 %v2541, %v2483
    %v2543 = vmax.f32 %v2542, %v2491
    %v2544 = vmax.f32 %v2543, %v2499
    %v2545 = vmax.f32 %v2544, %v2507
    %v2546 = vrot.slane %v2545, 4
    %v2547 = vmax.f32 %v2545, %v2546
    %v2548 = vrot.slane %v2547, 2
    %v2549 = vmax.f32 %v2547, %v2548
    %v2550 = vrot.slane %v2549, 1
    %v2551 = vmax.f32 %v2549, %v2550
    %v2552 = vmax.f32 %v2452, %v2460
    %v2553 = vmax.f32 %v2552, %v2468
    %v2554 = vmax.f32 %v2553, %v2476
    %v2555 = vmax.f32 %v2554, %v2484
    %v2556 = vmax.f32 %v2555, %v2492
    %v2557 = vmax.f32 %v2556, %v2500
    %v2558 = vmax.f32 %v2557, %v2508
    %v2559 = vrot.slane %v2558, 4
    %v2560 = vmax.f32 %v2558, %v2559
    %v2561 = vrot.slane %v2560, 2
    %v2562 = vmax.f32 %v2560, %v2561
    %v2563 = vrot.slane %v2562, 1
    %v2564 = vmax.f32 %v2562, %v2563
    %v2565 = vmax.f32 %v2453, %v2461
    %v2566 = vmax.f32 %v2565, %v2469
    %v2567 = vmax.f32 %v2566, %v2477
    %v2568 = vmax.f32 %v2567, %v2485
    %v2569 = vmax.f32 %v2568, %v2493
    %v2570 = vmax.f32 %v2569, %v2501
    %v2571 = vmax.f32 %v2570, %v2509
    %v2572 = vrot.slane %v2571, 4
    %v2573 = vmax.f32 %v2571, %v2572
    %v2574 = vrot.slane %v2573, 2
    %v2575 = vmax.f32 %v2573, %v2574
    %v2576 = vrot.slane %v2575, 1
    %v2577 = vmax.f32 %v2575, %v2576
    %v2578 = vmax.f32 %v2454, %v2462
    %v2579 = vmax.f32 %v2578, %v2470
    %v2580 = vmax.f32 %v2579, %v2478
    %v2581 = vmax.f32 %v2580, %v2486
    %v2582 = vmax.f32 %v2581, %v2494
    %v2583 = vmax.f32 %v2582, %v2502
    %v2584 = vmax.f32 %v2583, %v2510
    %v2585 = vrot.slane %v2584, 4
    %v2586 = vmax.f32 %v2584, %v2585
    %v2587 = vrot.slane %v2586, 2
    %v2588 = vmax.f32 %v2586, %v2587
    %v2589 = vrot.slane %v2588, 1
    %v2590 = vmax.f32 %v2588, %v2589
    %v2591 = vmax.f32 %v2455, %v2463
    %v2592 = vmax.f32 %v2591, %v2471
    %v2593 = vmax.f32 %v2592, %v2479
    %v2594 = vmax.f32 %v2593, %v2487
    %v2595 = vmax.f32 %v2594, %v2495
    %v2596 = vmax.f32 %v2595, %v2503
    %v2597 = vmax.f32 %v2596, %v2511
    %v2598 = vrot.slane %v2597, 4
    %v2599 = vmax.f32 %v2597, %v2598
    %v2600 = vrot.slane %v2599, 2
    %v2601 = vmax.f32 %v2599, %v2600
    %v2602 = vrot.slane %v2601, 1
    %v2603 = vmax.f32 %v2601, %v2602
    %v2604 = vmax.f32 %v2456, %v2464
    %v2605 = vmax.f32 %v2604, %v2472
    %v2606 = vmax.f32 %v2605, %v2480
    %v2607 = vmax.f32 %v2606, %v2488
    %v2608 = vmax.f32 %v2607, %v2496
    %v2609 = vmax.f32 %v2608, %v2504
    %v2610 = vmax.f32 %v2609, %v2512
    %v2611 = vrot.slane %v2610, 4
    %v2612 = vmax.f32 %v2610, %v2611
    %v2613 = vrot.slane %v2612, 2
    %v2614 = vmax.f32 %v2612, %v2613
    %v2615 = vrot.slane %v2614, 1
    %v2616 = vmax.f32 %v2614, %v2615
    %v2617 = vmax.f32 %v2061, %v2525
    %v2618 = vmax.f32 %v2074, %v2538
    %v2619 = vmax.f32 %v2087, %v2551
    %v2620 = vmax.f32 %v2100, %v2564
    %v2621 = vmax.f32 %v2113, %v2577
    %v2622 = vmax.f32 %v2126, %v2590
    %v2623 = vmax.f32 %v2139, %v2603
    %v2624 = vmax.f32 %v2152, %v2616
    %v2625 = vpack.c.bf16 %v1245, %v1244
    %v2626 = vpack.c.bf16 %v1247, %v1246
    %v2627 = vpack.c.bf16 %v1249, %v1248
    %v2628 = vpack.c.bf16 %v1251, %v1250
    %2629 = vmatprep.subr.bf16.mxu0 %v1566
    %2630 = vmatpush1.bf16.msra.mxu0 %v1565
    %2631 = vmatprep.subr.bf16.mxu0 %v1574
    %2632 = vmatpush1.bf16.msra.mxu0 %v1573
    %2633 = vmatprep.subr.bf16.mxu0 %v1582
    %2634 = vmatpush1.bf16.msra.mxu0 %v1581
    %2635 = vmatprep.subr.bf16.mxu0 %v1590
    %2636 = vmatpush1.bf16.msra.mxu0 %v1589
    %2637 = vmatprep.subr.bf16.mxu0 %v1598
    %2638 = vmatpush1.bf16.msra.mxu0 %v1597
    %2639 = vmatprep.subr.bf16.mxu0 %v1606
    %2640 = vmatpush1.bf16.msra.mxu0 %v1605
    %2641 = vmatprep.subr.bf16.mxu0 %v1614
    %2642 = vmatpush1.bf16.msra.mxu0 %v1613
    %2643 = vmatprep.subr.bf16.mxu0 %v1622
    %2644 = vmatpush1.bf16.msra.mxu0 %v1621
    %2645 = vmatprep.subr.bf16.mxu0 0
    %2646 = vmatpush1.bf16.msra.mxu0 0
    %2647 = vmatprep.subr.bf16.mxu0 0
    %2648 = vmatpush1.bf16.msra.mxu0 0
    %2649 = vmatprep.subr.bf16.mxu0 0
    %2650 = vmatpush1.bf16.msra.mxu0 0
    %2651 = vmatprep.subr.bf16.mxu0 0
    %2652 = vmatpush1.bf16.msra.mxu0 0
    %2653 = vmatprep.subr.bf16.mxu0 0
    %2654 = vmatpush1.bf16.msra.mxu0 0
    %2655 = vmatprep.subr.bf16.mxu0 0
    %2656 = vmatpush1.bf16.msra.mxu0 0
    %2657 = vmatprep.subr.bf16.mxu0 0
    %2658 = vmatpush1.bf16.msra.mxu0 0
    %2659 = vmatprep.subr.bf16.mxu0 0
    %2660 = vmatpush1.bf16.msra.mxu0 0
    %2661 = vmatprep.mubr.bf16.mxu0 0
    %2662 = vmatmul.mubr.bf16.gmra.mrb[0].mxu0 %v2625
    %v2663 = vpop.f32.mrb[0].mxu0
    %v2664 = vadd.f32 %v1336, %v2663
    %v2665 = vpop.f32.mrb[0].mxu0
    %v2666 = vadd.f32 %v1340, %v2665
    %v2667 = vpop.f32.mrb[0].mxu0
    %v2668 = vadd.f32 %v1336, %v2667
    %v2669 = vpop.f32.mrb[0].mxu0
    %v2670 = vadd.f32 %v1340, %v2669
    %2671 = vmatprep.mubr.bf16.mxu0 0
    %2672 = vmatmul.mubr.bf16.gmra.mrb[0].mxu0 %v2626
    %v2673 = vpop.f32.mrb[0].mxu0
    %v2674 = vadd.f32 %v1336, %v2673
    %v2675 = vpop.f32.mrb[0].mxu0
    %v2676 = vadd.f32 %v1340, %v2675
    %v2677 = vpop.f32.mrb[0].mxu0
    %v2678 = vadd.f32 %v1336, %v2677
    %v2679 = vpop.f32.mrb[0].mxu0
    %v2680 = vadd.f32 %v1340, %v2679
    %2681 = vmatprep.mubr.bf16.mxu0 0
    %2682 = vmatmul.mubr.bf16.gmra.mrb[0].mxu0 %v2627
    %v2683 = vpop.f32.mrb[0].mxu0
    %v2684 = vadd.f32 %v1336, %v2683
    %v2685 = vpop.f32.mrb[0].mxu0
    %v2686 = vadd.f32 %v1340, %v2685
    %v2687 = vpop.f32.mrb[0].mxu0
    %v2688 = vadd.f32 %v1336, %v2687
    %v2689 = vpop.f32.mrb[0].mxu0
    %v2690 = vadd.f32 %v1340, %v2689
    %2691 = vmatprep.mubr.bf16.mxu0 0
    %2692 = vmatmul.mubr.bf16.gmra.mrb[0].mxu0 %v2628
    %v2693 = vpop.f32.mrb[0].mxu0
    %v2694 = vadd.f32 %v1336, %v2693
    %v2695 = vpop.f32.mrb[0].mxu0
    %v2696 = vadd.f32 %v1340, %v2695
    %v2697 = vpop.f32.mrb[0].mxu0
    %v2698 = vadd.f32 %v1336, %v2697
    %v2699 = vpop.f32.mrb[0].mxu0
    %v2700 = vadd.f32 %v1340, %v2699
    %2701 = vdwg.mxu0
    %2702 = vmatprep.subr.bf16.mxu0 %v1568
    %2703 = vmatpush1.bf16.msra.mxu0 %v1567
    %2704 = vmatprep.subr.bf16.mxu0 %v1576
    %2705 = vmatpush1.bf16.msra.mxu0 %v1575
    %2706 = vmatprep.subr.bf16.mxu0 %v1584
    %2707 = vmatpush1.bf16.msra.mxu0 %v1583
    %2708 = vmatprep.subr.bf16.mxu0 %v1592
    %2709 = vmatpush1.bf16.msra.mxu0 %v1591
    %2710 = vmatprep.subr.bf16.mxu0 %v1600
    %2711 = vmatpush1.bf16.msra.mxu0 %v1599
    %2712 = vmatprep.subr.bf16.mxu0 %v1608
    %2713 = vmatpush1.bf16.msra.mxu0 %v1607
    %2714 = vmatprep.subr.bf16.mxu0 %v1616
    %2715 = vmatpush1.bf16.msra.mxu0 %v1615
    %2716 = vmatprep.subr.bf16.mxu0 %v1624
    %2717 = vmatpush1.bf16.msra.mxu0 %v1623
    %2718 = vmatprep.subr.bf16.mxu0 0
    %2719 = vmatpush1.bf16.msra.mxu0 0
    %2720 = vmatprep.subr.bf16.mxu0 0
    %2721 = vmatpush1.bf16.msra.mxu0 0
    %2722 = vmatprep.subr.bf16.mxu0 0
    %2723 = vmatpush1.bf16.msra.mxu0 0
    %2724 = vmatprep.subr.bf16.mxu0 0
    %2725 = vmatpush1.bf16.msra.mxu0 0
    %2726 = vmatprep.subr.bf16.mxu0 0
    %2727 = vmatpush1.bf16.msra.mxu0 0
    %2728 = vmatprep.subr.bf16.mxu0 0
    %2729 = vmatpush1.bf16.msra.mxu0 0
    %2730 = vmatprep.subr.bf16.mxu0 0
    %2731 = vmatpush1.bf16.msra.mxu0 0
    %2732 = vmatprep.subr.bf16.mxu0 0
    %2733 = vmatpush1.bf16.msra.mxu0 0
    %2734 = vmatprep.mubr.bf16.mxu0 0
    %2735 = vmatmul.mubr.bf16.gmra.mrb[0].mxu0 %v2625
    %v2736 = vpop.f32.mrb[0].mxu0
    %v2737 = vadd.f32 %v1344, %v2736
    %v2738 = vpop.f32.mrb[0].mxu0
    %v2739 = vadd.f32 %v1348, %v2738
    %v2740 = vpop.f32.mrb[0].mxu0
    %v2741 = vadd.f32 %v1344, %v2740
    %v2742 = vpop.f32.mrb[0].mxu0
    %v2743 = vadd.f32 %v1348, %v2742
    %2744 = vmatprep.mubr.bf16.mxu0 0
    %2745 = vmatmul.mubr.bf16.gmra.mrb[0].mxu0 %v2626
    %v2746 = vpop.f32.mrb[0].mxu0
    %v2747 = vadd.f32 %v1344, %v2746
    %v2748 = vpop.f32.mrb[0].mxu0
    %v2749 = vadd.f32 %v1348, %v2748
    %v2750 = vpop.f32.mrb[0].mxu0
    %v2751 = vadd.f32 %v1344, %v2750
    %v2752 = vpop.f32.mrb[0].mxu0
    %v2753 = vadd.f32 %v1348, %v2752
    %2754 = vmatprep.mubr.bf16.mxu0 0
    %2755 = vmatmul.mubr.bf16.gmra.mrb[0].mxu0 %v2627
    %v2756 = vpop.f32.mrb[0].mxu0
    %v2757 = vadd.f32 %v1344, %v2756
    %v2758 = vpop.f32.mrb[0].mxu0
    %v2759 = vadd.f32 %v1348, %v2758
    %v2760 = vpop.f32.mrb[0].mxu0
    %v2761 = vadd.f32 %v1344, %v2760
    %v2762 = vpop.f32.mrb[0].mxu0
    %v2763 = vadd.f32 %v1348, %v2762
    %2764 = vmatprep.mubr.bf16.mxu0 0
    %2765 = vmatmul.mubr.bf16.gmra.mrb[0].mxu0 %v2628
    %v2766 = vpop.f32.mrb[0].mxu0
    %v2767 = vadd.f32 %v1344, %v2766
    %v2768 = vpop.f32.mrb[0].mxu0
    %v2769 = vadd.f32 %v1348, %v2768
    %v2770 = vpop.f32.mrb[0].mxu0
    %v2771 = vadd.f32 %v1344, %v2770
    %v2772 = vpop.f32.mrb[0].mxu0
    %v2773 = vadd.f32 %v1348, %v2772
    %2774 = vdwg.mxu0
    %2775 = vmatprep.subr.bf16.mxu0 %v1570
    %2776 = vmatpush1.bf16.msra.mxu0 %v1569
    %2777 = vmatprep.subr.bf16.mxu0 %v1578
    %2778 = vmatpush1.bf16.msra.mxu0 %v1577
    %2779 = vmatprep.subr.bf16.mxu0 %v1586
    %2780 = vmatpush1.bf16.msra.mxu0 %v1585
    %2781 = vmatprep.subr.bf16.mxu0 %v1594
    %2782 = vmatpush1.bf16.msra.mxu0 %v1593
    %2783 = vmatprep.subr.bf16.mxu0 %v1602
    %2784 = vmatpush1.bf16.msra.mxu0 %v1601
    %2785 = vmatprep.subr.bf16.mxu0 %v1610
    %2786 = vmatpush1.bf16.msra.mxu0 %v1609
    %2787 = vmatprep.subr.bf16.mxu0 %v1618
    %2788 = vmatpush1.bf16.msra.mxu0 %v1617
    %2789 = vmatprep.subr.bf16.mxu0 %v1626
    %2790 = vmatpush1.bf16.msra.mxu0 %v1625
    %2791 = vmatprep.subr.bf16.mxu0 0
    %2792 = vmatpush1.bf16.msra.mxu0 0
    %2793 = vmatprep.subr.bf16.mxu0 0
    %2794 = vmatpush1.bf16.msra.mxu0 0
    %2795 = vmatprep.subr.bf16.mxu0 0
    %2796 = vmatpush1.bf16.msra.mxu0 0
    %2797 = vmatprep.subr.bf16.mxu0 0
    %2798 = vmatpush1.bf16.msra.mxu0 0
    %2799 = vmatprep.subr.bf16.mxu0 0
    %2800 = vmatpush1.bf16.msra.mxu0 0
    %2801 = vmatprep.subr.bf16.mxu0 0
    %2802 = vmatpush1.bf16.msra.mxu0 0
    %2803 = vmatprep.subr.bf16.mxu0 0
    %2804 = vmatpush1.bf16.msra.mxu0 0
    %2805 = vmatprep.subr.bf16.mxu0 0
    %2806 = vmatpush1.bf16.msra.mxu0 0
    %2807 = vmatprep.mubr.bf16.mxu0 0
    %2808 = vmatmul.mubr.bf16.gmra.mrb[0].mxu0 %v2625
    %v2809 = vpop.f32.mrb[0].mxu0
    %v2810 = vadd.f32 %v1352, %v2809
    %v2811 = vpop.f32.mrb[0].mxu0
    %v2812 = vadd.f32 %v1356, %v2811
    %v2813 = vpop.f32.mrb[0].mxu0
    %v2814 = vadd.f32 %v1352, %v2813
    %v2815 = vpop.f32.mrb[0].mxu0
    %v2816 = vadd.f32 %v1356, %v2815
    %2817 = vmatprep.mubr.bf16.mxu0 0
    %2818 = vmatmul.mubr.bf16.gmra.mrb[0].mxu0 %v2626
    %v2819 = vpop.f32.mrb[0].mxu0
    %v2820 = vadd.f32 %v1352, %v2819
    %v2821 = vpop.f32.mrb[0].mxu0
    %v2822 = vadd.f32 %v1356, %v2821
    %v2823 = vpop.f32.mrb[0].mxu0
    %v2824 = vadd.f32 %v1352, %v2823
    %v2825 = vpop.f32.mrb[0].mxu0
    %v2826 = vadd.f32 %v1356, %v2825
    %2827 = vmatprep.mubr.bf16.mxu0 0
    %2828 = vmatmul.mubr.bf16.gmra.mrb[0].mxu0 %v2627
    %v2829 = vpop.f32.mrb[0].mxu0
    %v2830 = vadd.f32 %v1352, %v2829
    %v2831 = vpop.f32.mrb[0].mxu0
    %v2832 = vadd.f32 %v1356, %v2831
    %v2833 = vpop.f32.mrb[0].mxu0
    %v2834 = vadd.f32 %v1352, %v2833
    %v2835 = vpop.f32.mrb[0].mxu0
    %v2836 = vadd.f32 %v1356, %v2835
    %2837 = vmatprep.mubr.bf16.mxu0 0
    %2838 = vmatmul.mubr.bf16.gmra.mrb[0].mxu0 %v2628
    %v2839 = vpop.f32.mrb[0].mxu0
    %v2840 = vadd.f32 %v1352, %v2839
    %v2841 = vpop.f32.mrb[0].mxu0
    %v2842 = vadd.f32 %v1356, %v2841
    %v2843 = vpop.f32.mrb[0].mxu0
    %v2844 = vadd.f32 %v1352, %v2843
    %v2845 = vpop.f32.mrb[0].mxu0
    %v2846 = vadd.f32 %v1356, %v2845
    %2847 = vdwg.mxu0
    %2848 = vmatprep.subr.bf16.mxu0 %v1572
    %2849 = vmatpush1.bf16.msra.mxu0 %v1571
    %2850 = vmatprep.subr.bf16.mxu0 %v1580
    %2851 = vmatpush1.bf16.msra.mxu0 %v1579
    %2852 = vmatprep.subr.bf16.mxu0 %v1588
    %2853 = vmatpush1.bf16.msra.mxu0 %v1587
    %2854 = vmatprep.subr.bf16.mxu0 %v1596
    %2855 = vmatpush1.bf16.msra.mxu0 %v1595
    %2856 = vmatprep.subr.bf16.mxu0 %v1604
    %2857 = vmatpush1.bf16.msra.mxu0 %v1603
    %2858 = vmatprep.subr.bf16.mxu0 %v1612
    %2859 = vmatpush1.bf16.msra.mxu0 %v1611
    %2860 = vmatprep.subr.bf16.mxu0 %v1620
    %2861 = vmatpush1.bf16.msra.mxu0 %v1619
    %2862 = vmatprep.subr.bf16.mxu0 %v1628
    %2863 = vmatpush1.bf16.msra.mxu0 %v1627
    %2864 = vmatprep.subr.bf16.mxu0 0
    %2865 = vmatpush1.bf16.msra.mxu0 0
    %2866 = vmatprep.subr.bf16.mxu0 0
    %2867 = vmatpush1.bf16.msra.mxu0 0
    %2868 = vmatprep.subr.bf16.mxu0 0
    %2869 = vmatpush1.bf16.msra.mxu0 0
    %2870 = vmatprep.subr.bf16.mxu0 0
    %2871 = vmatpush1.bf16.msra.mxu0 0
    %2872 = vmatprep.subr.bf16.mxu0 0
    %2873 = vmatpush1.bf16.msra.mxu0 0
    %2874 = vmatprep.subr.bf16.mxu0 0
    %2875 = vmatpush1.bf16.msra.mxu0 0
    %2876 = vmatprep.subr.bf16.mxu0 0
    %2877 = vmatpush1.bf16.msra.mxu0 0
    %2878 = vmatprep.subr.bf16.mxu0 0
    %2879 = vmatpush1.bf16.msra.mxu0 0
    %2880 = vmatprep.mubr.bf16.mxu0 0
    %2881 = vmatmul.mubr.bf16.gmra.mrb[0].mxu0 %v2625
    %v2882 = vpop.f32.mrb[0].mxu0
    %v2883 = vadd.f32 %v1360, %v2882
    %v2884 = vpop.f32.mrb[0].mxu0
    %v2885 = vadd.f32 %v1364, %v2884
    %v2886 = vpop.f32.mrb[0].mxu0
    %v2887 = vadd.f32 %v1360, %v2886
    %v2888 = vpop.f32.mrb[0].mxu0
    %v2889 = vadd.f32 %v1364, %v2888
    %2890 = vmatprep.mubr.bf16.mxu0 0
    %2891 = vmatmul.mubr.bf16.gmra.mrb[0].mxu0 %v2626
    %v2892 = vpop.f32.mrb[0].mxu0
    %v2893 = vadd.f32 %v1360, %v2892
    %v2894 = vpop.f32.mrb[0].mxu0
    %v2895 = vadd.f32 %v1364, %v2894
    %v2896 = vpop.f32.mrb[0].mxu0
    %v2897 = vadd.f32 %v1360, %v2896
    %v2898 = vpop.f32.mrb[0].mxu0
    %v2899 = vadd.f32 %v1364, %v2898
    %2900 = vmatprep.mubr.bf16.mxu0 0
    %2901 = vmatmul.mubr.bf16.gmra.mrb[0].mxu0 %v2627
    %v2902 = vpop.f32.mrb[0].mxu0
    %v2903 = vadd.f32 %v1360, %v2902
    %v2904 = vpop.f32.mrb[0].mxu0
    %v2905 = vadd.f32 %v1364, %v2904
    %v2906 = vpop.f32.mrb[0].mxu0
    %v2907 = vadd.f32 %v1360, %v2906
    %v2908 = vpop.f32.mrb[0].mxu0
    %v2909 = vadd.f32 %v1364, %v2908
    %2910 = vmatprep.mubr.bf16.mxu0 0
    %2911 = vmatmul.mubr.bf16.gmra.mrb[0].mxu0 %v2628
    %v2912 = vpop.f32.mrb[0].mxu0
    %v2913 = vadd.f32 %v1360, %v2912
    %v2914 = vpop.f32.mrb[0].mxu0
    %v2915 = vadd.f32 %v1364, %v2914
    %v2916 = vpop.f32.mrb[0].mxu0
    %v2917 = vadd.f32 %v1360, %v2916
    %v2918 = vpop.f32.mrb[0].mxu0
    %v2919 = vadd.f32 %v1364, %v2918
    %2920 = vdwg.mxu0
    %v2921 = vmax.f32 %v2664, 0.0
    %v2922 = vmax.f32 %v2666, 0.0
    %v2923 = vmax.f32 %v2737, 0.0
    %v2924 = vmax.f32 %v2739, 0.0
    %v2925 = vmax.f32 %v2810, 0.0
    %v2926 = vmax.f32 %v2812, 0.0
    %v2927 = vmax.f32 %v2883, 0.0
    %v2928 = vmax.f32 %v2885, 0.0
    %v2929 = vmax.f32 %v2668, 0.0
    %v2930 = vmax.f32 %v2670, 0.0
    %v2931 = vmax.f32 %v2741, 0.0
    %v2932 = vmax.f32 %v2743, 0.0
    %v2933 = vmax.f32 %v2814, 0.0
    %v2934 = vmax.f32 %v2816, 0.0
    %v2935 = vmax.f32 %v2887, 0.0
    %v2936 = vmax.f32 %v2889, 0.0
    %v2937 = vmax.f32 %v2674, 0.0
    %v2938 = vmax.f32 %v2676, 0.0
    %v2939 = vmax.f32 %v2747, 0.0
    %v2940 = vmax.f32 %v2749, 0.0
    %v2941 = vmax.f32 %v2820, 0.0
    %v2942 = vmax.f32 %v2822, 0.0
    %v2943 = vmax.f32 %v2893, 0.0
    %v2944 = vmax.f32 %v2895, 0.0
    %v2945 = vmax.f32 %v2678, 0.0
    %v2946 = vmax.f32 %v2680, 0.0
    %v2947 = vmax.f32 %v2751, 0.0
    %v2948 = vmax.f32 %v2753, 0.0
    %v2949 = vmax.f32 %v2824, 0.0
    %v2950 = vmax.f32 %v2826, 0.0
    %v2951 = vmax.f32 %v2897, 0.0
    %v2952 = vmax.f32 %v2899, 0.0
    %v2953 = vmax.f32 %v2684, 0.0
    %v2954 = vmax.f32 %v2686, 0.0
    %v2955 = vmax.f32 %v2757, 0.0
    %v2956 = vmax.f32 %v2759, 0.0
    %v2957 = vmax.f32 %v2830, 0.0
    %v2958 = vmax.f32 %v2832, 0.0
    %v2959 = vmax.f32 %v2903, 0.0
    %v2960 = vmax.f32 %v2905, 0.0
    %v2961 = vmax.f32 %v2688, 0.0
    %v2962 = vmax.f32 %v2690, 0.0
    %v2963 = vmax.f32 %v2761, 0.0
    %v2964 = vmax.f32 %v2763, 0.0
    %v2965 = vmax.f32 %v2834, 0.0
    %v2966 = vmax.f32 %v2836, 0.0
    %v2967 = vmax.f32 %v2907, 0.0
    %v2968 = vmax.f32 %v2909, 0.0
    %v2969 = vmax.f32 %v2694, 0.0
    %v2970 = vmax.f32 %v2696, 0.0
    %v2971 = vmax.f32 %v2767, 0.0
    %v2972 = vmax.f32 %v2769, 0.0
    %v2973 = vmax.f32 %v2840, 0.0
    %v2974 = vmax.f32 %v2842, 0.0
    %v2975 = vmax.f32 %v2913, 0.0
    %v2976 = vmax.f32 %v2915, 0.0
    %v2977 = vmax.f32 %v2698, 0.0
    %v2978 = vmax.f32 %v2700, 0.0
    %v2979 = vmax.f32 %v2771, 0.0
    %v2980 = vmax.f32 %v2773, 0.0
    %v2981 = vmax.f32 %v2844, 0.0
    %v2982 = vmax.f32 %v2846, 0.0
    %v2983 = vmax.f32 %v2917, 0.0
    %v2984 = vmax.f32 %v2919, 0.0
    %v2985 = vmax.f32 %v2921, %v2929
    %v2986 = vmax.f32 %v2985, %v2937
    %v2987 = vmax.f32 %v2986, %v2945
    %v2988 = vmax.f32 %v2987, %v2953
    %v2989 = vmax.f32 %v2988, %v2961
    %v2990 = vmax.f32 %v2989, %v2969
    %v2991 = vmax.f32 %v2990, %v2977
    %v2992 = vrot.slane %v2991, 4
    %v2993 = vmax.f32 %v2991, %v2992
    %v2994 = vrot.slane %v2993, 2
    %v2995 = vmax.f32 %v2993, %v2994
    %v2996 = vrot.slane %v2995, 1
    %v2997 = vmax.f32 %v2995, %v2996
    %v2998 = vmax.f32 %v2922, %v2930
    %v2999 = vmax.f32 %v2998, %v2938
    %v3000 = vmax.f32 %v2999, %v2946
    %v3001 = vmax.f32 %v3000, %v2954
    %v3002 = vmax.f32 %v3001, %v2962
    %v3003 = vmax.f32 %v3002, %v2970
    %v3004 = vmax.f32 %v3003, %v2978
    %v3005 = vrot.slane %v3004, 4
    %v3006 = vmax.f32 %v3004, %v3005
    %v3007 = vrot.slane %v3006, 2
    %v3008 = vmax.f32 %v3006, %v3007
    %v3009 = vrot.slane %v3008, 1
    %v3010 = vmax.f32 %v3008, %v3009
    %v3011 = vmax.f32 %v2923, %v2931
    %v3012 = vmax.f32 %v3011, %v2939
    %v3013 = vmax.f32 %v3012, %v2947
    %v3014 = vmax.f32 %v3013, %v2955
    %v3015 = vmax.f32 %v3014, %v2963
    %v3016 = vmax.f32 %v3015, %v2971
    %v3017 = vmax.f32 %v3016, %v2979
    %v3018 = vrot.slane %v3017, 4
    %v3019 = vmax.f32 %v3017, %v3018
    %v3020 = vrot.slane %v3019, 2
    %v3021 = vmax.f32 %v3019, %v3020
    %v3022 = vrot.slane %v3021, 1
    %v3023 = vmax.f32 %v3021, %v3022
    %v3024 = vmax.f32 %v2924, %v2932
    %v3025 = vmax.f32 %v3024, %v2940
    %v3026 = vmax.f32 %v3025, %v2948
    %v3027 = vmax.f32 %v3026, %v2956
    %v3028 = vmax.f32 %v3027, %v2964
    %v3029 = vmax.f32 %v3028, %v2972
    %v3030 = vmax.f32 %v3029, %v2980
    %v3031 = vrot.slane %v3030, 4
    %v3032 = vmax.f32 %v3030, %v3031
    %v3033 = vrot.slane %v3032, 2
    %v3034 = vmax.f32 %v3032, %v3033
    %v3035 = vrot.slane %v3034, 1
    %v3036 = vmax.f32 %v3034, %v3035
    %v3037 = vmax.f32 %v2925, %v2933
    %v3038 = vmax.f32 %v3037, %v2941
    %v3039 = vmax.f32 %v3038, %v2949
    %v3040 = vmax.f32 %v3039, %v2957
    %v3041 = vmax.f32 %v3040, %v2965
    %v3042 = vmax.f32 %v3041, %v2973
    %v3043 = vmax.f32 %v3042, %v2981
    %v3044 = vrot.slane %v3043, 4
    %v3045 = vmax.f32 %v3043, %v3044
    %v3046 = vrot.slane %v3045, 2
    %v3047 = vmax.f32 %v3045, %v3046
    %v3048 = vrot.slane %v3047, 1
    %v3049 = vmax.f32 %v3047, %v3048
    %v3050 = vmax.f32 %v2926, %v2934
    %v3051 = vmax.f32 %v3050, %v2942
    %v3052 = vmax.f32 %v3051, %v2950
    %v3053 = vmax.f32 %v3052, %v2958
    %v3054 = vmax.f32 %v3053, %v2966
    %v3055 = vmax.f32 %v3054, %v2974
    %v3056 = vmax.f32 %v3055, %v2982
    %v3057 = vrot.slane %v3056, 4
    %v3058 = vmax.f32 %v3056, %v3057
    %v3059 = vrot.slane %v3058, 2
    %v3060 = vmax.f32 %v3058, %v3059
    %v3061 = vrot.slane %v3060, 1
    %v3062 = vmax.f32 %v3060, %v3061
    %v3063 = vmax.f32 %v2927, %v2935
    %v3064 = vmax.f32 %v3063, %v2943
    %v3065 = vmax.f32 %v3064, %v2951
    %v3066 = vmax.f32 %v3065, %v2959
    %v3067 = vmax.f32 %v3066, %v2967
    %v3068 = vmax.f32 %v3067, %v2975
    %v3069 = vmax.f32 %v3068, %v2983
    %v3070 = vrot.slane %v3069, 4
    %v3071 = vmax.f32 %v3069, %v3070
    %v3072 = vrot.slane %v3071, 2
    %v3073 = vmax.f32 %v3071, %v3072
    %v3074 = vrot.slane %v3073, 1
    %v3075 = vmax.f32 %v3073, %v3074
    %v3076 = vmax.f32 %v2928, %v2936
    %v3077 = vmax.f32 %v3076, %v2944
    %v3078 = vmax.f32 %v3077, %v2952
    %v3079 = vmax.f32 %v3078, %v2960
    %v3080 = vmax.f32 %v3079, %v2968
    %v3081 = vmax.f32 %v3080, %v2976
    %v3082 = vmax.f32 %v3081, %v2984
    %v3083 = vrot.slane %v3082, 4
    %v3084 = vmax.f32 %v3082, %v3083
    %v3085 = vrot.slane %v3084, 2
    %v3086 = vmax.f32 %v3084, %v3085
    %v3087 = vrot.slane %v3086, 1
    %v3088 = vmax.f32 %v3086, %v3087
    %v3089 = vmax.f32 %v2617, %v2997
    %v3090 = vmax.f32 %v2618, %v3010
    %v3091 = vmax.f32 %v2619, %v3023
    %v3092 = vmax.f32 %v2620, %v3036
    %v3093 = vmax.f32 %v2621, %v3049
    %v3094 = vmax.f32 %v2622, %v3062
    %v3095 = vmax.f32 %v2623, %v3075
    %v3096 = vmax.f32 %v2624, %v3088
    %v3097 = vpack.c.bf16 %v1253, %v1252
    %v3098 = vpack.c.bf16 %v1255, %v1254
    %v3099 = vpack.c.bf16 %v1257, %v1256
    %v3100 = vpack.c.bf16 %v1259, %v1258
    %3101 = vmatprep.subr.bf16.mxu0 %v1566
    %3102 = vmatpush1.bf16.msra.mxu0 %v1565
    %3103 = vmatprep.subr.bf16.mxu0 %v1574
    %3104 = vmatpush1.bf16.msra.mxu0 %v1573
    %3105 = vmatprep.subr.bf16.mxu0 %v1582
    %3106 = vmatpush1.bf16.msra.mxu0 %v1581
    %3107 = vmatprep.subr.bf16.mxu0 %v1590
    %3108 = vmatpush1.bf16.msra.mxu0 %v1589
    %3109 = vmatprep.subr.bf16.mxu0 %v1598
    %3110 = vmatpush1.bf16.msra.mxu0 %v1597
    %3111 = vmatprep.subr.bf16.mxu0 %v1606
    %3112 = vmatpush1.bf16.msra.mxu0 %v1605
    %3113 = vmatprep.subr.bf16.mxu0 %v1614
    %3114 = vmatpush1.bf16.msra.mxu0 %v1613
    %3115 = vmatprep.subr.bf16.mxu0 %v1622
    %3116 = vmatpush1.bf16.msra.mxu0 %v1621
    %3117 = vmatprep.subr.bf16.mxu0 0
    %3118 = vmatpush1.bf16.msra.mxu0 0
    %3119 = vmatprep.subr.bf16.mxu0 0
    %3120 = vmatpush1.bf16.msra.mxu0 0
    %3121 = vmatprep.subr.bf16.mxu0 0
    %3122 = vmatpush1.bf16.msra.mxu0 0
    %3123 = vmatprep.subr.bf16.mxu0 0
    %3124 = vmatpush1.bf16.msra.mxu0 0
    %3125 = vmatprep.subr.bf16.mxu0 0
    %3126 = vmatpush1.bf16.msra.mxu0 0
    %3127 = vmatprep.subr.bf16.mxu0 0
    %3128 = vmatpush1.bf16.msra.mxu0 0
    %3129 = vmatprep.subr.bf16.mxu0 0
    %3130 = vmatpush1.bf16.msra.mxu0 0
    %3131 = vmatprep.subr.bf16.mxu0 0
    %3132 = vmatpush1.bf16.msra.mxu0 0
    %3133 = vmatprep.mubr.bf16.mxu0 0
    %3134 = vmatmul.mubr.bf16.gmra.mrb[0].mxu0 %v3097
    %v3135 = vpop.f32.mrb[0].mxu0
    %v3136 = vadd.f32 %v1336, %v3135
    %v3137 = vpop.f32.mrb[0].mxu0
    %v3138 = vadd.f32 %v1340, %v3137
    %v3139 = vpop.f32.mrb[0].mxu0
    %v3140 = vadd.f32 %v1336, %v3139
    %v3141 = vpop.f32.mrb[0].mxu0
    %v3142 = vadd.f32 %v1340, %v3141
    %3143 = vmatprep.mubr.bf16.mxu0 0
    %3144 = vmatmul.mubr.bf16.gmra.mrb[0].mxu0 %v3098
    %v3145 = vpop.f32.mrb[0].mxu0
    %v3146 = vadd.f32 %v1336, %v3145
    %v3147 = vpop.f32.mrb[0].mxu0
    %v3148 = vadd.f32 %v1340, %v3147
    %v3149 = vpop.f32.mrb[0].mxu0
    %v3150 = vadd.f32 %v1336, %v3149
    %v3151 = vpop.f32.mrb[0].mxu0
    %v3152 = vadd.f32 %v1340, %v3151
    %3153 = vmatprep.mubr.bf16.mxu0 0
    %3154 = vmatmul.mubr.bf16.gmra.mrb[0].mxu0 %v3099
    %v3155 = vpop.f32.mrb[0].mxu0
    %v3156 = vadd.f32 %v1336, %v3155
    %v3157 = vpop.f32.mrb[0].mxu0
    %v3158 = vadd.f32 %v1340, %v3157
    %v3159 = vpop.f32.mrb[0].mxu0
    %v3160 = vadd.f32 %v1336, %v3159
    %v3161 = vpop.f32.mrb[0].mxu0
    %v3162 = vadd.f32 %v1340, %v3161
    %3163 = vmatprep.mubr.bf16.mxu0 0
    %3164 = vmatmul.mubr.bf16.gmra.mrb[0].mxu0 %v3100
    %v3165 = vpop.f32.mrb[0].mxu0
    %v3166 = vadd.f32 %v1336, %v3165
    %v3167 = vpop.f32.mrb[0].mxu0
    %v3168 = vadd.f32 %v1340, %v3167
    %v3169 = vpop.f32.mrb[0].mxu0
    %v3170 = vadd.f32 %v1336, %v3169
    %v3171 = vpop.f32.mrb[0].mxu0
    %v3172 = vadd.f32 %v1340, %v3171
    %3173 = vdwg.mxu0
    %3174 = vmatprep.subr.bf16.mxu0 %v1568
    %3175 = vmatpush1.bf16.msra.mxu0 %v1567
    %3176 = vmatprep.subr.bf16.mxu0 %v1576
    %3177 = vmatpush1.bf16.msra.mxu0 %v1575
    %3178 = vmatprep.subr.bf16.mxu0 %v1584
    %3179 = vmatpush1.bf16.msra.mxu0 %v1583
    %3180 = vmatprep.subr.bf16.mxu0 %v1592
    %3181 = vmatpush1.bf16.msra.mxu0 %v1591
    %3182 = vmatprep.subr.bf16.mxu0 %v1600
    %3183 = vmatpush1.bf16.msra.mxu0 %v1599
    %3184 = vmatprep.subr.bf16.mxu0 %v1608
    %3185 = vmatpush1.bf16.msra.mxu0 %v1607
    %3186 = vmatprep.subr.bf16.mxu0 %v1616
    %3187 = vmatpush1.bf16.msra.mxu0 %v1615
    %3188 = vmatprep.subr.bf16.mxu0 %v1624
    %3189 = vmatpush1.bf16.msra.mxu0 %v1623
    %3190 = vmatprep.subr.bf16.mxu0 0
    %3191 = vmatpush1.bf16.msra.mxu0 0
    %3192 = vmatprep.subr.bf16.mxu0 0
    %3193 = vmatpush1.bf16.msra.mxu0 0
    %3194 = vmatprep.subr.bf16.mxu0 0
    %3195 = vmatpush1.bf16.msra.mxu0 0
    %3196 = vmatprep.subr.bf16.mxu0 0
    %3197 = vmatpush1.bf16.msra.mxu0 0
    %3198 = vmatprep.subr.bf16.mxu0 0
    %3199 = vmatpush1.bf16.msra.mxu0 0
    %3200 = vmatprep.subr.bf16.mxu0 0
    %3201 = vmatpush1.bf16.msra.mxu0 0
    %3202 = vmatprep.subr.bf16.mxu0 0
    %3203 = vmatpush1.bf16.msra.mxu0 0
    %3204 = vmatprep.subr.bf16.mxu0 0
    %3205 = vmatpush1.bf16.msra.mxu0 0
    %3206 = vmatprep.mubr.bf16.mxu0 0
    %3207 = vmatmul.mubr.bf16.gmra.mrb[0].mxu0 %v3097
    %v3208 = vpop.f32.mrb[0].mxu0
    %v3209 = vadd.f32 %v1344, %v3208
    %v3210 = vpop.f32.mrb[0].mxu0
    %v3211 = vadd.f32 %v1348, %v3210
    %v3212 = vpop.f32.mrb[0].mxu0
    %v3213 = vadd.f32 %v1344, %v3212
    %v3214 = vpop.f32.mrb[0].mxu0
    %v3215 = vadd.f32 %v1348, %v3214
    %3216 = vmatprep.mubr.bf16.mxu0 0
    %3217 = vmatmul.mubr.bf16.gmra.mrb[0].mxu0 %v3098
    %v3218 = vpop.f32.mrb[0].mxu0
    %v3219 = vadd.f32 %v1344, %v3218
    %v3220 = vpop.f32.mrb[0].mxu0
    %v3221 = vadd.f32 %v1348, %v3220
    %v3222 = vpop.f32.mrb[0].mxu0
    %v3223 = vadd.f32 %v1344, %v3222
    %v3224 = vpop.f32.mrb[0].mxu0
    %v3225 = vadd.f32 %v1348, %v3224
    %3226 = vmatprep.mubr.bf16.mxu0 0
    %3227 = vmatmul.mubr.bf16.gmra.mrb[0].mxu0 %v3099
    %v3228 = vpop.f32.mrb[0].mxu0
    %v3229 = vadd.f32 %v1344, %v3228
    %v3230 = vpop.f32.mrb[0].mxu0
    %v3231 = vadd.f32 %v1348, %v3230
    %v3232 = vpop.f32.mrb[0].mxu0
    %v3233 = vadd.f32 %v1344, %v3232
    %v3234 = vpop.f32.mrb[0].mxu0
    %v3235 = vadd.f32 %v1348, %v3234
    %3236 = vmatprep.mubr.bf16.mxu0 0
    %3237 = vmatmul.mubr.bf16.gmra.mrb[0].mxu0 %v3100
    %v3238 = vpop.f32.mrb[0].mxu0
    %v3239 = vadd.f32 %v1344, %v3238
    %v3240 = vpop.f32.mrb[0].mxu0
    %v3241 = vadd.f32 %v1348, %v3240
    %v3242 = vpop.f32.mrb[0].mxu0
    %v3243 = vadd.f32 %v1344, %v3242
    %v3244 = vpop.f32.mrb[0].mxu0
    %v3245 = vadd.f32 %v1348, %v3244
    %3246 = vdwg.mxu0
    %3247 = vmatprep.subr.bf16.mxu0 %v1570
    %3248 = vmatpush1.bf16.msra.mxu0 %v1569
    %3249 = vmatprep.subr.bf16.mxu0 %v1578
    %3250 = vmatpush1.bf16.msra.mxu0 %v1577
    %3251 = vmatprep.subr.bf16.mxu0 %v1586
    %3252 = vmatpush1.bf16.msra.mxu0 %v1585
    %3253 = vmatprep.subr.bf16.mxu0 %v1594
    %3254 = vmatpush1.bf16.msra.mxu0 %v1593
    %3255 = vmatprep.subr.bf16.mxu0 %v1602
    %3256 = vmatpush1.bf16.msra.mxu0 %v1601
    %3257 = vmatprep.subr.bf16.mxu0 %v1610
    %3258 = vmatpush1.bf16.msra.mxu0 %v1609
    %3259 = vmatprep.subr.bf16.mxu0 %v1618
    %3260 = vmatpush1.bf16.msra.mxu0 %v1617
    %3261 = vmatprep.subr.bf16.mxu0 %v1626
    %3262 = vmatpush1.bf16.msra.mxu0 %v1625
    %3263 = vmatprep.subr.bf16.mxu0 0
    %3264 = vmatpush1.bf16.msra.mxu0 0
    %3265 = vmatprep.subr.bf16.mxu0 0
    %3266 = vmatpush1.bf16.msra.mxu0 0
    %3267 = vmatprep.subr.bf16.mxu0 0
    %3268 = vmatpush1.bf16.msra.mxu0 0
    %3269 = vmatprep.subr.bf16.mxu0 0
    %3270 = vmatpush1.bf16.msra.mxu0 0
    %3271 = vmatprep.subr.bf16.mxu0 0
    %3272 = vmatpush1.bf16.msra.mxu0 0
    %3273 = vmatprep.subr.bf16.mxu0 0
    %3274 = vmatpush1.bf16.msra.mxu0 0
    %3275 = vmatprep.subr.bf16.mxu0 0
    %3276 = vmatpush1.bf16.msra.mxu0 0
    %3277 = vmatprep.subr.bf16.mxu0 0
    %3278 = vmatpush1.bf16.msra.mxu0 0
    %3279 = vmatprep.mubr.bf16.mxu0 0
    %3280 = vmatmul.mubr.bf16.gmra.mrb[0].mxu0 %v3097
    %v3281 = vpop.f32.mrb[0].mxu0
    %v3282 = vadd.f32 %v1352, %v3281
    %v3283 = vpop.f32.mrb[0].mxu0
    %v3284 = vadd.f32 %v1356, %v3283
    %v3285 = vpop.f32.mrb[0].mxu0
    %v3286 = vadd.f32 %v1352, %v3285
    %v3287 = vpop.f32.mrb[0].mxu0
    %v3288 = vadd.f32 %v1356, %v3287
    %3289 = vmatprep.mubr.bf16.mxu0 0
    %3290 = vmatmul.mubr.bf16.gmra.mrb[0].mxu0 %v3098
    %v3291 = vpop.f32.mrb[0].mxu0
    %v3292 = vadd.f32 %v1352, %v3291
    %v3293 = vpop.f32.mrb[0].mxu0
    %v3294 = vadd.f32 %v1356, %v3293
    %v3295 = vpop.f32.mrb[0].mxu0
    %v3296 = vadd.f32 %v1352, %v3295
    %v3297 = vpop.f32.mrb[0].mxu0
    %v3298 = vadd.f32 %v1356, %v3297
    %3299 = vmatprep.mubr.bf16.mxu0 0
    %3300 = vmatmul.mubr.bf16.gmra.mrb[0].mxu0 %v3099
    %v3301 = vpop.f32.mrb[0].mxu0
    %v3302 = vadd.f32 %v1352, %v3301
    %v3303 = vpop.f32.mrb[0].mxu0
    %v3304 = vadd.f32 %v1356, %v3303
    %v3305 = vpop.f32.mrb[0].mxu0
    %v3306 = vadd.f32 %v1352, %v3305
    %v3307 = vpop.f32.mrb[0].mxu0
    %v3308 = vadd.f32 %v1356, %v3307
    %3309 = vmatprep.mubr.bf16.mxu0 0
    %3310 = vmatmul.mubr.bf16.gmra.mrb[0].mxu0 %v3100
    %v3311 = vpop.f32.mrb[0].mxu0
    %v3312 = vadd.f32 %v1352, %v3311
    %v3313 = vpop.f32.mrb[0].mxu0
    %v3314 = vadd.f32 %v1356, %v3313
    %v3315 = vpop.f32.mrb[0].mxu0
    %v3316 = vadd.f32 %v1352, %v3315
    %v3317 = vpop.f32.mrb[0].mxu0
    %v3318 = vadd.f32 %v1356, %v3317
    %3319 = vdwg.mxu0
    %3320 = vmatprep.subr.bf16.mxu0 %v1572
    %3321 = vmatpush1.bf16.msra.mxu0 %v1571
    %3322 = vmatprep.subr.bf16.mxu0 %v1580
    %3323 = vmatpush1.bf16.msra.mxu0 %v1579
    %3324 = vmatprep.subr.bf16.mxu0 %v1588
    %3325 = vmatpush1.bf16.msra.mxu0 %v1587
    %3326 = vmatprep.subr.bf16.mxu0 %v1596
    %3327 = vmatpush1.bf16.msra.mxu0 %v1595
    %3328 = vmatprep.subr.bf16.mxu0 %v1604
    %3329 = vmatpush1.bf16.msra.mxu0 %v1603
    %3330 = vmatprep.subr.bf16.mxu0 %v1612
    %3331 = vmatpush1.bf16.msra.mxu0 %v1611
    %3332 = vmatprep.subr.bf16.mxu0 %v1620
    %3333 = vmatpush1.bf16.msra.mxu0 %v1619
    %3334 = vmatprep.subr.bf16.mxu0 %v1628
    %3335 = vmatpush1.bf16.msra.mxu0 %v1627
    %3336 = vmatprep.subr.bf16.mxu0 0
    %3337 = vmatpush1.bf16.msra.mxu0 0
    %3338 = vmatprep.subr.bf16.mxu0 0
    %3339 = vmatpush1.bf16.msra.mxu0 0
    %3340 = vmatprep.subr.bf16.mxu0 0
    %3341 = vmatpush1.bf16.msra.mxu0 0
    %3342 = vmatprep.subr.bf16.mxu0 0
    %3343 = vmatpush1.bf16.msra.mxu0 0
    %3344 = vmatprep.subr.bf16.mxu0 0
    %3345 = vmatpush1.bf16.msra.mxu0 0
    %3346 = vmatprep.subr.bf16.mxu0 0
    %3347 = vmatpush1.bf16.msra.mxu0 0
    %3348 = vmatprep.subr.bf16.mxu0 0
    %3349 = vmatpush1.bf16.msra.mxu0 0
    %3350 = vmatprep.subr.bf16.mxu0 0
    %3351 = vmatpush1.bf16.msra.mxu0 0
    %3352 = vmatprep.mubr.bf16.mxu0 0
    %3353 = vmatmul.mubr.bf16.gmra.mrb[0].mxu0 %v3097
    %v3354 = vpop.f32.mrb[0].mxu0
    %v3355 = vadd.f32 %v1360, %v3354
    %v3356 = vpop.f32.mrb[0].mxu0
    %v3357 = vadd.f32 %v1364, %v3356
    %v3358 = vpop.f32.mrb[0].mxu0
    %v3359 = vadd.f32 %v1360, %v3358
    %v3360 = vpop.f32.mrb[0].mxu0
    %v3361 = vadd.f32 %v1364, %v3360
    %3362 = vmatprep.mubr.bf16.mxu0 0
    %3363 = vmatmul.mubr.bf16.gmra.mrb[0].mxu0 %v3098
    %v3364 = vpop.f32.mrb[0].mxu0
    %v3365 = vadd.f32 %v1360, %v3364
    %v3366 = vpop.f32.mrb[0].mxu0
    %v3367 = vadd.f32 %v1364, %v3366
    %v3368 = vpop.f32.mrb[0].mxu0
    %v3369 = vadd.f32 %v1360, %v3368
    %v3370 = vpop.f32.mrb[0].mxu0
    %v3371 = vadd.f32 %v1364, %v3370
    %3372 = vmatprep.mubr.bf16.mxu0 0
    %3373 = vmatmul.mubr.bf16.gmra.mrb[0].mxu0 %v3099
    %v3374 = vpop.f32.mrb[0].mxu0
    %v3375 = vadd.f32 %v1360, %v3374
    %v3376 = vpop.f32.mrb[0].mxu0
    %v3377 = vadd.f32 %v1364, %v3376
    %v3378 = vpop.f32.mrb[0].mxu0
    %v3379 = vadd.f32 %v1360, %v3378
    %v3380 = vpop.f32.mrb[0].mxu0
    %v3381 = vadd.f32 %v1364, %v3380
    %3382 = vmatprep.mubr.bf16.mxu0 0
    %3383 = vmatmul.mubr.bf16.gmra.mrb[0].mxu0 %v3100
    %v3384 = vpop.f32.mrb[0].mxu0
    %v3385 = vadd.f32 %v1360, %v3384
    %v3386 = vpop.f32.mrb[0].mxu0
    %v3387 = vadd.f32 %v1364, %v3386
    %v3388 = vpop.f32.mrb[0].mxu0
    %v3389 = vadd.f32 %v1360, %v3388
    %v3390 = vpop.f32.mrb[0].mxu0
    %v3391 = vadd.f32 %v1364, %v3390
    %3392 = vdwg.mxu0
    %v3393 = vmax.f32 %v3136, 0.0
    %v3394 = vmax.f32 %v3138, 0.0
    %v3395 = vmax.f32 %v3209, 0.0
    %v3396 = vmax.f32 %v3211, 0.0
    %v3397 = vmax.f32 %v3282, 0.0
    %v3398 = vmax.f32 %v3284, 0.0
    %v3399 = vmax.f32 %v3355, 0.0
    %v3400 = vmax.f32 %v3357, 0.0
    %v3401 = vmax.f32 %v3140, 0.0
    %v3402 = vmax.f32 %v3142, 0.0
    %v3403 = vmax.f32 %v3213, 0.0
    %v3404 = vmax.f32 %v3215, 0.0
    %v3405 = vmax.f32 %v3286, 0.0
    %v3406 = vmax.f32 %v3288, 0.0
    %v3407 = vmax.f32 %v3359, 0.0
    %v3408 = vmax.f32 %v3361, 0.0
    %v3409 = vmax.f32 %v3146, 0.0
    %v3410 = vmax.f32 %v3148, 0.0
    %v3411 = vmax.f32 %v3219, 0.0
    %v3412 = vmax.f32 %v3221, 0.0
    %v3413 = vmax.f32 %v3292, 0.0
    %v3414 = vmax.f32 %v3294, 0.0
    %v3415 = vmax.f32 %v3365, 0.0
    %v3416 = vmax.f32 %v3367, 0.0
    %v3417 = vmax.f32 %v3150, 0.0
    %v3418 = vmax.f32 %v3152, 0.0
    %v3419 = vmax.f32 %v3223, 0.0
    %v3420 = vmax.f32 %v3225, 0.0
    %v3421 = vmax.f32 %v3296, 0.0
    %v3422 = vmax.f32 %v3298, 0.0
    %v3423 = vmax.f32 %v3369, 0.0
    %v3424 = vmax.f32 %v3371, 0.0
    %v3425 = vmax.f32 %v3156, 0.0
    %v3426 = vmax.f32 %v3158, 0.0
    %v3427 = vmax.f32 %v3229, 0.0
    %v3428 = vmax.f32 %v3231, 0.0
    %v3429 = vmax.f32 %v3302, 0.0
    %v3430 = vmax.f32 %v3304, 0.0
    %v3431 = vmax.f32 %v3375, 0.0
    %v3432 = vmax.f32 %v3377, 0.0
    %v3433 = vmax.f32 %v3160, 0.0
    %v3434 = vmax.f32 %v3162, 0.0
    %v3435 = vmax.f32 %v3233, 0.0
    %v3436 = vmax.f32 %v3235, 0.0
    %v3437 = vmax.f32 %v3306, 0.0
    %v3438 = vmax.f32 %v3308, 0.0
    %v3439 = vmax.f32 %v3379, 0.0
    %v3440 = vmax.f32 %v3381, 0.0
    %v3441 = vmax.f32 %v3166, 0.0
    %v3442 = vmax.f32 %v3168, 0.0
    %v3443 = vmax.f32 %v3239, 0.0
    %v3444 = vmax.f32 %v3241, 0.0
    %v3445 = vmax.f32 %v3312, 0.0
    %v3446 = vmax.f32 %v3314, 0.0
    %v3447 = vmax.f32 %v3385, 0.0
    %v3448 = vmax.f32 %v3387, 0.0
    %v3449 = vmax.f32 %v3170, 0.0
    %v3450 = vmax.f32 %v3172, 0.0
    %v3451 = vmax.f32 %v3243, 0.0
    %v3452 = vmax.f32 %v3245, 0.0
    %v3453 = vmax.f32 %v3316, 0.0
    %v3454 = vmax.f32 %v3318, 0.0
    %v3455 = vmax.f32 %v3389, 0.0
    %v3456 = vmax.f32 %v3391, 0.0
    %v3457 = vmax.f32 %v3393, %v3401
    %v3458 = vmax.f32 %v3457, %v3409
    %v3459 = vmax.f32 %v3458, %v3417
    %v3460 = vmax.f32 %v3459, %v3425
    %v3461 = vmax.f32 %v3460, %v3433
    %v3462 = vmax.f32 %v3461, %v3441
    %v3463 = vmax.f32 %v3462, %v3449
    %v3464 = vrot.slane %v3463, 4
    %v3465 = vmax.f32 %v3463, %v3464
    %v3466 = vrot.slane %v3465, 2
    %v3467 = vmax.f32 %v3465, %v3466
    %v3468 = vrot.slane %v3467, 1
    %v3469 = vmax.f32 %v3467, %v3468
    %v3470 = vmax.f32 %v3394, %v3402
    %v3471 = vmax.f32 %v3470, %v3410
    %v3472 = vmax.f32 %v3471, %v3418
    %v3473 = vmax.f32 %v3472, %v3426
    %v3474 = vmax.f32 %v3473, %v3434
    %v3475 = vmax.f32 %v3474, %v3442
    %v3476 = vmax.f32 %v3475, %v3450
    %v3477 = vrot.slane %v3476, 4
    %v3478 = vmax.f32 %v3476, %v3477
    %v3479 = vrot.slane %v3478, 2
    %v3480 = vmax.f32 %v3478, %v3479
    %v3481 = vrot.slane %v3480, 1
    %v3482 = vmax.f32 %v3480, %v3481
    %v3483 = vmax.f32 %v3395, %v3403
    %v3484 = vmax.f32 %v3483, %v3411
    %v3485 = vmax.f32 %v3484, %v3419
    %v3486 = vmax.f32 %v3485, %v3427
    %v3487 = vmax.f32 %v3486, %v3435
    %v3488 = vmax.f32 %v3487, %v3443
    %v3489 = vmax.f32 %v3488, %v3451
    %v3490 = vrot.slane %v3489, 4
    %v3491 = vmax.f32 %v3489, %v3490
    %v3492 = vrot.slane %v3491, 2
    %v3493 = vmax.f32 %v3491, %v3492
    %v3494 = vrot.slane %v3493, 1
    %v3495 = vmax.f32 %v3493, %v3494
    %v3496 = vmax.f32 %v3396, %v3404
    %v3497 = vmax.f32 %v3496, %v3412
    %v3498 = vmax.f32 %v3497, %v3420
    %v3499 = vmax.f32 %v3498, %v3428
    %v3500 = vmax.f32 %v3499, %v3436
    %v3501 = vmax.f32 %v3500, %v3444
    %v3502 = vmax.f32 %v3501, %v3452
    %v3503 = vrot.slane %v3502, 4
    %v3504 = vmax.f32 %v3502, %v3503
    %v3505 = vrot.slane %v3504, 2
    %v3506 = vmax.f32 %v3504, %v3505
    %v3507 = vrot.slane %v3506, 1
    %v3508 = vmax.f32 %v3506, %v3507
    %v3509 = vmax.f32 %v3397, %v3405
    %v3510 = vmax.f32 %v3509, %v3413
    %v3511 = vmax.f32 %v3510, %v3421
    %v3512 = vmax.f32 %v3511, %v3429
    %v3513 = vmax.f32 %v3512, %v3437
    %v3514 = vmax.f32 %v3513, %v3445
    %v3515 = vmax.f32 %v3514, %v3453
    %v3516 = vrot.slane %v3515, 4
    %v3517 = vmax.f32 %v3515, %v3516
    %v3518 = vrot.slane %v3517, 2
    %v3519 = vmax.f32 %v3517, %v3518
    %v3520 = vrot.slane %v3519, 1
    %v3521 = vmax.f32 %v3519, %v3520
    %v3522 = vmax.f32 %v3398, %v3406
    %v3523 = vmax.f32 %v3522, %v3414
    %v3524 = vmax.f32 %v3523, %v3422
    %v3525 = vmax.f32 %v3524, %v3430
    %v3526 = vmax.f32 %v3525, %v3438
    %v3527 = vmax.f32 %v3526, %v3446
    %v3528 = vmax.f32 %v3527, %v3454
    %v3529 = vrot.slane %v3528, 4
    %v3530 = vmax.f32 %v3528, %v3529
    %v3531 = vrot.slane %v3530, 2
    %v3532 = vmax.f32 %v3530, %v3531
    %v3533 = vrot.slane %v3532, 1
    %v3534 = vmax.f32 %v3532, %v3533
    %v3535 = vmax.f32 %v3399, %v3407
    %v3536 = vmax.f32 %v3535, %v3415
    %v3537 = vmax.f32 %v3536, %v3423
    %v3538 = vmax.f32 %v3537, %v3431
    %v3539 = vmax.f32 %v3538, %v3439
    %v3540 = vmax.f32 %v3539, %v3447
    %v3541 = vmax.f32 %v3540, %v3455
    %v3542 = vrot.slane %v3541, 4
    %v3543 = vmax.f32 %v3541, %v3542
    %v3544 = vrot.slane %v3543, 2
    %v3545 = vmax.f32 %v3543, %v3544
    %v3546 = vrot.slane %v3545, 1
    %v3547 = vmax.f32 %v3545, %v3546
    %v3548 = vmax.f32 %v3400, %v3408
    %v3549 = vmax.f32 %v3548, %v3416
    %v3550 = vmax.f32 %v3549, %v3424
    %v3551 = vmax.f32 %v3550, %v3432
    %v3552 = vmax.f32 %v3551, %v3440
    %v3553 = vmax.f32 %v3552, %v3448
    %v3554 = vmax.f32 %v3553, %v3456
    %v3555 = vrot.slane %v3554, 4
    %v3556 = vmax.f32 %v3554, %v3555
    %v3557 = vrot.slane %v3556, 2
    %v3558 = vmax.f32 %v3556, %v3557
    %v3559 = vrot.slane %v3558, 1
    %v3560 = vmax.f32 %v3558, %v3559
    %v3561 = vmax.f32 %v3089, %v3469
    %v3562 = vmax.f32 %v3090, %v3482
    %v3563 = vmax.f32 %v3091, %v3495
    %v3564 = vmax.f32 %v3092, %v3508
    %v3565 = vmax.f32 %v3093, %v3521
    %v3566 = vmax.f32 %v3094, %v3534
    %v3567 = vmax.f32 %v3095, %v3547
    %v3568 = vmax.f32 %v3096, %v3560
    %s3569 = smul.u32 4, 128
    %s3570 = smul.u32 %s3569, 4
    %s3571 = sshll.u32 %s3570, 4
    %3572 = dma.done [#allocation3], %s3571
    %v3573 = vpack.c.bf16 %v3561, %v3561
    %v3574 = vpack.c.bf16 %v3562, %v3562
    %v3575 = vpack.c.bf16 %v3563, %v3563
    %v3576 = vpack.c.bf16 %v3564, %v3564
    %v3577 = vpack.c.bf16 %v3565, %v3565
    %v3578 = vpack.c.bf16 %v3566, %v3566
    %v3579 = vpack.c.bf16 %v3567, %v3567
    %v3580 = vpack.c.bf16 %v3568, %v3568
    %v3581 = vld [vmem:[#allocation2] sm:$0xff]
    %v3582 = vld [vmem:[#allocation2 + $0x8] sm:$0xff]
    %v3583 = vld [vmem:[#allocation2 + $0x10] sm:$0xff]
    %v3584 = vld [vmem:[#allocation2 + $0x18] sm:$0xff]
    %v3585 = vld [vmem:[#allocation2 + $0x20] sm:$0xff]
    %v3586 = vld [vmem:[#allocation2 + $0x28] sm:$0xff]
    %v3587 = vld [vmem:[#allocation2 + $0x30] sm:$0xff]
    %v3588 = vld [vmem:[#allocation2 + $0x38] sm:$0xff]
    %v3589 = vld [vmem:[#allocation2 + $0x40] sm:$0xff]
    %v3590 = vld [vmem:[#allocation2 + $0x48] sm:$0xff]
    %v3591 = vld [vmem:[#allocation2 + $0x50] sm:$0xff]
    %v3592 = vld [vmem:[#allocation2 + $0x58] sm:$0xff]
    %v3593 = vld [vmem:[#allocation2 + $0x60] sm:$0xff]
    %v3594 = vld [vmem:[#allocation2 + $0x68] sm:$0xff]
    %v3595 = vld [vmem:[#allocation2 + $0x70] sm:$0xff]
    %v3596 = vld [vmem:[#allocation2 + $0x78] sm:$0xff]
    %v3597 = vld [vmem:[#allocation2 + $0x80] sm:$0xff]
    %v3598 = vld [vmem:[#allocation2 + $0x88] sm:$0xff]
    %v3599 = vld [vmem:[#allocation2 + $0x90] sm:$0xff]
    %v3600 = vld [vmem:[#allocation2 + $0x98] sm:$0xff]
    %v3601 = vld [vmem:[#allocation2 + $0xa0] sm:$0xff]
    %v3602 = vld [vmem:[#allocation2 + $0xa8] sm:$0xff]
    %v3603 = vld [vmem:[#allocation2 + $0xb0] sm:$0xff]
    %v3604 = vld [vmem:[#allocation2 + $0xb8] sm:$0xff]
    %v3605 = vld [vmem:[#allocation2 + $0xc0] sm:$0xff]
    %v3606 = vld [vmem:[#allocation2 + $0xc8] sm:$0xff]
    %v3607 = vld [vmem:[#allocation2 + $0xd0] sm:$0xff]
    %v3608 = vld [vmem:[#allocation2 + $0xd8] sm:$0xff]
    %v3609 = vld [vmem:[#allocation2 + $0xe0] sm:$0xff]
    %v3610 = vld [vmem:[#allocation2 + $0xe8] sm:$0xff]
    %v3611 = vld [vmem:[#allocation2 + $0xf0] sm:$0xff]
    %v3612 = vld [vmem:[#allocation2 + $0xf8] sm:$0xff]
    %v3613 = vld [vmem:[#allocation2 + $0x100] sm:$0xff]
    %v3614 = vld [vmem:[#allocation2 + $0x108] sm:$0xff]
    %v3615 = vld [vmem:[#allocation2 + $0x110] sm:$0xff]
    %v3616 = vld [vmem:[#allocation2 + $0x118] sm:$0xff]
    %v3617 = vld [vmem:[#allocation2 + $0x120] sm:$0xff]
    %v3618 = vld [vmem:[#allocation2 + $0x128] sm:$0xff]
    %v3619 = vld [vmem:[#allocation2 + $0x130] sm:$0xff]
    %v3620 = vld [vmem:[#allocation2 + $0x138] sm:$0xff]
    %v3621 = vld [vmem:[#allocation2 + $0x140] sm:$0xff]
    %v3622 = vld [vmem:[#allocation2 + $0x148] sm:$0xff]
    %v3623 = vld [vmem:[#allocation2 + $0x150] sm:$0xff]
    %v3624 = vld [vmem:[#allocation2 + $0x158] sm:$0xff]
    %v3625 = vld [vmem:[#allocation2 + $0x160] sm:$0xff]
    %v3626 = vld [vmem:[#allocation2 + $0x168] sm:$0xff]
    %v3627 = vld [vmem:[#allocation2 + $0x170] sm:$0xff]
    %v3628 = vld [vmem:[#allocation2 + $0x178] sm:$0xff]
    %v3629 = vld [vmem:[#allocation2 + $0x180] sm:$0xff]
    %v3630 = vld [vmem:[#allocation2 + $0x188] sm:$0xff]
    %v3631 = vld [vmem:[#allocation2 + $0x190] sm:$0xff]
    %v3632 = vld [vmem:[#allocation2 + $0x198] sm:$0xff]
    %v3633 = vld [vmem:[#allocation2 + $0x1a0] sm:$0xff]
    %v3634 = vld [vmem:[#allocation2 + $0x1a8] sm:$0xff]
    %v3635 = vld [vmem:[#allocation2 + $0x1b0] sm:$0xff]
    %v3636 = vld [vmem:[#allocation2 + $0x1b8] sm:$0xff]
    %v3637 = vld [vmem:[#allocation2 + $0x1c0] sm:$0xff]
    %v3638 = vld [vmem:[#allocation2 + $0x1c8] sm:$0xff]
    %v3639 = vld [vmem:[#allocation2 + $0x1d0] sm:$0xff]
    %v3640 = vld [vmem:[#allocation2 + $0x1d8] sm:$0xff]
    %v3641 = vld [vmem:[#allocation2 + $0x1e0] sm:$0xff]
    %v3642 = vld [vmem:[#allocation2 + $0x1e8] sm:$0xff]
    %v3643 = vld [vmem:[#allocation2 + $0x1f0] sm:$0xff]
    %v3644 = vld [vmem:[#allocation2 + $0x1f8] sm:$0xff]
    %v3645 = vld [vmem:[#allocation2 + $0x200] sm:$0xff]
    %v3646 = vld [vmem:[#allocation2 + $0x208] sm:$0xff]
    %v3647 = vld [vmem:[#allocation2 + $0x210] sm:$0xff]
    %v3648 = vld [vmem:[#allocation2 + $0x218] sm:$0xff]
    %v3649 = vld [vmem:[#allocation2 + $0x220] sm:$0xff]
    %v3650 = vld [vmem:[#allocation2 + $0x228] sm:$0xff]
    %v3651 = vld [vmem:[#allocation2 + $0x230] sm:$0xff]
    %v3652 = vld [vmem:[#allocation2 + $0x238] sm:$0xff]
    %v3653 = vld [vmem:[#allocation2 + $0x240] sm:$0xff]
    %v3654 = vld [vmem:[#allocation2 + $0x248] sm:$0xff]
    %v3655 = vld [vmem:[#allocation2 + $0x250] sm:$0xff]
    %v3656 = vld [vmem:[#allocation2 + $0x258] sm:$0xff]
    %v3657 = vld [vmem:[#allocation2 + $0x260] sm:$0xff]
    %v3658 = vld [vmem:[#allocation2 + $0x268] sm:$0xff]
    %v3659 = vld [vmem:[#allocation2 + $0x270] sm:$0xff]
    %v3660 = vld [vmem:[#allocation2 + $0x278] sm:$0xff]
    %v3661 = vld [vmem:[#allocation2 + $0x280] sm:$0xff]
    %v3662 = vld [vmem:[#allocation2 + $0x288] sm:$0xff]
    %v3663 = vld [vmem:[#allocation2 + $0x290] sm:$0xff]
    %v3664 = vld [vmem:[#allocation2 + $0x298] sm:$0xff]
    %v3665 = vld [vmem:[#allocation2 + $0x2a0] sm:$0xff]
    %v3666 = vld [vmem:[#allocation2 + $0x2a8] sm:$0xff]
    %v3667 = vld [vmem:[#allocation2 + $0x2b0] sm:$0xff]
    %v3668 = vld [vmem:[#allocation2 + $0x2b8] sm:$0xff]
    %v3669 = vld [vmem:[#allocation2 + $0x2c0] sm:$0xff]
    %v3670 = vld [vmem:[#allocation2 + $0x2c8] sm:$0xff]
    %v3671 = vld [vmem:[#allocation2 + $0x2d0] sm:$0xff]
    %v3672 = vld [vmem:[#allocation2 + $0x2d8] sm:$0xff]
    %v3673 = vld [vmem:[#allocation2 + $0x2e0] sm:$0xff]
    %v3674 = vld [vmem:[#allocation2 + $0x2e8] sm:$0xff]
    %v3675 = vld [vmem:[#allocation2 + $0x2f0] sm:$0xff]
    %v3676 = vld [vmem:[#allocation2 + $0x2f8] sm:$0xff]
    %v3677 = vld [vmem:[#allocation2 + $0x300] sm:$0xff]
    %v3678 = vld [vmem:[#allocation2 + $0x308] sm:$0xff]
    %v3679 = vld [vmem:[#allocation2 + $0x310] sm:$0xff]
    %v3680 = vld [vmem:[#allocation2 + $0x318] sm:$0xff]
    %v3681 = vld [vmem:[#allocation2 + $0x320] sm:$0xff]
    %v3682 = vld [vmem:[#allocation2 + $0x328] sm:$0xff]
    %v3683 = vld [vmem:[#allocation2 + $0x330] sm:$0xff]
    %v3684 = vld [vmem:[#allocation2 + $0x338] sm:$0xff]
    %v3685 = vld [vmem:[#allocation2 + $0x340] sm:$0xff]
    %v3686 = vld [vmem:[#allocation2 + $0x348] sm:$0xff]
    %v3687 = vld [vmem:[#allocation2 + $0x350] sm:$0xff]
    %v3688 = vld [vmem:[#allocation2 + $0x358] sm:$0xff]
    %v3689 = vld [vmem:[#allocation2 + $0x360] sm:$0xff]
    %v3690 = vld [vmem:[#allocation2 + $0x368] sm:$0xff]
    %v3691 = vld [vmem:[#allocation2 + $0x370] sm:$0xff]
    %v3692 = vld [vmem:[#allocation2 + $0x378] sm:$0xff]
    %v3693 = vld [vmem:[#allocation2 + $0x380] sm:$0xff]
    %v3694 = vld [vmem:[#allocation2 + $0x388] sm:$0xff]
    %v3695 = vld [vmem:[#allocation2 + $0x390] sm:$0xff]
    %v3696 = vld [vmem:[#allocation2 + $0x398] sm:$0xff]
    %v3697 = vld [vmem:[#allocation2 + $0x3a0] sm:$0xff]
    %v3698 = vld [vmem:[#allocation2 + $0x3a8] sm:$0xff]
    %v3699 = vld [vmem:[#allocation2 + $0x3b0] sm:$0xff]
    %v3700 = vld [vmem:[#allocation2 + $0x3b8] sm:$0xff]
    %v3701 = vld [vmem:[#allocation2 + $0x3c0] sm:$0xff]
    %v3702 = vld [vmem:[#allocation2 + $0x3c8] sm:$0xff]
    %v3703 = vld [vmem:[#allocation2 + $0x3d0] sm:$0xff]
    %v3704 = vld [vmem:[#allocation2 + $0x3d8] sm:$0xff]
    %v3705 = vld [vmem:[#allocation2 + $0x3e0] sm:$0xff]
    %v3706 = vld [vmem:[#allocation2 + $0x3e8] sm:$0xff]
    %v3707 = vld [vmem:[#allocation2 + $0x3f0] sm:$0xff]
    %v3708 = vld [vmem:[#allocation2 + $0x3f8] sm:$0xff]
    %v3709 = vld [vmem:[#allocation2 + $0x400] sm:$0xff]
    %v3710 = vld [vmem:[#allocation2 + $0x408] sm:$0xff]
    %v3711 = vld [vmem:[#allocation2 + $0x410] sm:$0xff]
    %v3712 = vld [vmem:[#allocation2 + $0x418] sm:$0xff]
    %v3713 = vld [vmem:[#allocation2 + $0x420] sm:$0xff]
    %v3714 = vld [vmem:[#allocation2 + $0x428] sm:$0xff]
    %v3715 = vld [vmem:[#allocation2 + $0x430] sm:$0xff]
    %v3716 = vld [vmem:[#allocation2 + $0x438] sm:$0xff]
    %v3717 = vld [vmem:[#allocation2 + $0x440] sm:$0xff]
    %v3718 = vld [vmem:[#allocation2 + $0x448] sm:$0xff]
    %v3719 = vld [vmem:[#allocation2 + $0x450] sm:$0xff]
    %v3720 = vld [vmem:[#allocation2 + $0x458] sm:$0xff]
    %v3721 = vld [vmem:[#allocation2 + $0x460] sm:$0xff]
    %v3722 = vld [vmem:[#allocation2 + $0x468] sm:$0xff]
    %v3723 = vld [vmem:[#allocation2 + $0x470] sm:$0xff]
    %v3724 = vld [vmem:[#allocation2 + $0x478] sm:$0xff]
    %v3725 = vld [vmem:[#allocation2 + $0x480] sm:$0xff]
    %v3726 = vld [vmem:[#allocation2 + $0x488] sm:$0xff]
    %v3727 = vld [vmem:[#allocation2 + $0x490] sm:$0xff]
    %v3728 = vld [vmem:[#allocation2 + $0x498] sm:$0xff]
    %v3729 = vld [vmem:[#allocation2 + $0x4a0] sm:$0xff]
    %v3730 = vld [vmem:[#allocation2 + $0x4a8] sm:$0xff]
    %v3731 = vld [vmem:[#allocation2 + $0x4b0] sm:$0xff]
    %v3732 = vld [vmem:[#allocation2 + $0x4b8] sm:$0xff]
    %v3733 = vld [vmem:[#allocation2 + $0x4c0] sm:$0xff]
    %v3734 = vld [vmem:[#allocation2 + $0x4c8] sm:$0xff]
    %v3735 = vld [vmem:[#allocation2 + $0x4d0] sm:$0xff]
    %v3736 = vld [vmem:[#allocation2 + $0x4d8] sm:$0xff]
    %v3737 = vld [vmem:[#allocation2 + $0x4e0] sm:$0xff]
    %v3738 = vld [vmem:[#allocation2 + $0x4e8] sm:$0xff]
    %v3739 = vld [vmem:[#allocation2 + $0x4f0] sm:$0xff]
    %v3740 = vld [vmem:[#allocation2 + $0x4f8] sm:$0xff]
    %v3741 = vld [vmem:[#allocation2 + $0x500] sm:$0xff]
    %v3742 = vld [vmem:[#allocation2 + $0x508] sm:$0xff]
    %v3743 = vld [vmem:[#allocation2 + $0x510] sm:$0xff]
    %v3744 = vld [vmem:[#allocation2 + $0x518] sm:$0xff]
    %v3745 = vld [vmem:[#allocation2 + $0x520] sm:$0xff]
    %v3746 = vld [vmem:[#allocation2 + $0x528] sm:$0xff]
    %v3747 = vld [vmem:[#allocation2 + $0x530] sm:$0xff]
    %v3748 = vld [vmem:[#allocation2 + $0x538] sm:$0xff]
    %v3749 = vld [vmem:[#allocation2 + $0x540] sm:$0xff]
    %v3750 = vld [vmem:[#allocation2 + $0x548] sm:$0xff]
    %v3751 = vld [vmem:[#allocation2 + $0x550] sm:$0xff]
    %v3752 = vld [vmem:[#allocation2 + $0x558] sm:$0xff]
    %v3753 = vld [vmem:[#allocation2 + $0x560] sm:$0xff]
    %v3754 = vld [vmem:[#allocation2 + $0x568] sm:$0xff]
    %v3755 = vld [vmem:[#allocation2 + $0x570] sm:$0xff]
    %v3756 = vld [vmem:[#allocation2 + $0x578] sm:$0xff]
    %v3757 = vld [vmem:[#allocation2 + $0x580] sm:$0xff]
    %v3758 = vld [vmem:[#allocation2 + $0x588] sm:$0xff]
    %v3759 = vld [vmem:[#allocation2 + $0x590] sm:$0xff]
    %v3760 = vld [vmem:[#allocation2 + $0x598] sm:$0xff]
    %v3761 = vld [vmem:[#allocation2 + $0x5a0] sm:$0xff]
    %v3762 = vld [vmem:[#allocation2 + $0x5a8] sm:$0xff]
    %v3763 = vld [vmem:[#allocation2 + $0x5b0] sm:$0xff]
    %v3764 = vld [vmem:[#allocation2 + $0x5b8] sm:$0xff]
    %v3765 = vld [vmem:[#allocation2 + $0x5c0] sm:$0xff]
    %v3766 = vld [vmem:[#allocation2 + $0x5c8] sm:$0xff]
    %v3767 = vld [vmem:[#allocation2 + $0x5d0] sm:$0xff]
    %v3768 = vld [vmem:[#allocation2 + $0x5d8] sm:$0xff]
    %v3769 = vld [vmem:[#allocation2 + $0x5e0] sm:$0xff]
    %v3770 = vld [vmem:[#allocation2 + $0x5e8] sm:$0xff]
    %v3771 = vld [vmem:[#allocation2 + $0x5f0] sm:$0xff]
    %v3772 = vld [vmem:[#allocation2 + $0x5f8] sm:$0xff]
    %v3773 = vld [vmem:[#allocation2 + $0x600] sm:$0xff]
    %v3774 = vld [vmem:[#allocation2 + $0x608] sm:$0xff]
    %v3775 = vld [vmem:[#allocation2 + $0x610] sm:$0xff]
    %v3776 = vld [vmem:[#allocation2 + $0x618] sm:$0xff]
    %v3777 = vld [vmem:[#allocation2 + $0x620] sm:$0xff]
    %v3778 = vld [vmem:[#allocation2 + $0x628] sm:$0xff]
    %v3779 = vld [vmem:[#allocation2 + $0x630] sm:$0xff]
    %v3780 = vld [vmem:[#allocation2 + $0x638] sm:$0xff]
    %v3781 = vld [vmem:[#allocation2 + $0x640] sm:$0xff]
    %v3782 = vld [vmem:[#allocation2 + $0x648] sm:$0xff]
    %v3783 = vld [vmem:[#allocation2 + $0x650] sm:$0xff]
    %v3784 = vld [vmem:[#allocation2 + $0x658] sm:$0xff]
    %v3785 = vld [vmem:[#allocation2 + $0x660] sm:$0xff]
    %v3786 = vld [vmem:[#allocation2 + $0x668] sm:$0xff]
    %v3787 = vld [vmem:[#allocation2 + $0x670] sm:$0xff]
    %v3788 = vld [vmem:[#allocation2 + $0x678] sm:$0xff]
    %v3789 = vld [vmem:[#allocation2 + $0x680] sm:$0xff]
    %v3790 = vld [vmem:[#allocation2 + $0x688] sm:$0xff]
    %v3791 = vld [vmem:[#allocation2 + $0x690] sm:$0xff]
    %v3792 = vld [vmem:[#allocation2 + $0x698] sm:$0xff]
    %v3793 = vld [vmem:[#allocation2 + $0x6a0] sm:$0xff]
    %v3794 = vld [vmem:[#allocation2 + $0x6a8] sm:$0xff]
    %v3795 = vld [vmem:[#allocation2 + $0x6b0] sm:$0xff]
    %v3796 = vld [vmem:[#allocation2 + $0x6b8] sm:$0xff]
    %v3797 = vld [vmem:[#allocation2 + $0x6c0] sm:$0xff]
    %v3798 = vld [vmem:[#allocation2 + $0x6c8] sm:$0xff]
    %v3799 = vld [vmem:[#allocation2 + $0x6d0] sm:$0xff]
    %v3800 = vld [vmem:[#allocation2 + $0x6d8] sm:$0xff]
    %v3801 = vld [vmem:[#allocation2 + $0x6e0] sm:$0xff]
    %v3802 = vld [vmem:[#allocation2 + $0x6e8] sm:$0xff]
    %v3803 = vld [vmem:[#allocation2 + $0x6f0] sm:$0xff]
    %v3804 = vld [vmem:[#allocation2 + $0x6f8] sm:$0xff]
    %v3805 = vld [vmem:[#allocation2 + $0x700] sm:$0xff]
    %v3806 = vld [vmem:[#allocation2 + $0x708] sm:$0xff]
    %v3807 = vld [vmem:[#allocation2 + $0x710] sm:$0xff]
    %v3808 = vld [vmem:[#allocation2 + $0x718] sm:$0xff]
    %v3809 = vld [vmem:[#allocation2 + $0x720] sm:$0xff]
    %v3810 = vld [vmem:[#allocation2 + $0x728] sm:$0xff]
    %v3811 = vld [vmem:[#allocation2 + $0x730] sm:$0xff]
    %v3812 = vld [vmem:[#allocation2 + $0x738] sm:$0xff]
    %v3813 = vld [vmem:[#allocation2 + $0x740] sm:$0xff]
    %v3814 = vld [vmem:[#allocation2 + $0x748] sm:$0xff]
    %v3815 = vld [vmem:[#allocation2 + $0x750] sm:$0xff]
    %v3816 = vld [vmem:[#allocation2 + $0x758] sm:$0xff]
    %v3817 = vld [vmem:[#allocation2 + $0x760] sm:$0xff]
    %v3818 = vld [vmem:[#allocation2 + $0x768] sm:$0xff]
    %v3819 = vld [vmem:[#allocation2 + $0x770] sm:$0xff]
    %v3820 = vld [vmem:[#allocation2 + $0x778] sm:$0xff]
    %v3821 = vld [vmem:[#allocation2 + $0x780] sm:$0xff]
    %v3822 = vld [vmem:[#allocation2 + $0x788] sm:$0xff]
    %v3823 = vld [vmem:[#allocation2 + $0x790] sm:$0xff]
    %v3824 = vld [vmem:[#allocation2 + $0x798] sm:$0xff]
    %v3825 = vld [vmem:[#allocation2 + $0x7a0] sm:$0xff]
    %v3826 = vld [vmem:[#allocation2 + $0x7a8] sm:$0xff]
    %v3827 = vld [vmem:[#allocation2 + $0x7b0] sm:$0xff]
    %v3828 = vld [vmem:[#allocation2 + $0x7b8] sm:$0xff]
    %v3829 = vld [vmem:[#allocation2 + $0x7c0] sm:$0xff]
    %v3830 = vld [vmem:[#allocation2 + $0x7c8] sm:$0xff]
    %v3831 = vld [vmem:[#allocation2 + $0x7d0] sm:$0xff]
    %v3832 = vld [vmem:[#allocation2 + $0x7d8] sm:$0xff]
    %v3833 = vld [vmem:[#allocation2 + $0x7e0] sm:$0xff]
    %v3834 = vld [vmem:[#allocation2 + $0x7e8] sm:$0xff]
    %v3835 = vld [vmem:[#allocation2 + $0x7f0] sm:$0xff]
    %v3836 = vld [vmem:[#allocation2 + $0x7f8] sm:$0xff]
    %s3837 = scalar_lea.vmem %s7, 5
    %v3838 = vld [vmem:[%s3837] ss:$8 sm:$0xf]
    %v3840 = vlaneseq
    %v3841 = vshrl.u32 %v3840, 7
    %v3842 = vsub.s32 0, %v3841
    %v3843 = vrot.slane %v3838, %v3842
    %v3844 = vlaneseq
    %v3845 = vshrl.u32 %v3844, 7
    %v3846 = vsub.s32 1, %v3845
    %v3847 = vrot.slane %v3838, %v3846
    %v3848 = vlaneseq
    %v3849 = vshrl.u32 %v3848, 7
    %v3850 = vsub.s32 2, %v3849
    %v3851 = vrot.slane %v3838, %v3850
    %v3852 = vlaneseq
    %v3853 = vshrl.u32 %v3852, 7
    %v3854 = vsub.s32 3, %v3853
    %v3855 = vrot.slane %v3838, %v3854
    %3860 = vmatprep.subr.bf16.mxu0 %v3582
    %3861 = vmatpush1.bf16.msra.mxu0 %v3581
    %3862 = vmatprep.subr.bf16.mxu0 %v3586
    %3863 = vmatpush1.bf16.msra.mxu0 %v3585
    %3864 = vmatprep.subr.bf16.mxu0 %v3590
    %3865 = vmatpush1.bf16.msra.mxu0 %v3589
    %3866 = vmatprep.subr.bf16.mxu0 %v3594
    %3867 = vmatpush1.bf16.msra.mxu0 %v3593
    %3868 = vmatprep.subr.bf16.mxu0 %v3598
    %3869 = vmatpush1.bf16.msra.mxu0 %v3597
    %3870 = vmatprep.subr.bf16.mxu0 %v3602
    %3871 = vmatpush1.bf16.msra.mxu0 %v3601
    %3872 = vmatprep.subr.bf16.mxu0 %v3606
    %3873 = vmatpush1.bf16.msra.mxu0 %v3605
    %3874 = vmatprep.subr.bf16.mxu0 %v3610
    %3875 = vmatpush1.bf16.msra.mxu0 %v3609
    %3876 = vmatprep.subr.bf16.mxu0 %v3614
    %3877 = vmatpush1.bf16.msra.mxu0 %v3613
    %3878 = vmatprep.subr.bf16.mxu0 %v3618
    %3879 = vmatpush1.bf16.msra.mxu0 %v3617
    %3880 = vmatprep.subr.bf16.mxu0 %v3622
    %3881 = vmatpush1.bf16.msra.mxu0 %v3621
    %3882 = vmatprep.subr.bf16.mxu0 %v3626
    %3883 = vmatpush1.bf16.msra.mxu0 %v3625
    %3884 = vmatprep.subr.bf16.mxu0 %v3630
    %3885 = vmatpush1.bf16.msra.mxu0 %v3629
    %3886 = vmatprep.subr.bf16.mxu0 %v3634
    %3887 = vmatpush1.bf16.msra.mxu0 %v3633
    %3888 = vmatprep.subr.bf16.mxu0 %v3638
    %3889 = vmatpush1.bf16.msra.mxu0 %v3637
    %3890 = vmatprep.subr.bf16.mxu0 %v3642
    %3891 = vmatpush1.bf16.msra.mxu0 %v3641
    %3892 = vmatprep.mubr.bf16.mxu0 %v3574
    %3893 = vmatmul.mubr.bf16.gmra.mrb[0].mxu0 %v3573
    %v3894 = vpop.f32.mrb[0].mxu0
    %v3895 = vadd.f32 %v3843, %v3894
    %v3896 = vpop.f32.mrb[0].mxu0
    %v3897 = vadd.f32 %v3847, %v3896
    %v3898 = vpop.f32.mrb[0].mxu0
    %v3899 = vpop.f32.mrb[0].mxu0
    %3900 = vdwg.mxu0
    %3901 = vmatprep.subr.bf16.mxu0 %v3646
    %3902 = vmatpush1.bf16.msra.mxu0 %v3645
    %3903 = vmatprep.subr.bf16.mxu0 %v3650
    %3904 = vmatpush1.bf16.msra.mxu0 %v3649
    %3905 = vmatprep.subr.bf16.mxu0 %v3654
    %3906 = vmatpush1.bf16.msra.mxu0 %v3653
    %3907 = vmatprep.subr.bf16.mxu0 %v3658
    %3908 = vmatpush1.bf16.msra.mxu0 %v3657
    %3909 = vmatprep.subr.bf16.mxu0 %v3662
    %3910 = vmatpush1.bf16.msra.mxu0 %v3661
    %3911 = vmatprep.subr.bf16.mxu0 %v3666
    %3912 = vmatpush1.bf16.msra.mxu0 %v3665
    %3913 = vmatprep.subr.bf16.mxu0 %v3670
    %3914 = vmatpush1.bf16.msra.mxu0 %v3669
    %3915 = vmatprep.subr.bf16.mxu0 %v3674
    %3916 = vmatpush1.bf16.msra.mxu0 %v3673
    %3917 = vmatprep.subr.bf16.mxu0 %v3678
    %3918 = vmatpush1.bf16.msra.mxu0 %v3677
    %3919 = vmatprep.subr.bf16.mxu0 %v3682
    %3920 = vmatpush1.bf16.msra.mxu0 %v3681
    %3921 = vmatprep.subr.bf16.mxu0 %v3686
    %3922 = vmatpush1.bf16.msra.mxu0 %v3685
    %3923 = vmatprep.subr.bf16.mxu0 %v3690
    %3924 = vmatpush1.bf16.msra.mxu0 %v3689
    %3925 = vmatprep.subr.bf16.mxu0 %v3694
    %3926 = vmatpush1.bf16.msra.mxu0 %v3693
    %3927 = vmatprep.subr.bf16.mxu0 %v3698
    %3928 = vmatpush1.bf16.msra.mxu0 %v3697
    %3929 = vmatprep.subr.bf16.mxu0 %v3702
    %3930 = vmatpush1.bf16.msra.mxu0 %v3701
    %3931 = vmatprep.subr.bf16.mxu0 %v3706
    %3932 = vmatpush1.bf16.msra.mxu0 %v3705
    %3933 = vmatprep.mubr.bf16.mxu0 %v3576
    %3934 = vmatmul.mubr.bf16.gmra.mrb[0].mxu0 %v3575
    %v3935 = vpop.f32.mrb[0].mxu0
    %v3936 = vadd.f32 %v3895, %v3935
    %v3937 = vpop.f32.mrb[0].mxu0
    %v3938 = vadd.f32 %v3897, %v3937
    %v3939 = vpop.f32.mrb[0].mxu0
    %v3940 = vpop.f32.mrb[0].mxu0
    %3941 = vdwg.mxu0
    %3942 = vmatprep.subr.bf16.mxu0 %v3710
    %3943 = vmatpush1.bf16.msra.mxu0 %v3709
    %3944 = vmatprep.subr.bf16.mxu0 %v3714
    %3945 = vmatpush1.bf16.msra.mxu0 %v3713
    %3946 = vmatprep.subr.bf16.mxu0 %v3718
    %3947 = vmatpush1.bf16.msra.mxu0 %v3717
    %3948 = vmatprep.subr.bf16.mxu0 %v3722
    %3949 = vmatpush1.bf16.msra.mxu0 %v3721
    %3950 = vmatprep.subr.bf16.mxu0 %v3726
    %3951 = vmatpush1.bf16.msra.mxu0 %v3725
    %3952 = vmatprep.subr.bf16.mxu0 %v3730
    %3953 = vmatpush1.bf16.msra.mxu0 %v3729
    %3954 = vmatprep.subr.bf16.mxu0 %v3734
    %3955 = vmatpush1.bf16.msra.mxu0 %v3733
    %3956 = vmatprep.subr.bf16.mxu0 %v3738
    %3957 = vmatpush1.bf16.msra.mxu0 %v3737
    %3958 = vmatprep.subr.bf16.mxu0 %v3742
    %3959 = vmatpush1.bf16.msra.mxu0 %v3741
    %3960 = vmatprep.subr.bf16.mxu0 %v3746
    %3961 = vmatpush1.bf16.msra.mxu0 %v3745
    %3962 = vmatprep.subr.bf16.mxu0 %v3750
    %3963 = vmatpush1.bf16.msra.mxu0 %v3749
    %3964 = vmatprep.subr.bf16.mxu0 %v3754
    %3965 = vmatpush1.bf16.msra.mxu0 %v3753
    %3966 = vmatprep.subr.bf16.mxu0 %v3758
    %3967 = vmatpush1.bf16.msra.mxu0 %v3757
    %3968 = vmatprep.subr.bf16.mxu0 %v3762
    %3969 = vmatpush1.bf16.msra.mxu0 %v3761
    %3970 = vmatprep.subr.bf16.mxu0 %v3766
    %3971 = vmatpush1.bf16.msra.mxu0 %v3765
    %3972 = vmatprep.subr.bf16.mxu0 %v3770
    %3973 = vmatpush1.bf16.msra.mxu0 %v3769
    %3974 = vmatprep.mubr.bf16.mxu0 %v3578
    %3975 = vmatmul.mubr.bf16.gmra.mrb[0].mxu0 %v3577
    %v3976 = vpop.f32.mrb[0].mxu0
    %v3977 = vadd.f32 %v3936, %v3976
    %v3978 = vpop.f32.mrb[0].mxu0
    %v3979 = vadd.f32 %v3938, %v3978
    %v3980 = vpop.f32.mrb[0].mxu0
    %v3981 = vpop.f32.mrb[0].mxu0
    %3982 = vdwg.mxu0
    %3983 = vmatprep.subr.bf16.mxu0 %v3774
    %3984 = vmatpush1.bf16.msra.mxu0 %v3773
    %3985 = vmatprep.subr.bf16.mxu0 %v3778
    %3986 = vmatpush1.bf16.msra.mxu0 %v3777
    %3987 = vmatprep.subr.bf16.mxu0 %v3782
    %3988 = vmatpush1.bf16.msra.mxu0 %v3781
    %3989 = vmatprep.subr.bf16.mxu0 %v3786
    %3990 = vmatpush1.bf16.msra.mxu0 %v3785
    %3991 = vmatprep.subr.bf16.mxu0 %v3790
    %3992 = vmatpush1.bf16.msra.mxu0 %v3789
    %3993 = vmatprep.subr.bf16.mxu0 %v3794
    %3994 = vmatpush1.bf16.msra.mxu0 %v3793
    %3995 = vmatprep.subr.bf16.mxu0 %v3798
    %3996 = vmatpush1.bf16.msra.mxu0 %v3797
    %3997 = vmatprep.subr.bf16.mxu0 %v3802
    %3998 = vmatpush1.bf16.msra.mxu0 %v3801
    %3999 = vmatprep.subr.bf16.mxu0 %v3806
    %4000 = vmatpush1.bf16.msra.mxu0 %v3805
    %4001 = vmatprep.subr.bf16.mxu0 %v3810
    %4002 = vmatpush1.bf16.msra.mxu0 %v3809
    %4003 = vmatprep.subr.bf16.mxu0 %v3814
    %4004 = vmatpush1.bf16.msra.mxu0 %v3813
    %4005 = vmatprep.subr.bf16.mxu0 %v3818
    %4006 = vmatpush1.bf16.msra.mxu0 %v3817
    %4007 = vmatprep.subr.bf16.mxu0 %v3822
    %4008 = vmatpush1.bf16.msra.mxu0 %v3821
    %4009 = vmatprep.subr.bf16.mxu0 %v3826
    %4010 = vmatpush1.bf16.msra.mxu0 %v3825
    %4011 = vmatprep.subr.bf16.mxu0 %v3830
    %4012 = vmatpush1.bf16.msra.mxu0 %v3829
    %4013 = vmatprep.subr.bf16.mxu0 %v3834
    %4014 = vmatpush1.bf16.msra.mxu0 %v3833
    %4015 = vmatprep.mubr.bf16.mxu0 %v3580
    %4016 = vmatmul.mubr.bf16.gmra.mrb[0].mxu0 %v3579
    %v4017 = vpop.f32.mrb[0].mxu0
    %v4018 = vadd.f32 %v3977, %v4017
    %v4019 = vpop.f32.mrb[0].mxu0
    %v4020 = vadd.f32 %v3979, %v4019
    %v4021 = vpop.f32.mrb[0].mxu0
    %v4022 = vpop.f32.mrb[0].mxu0
    %4023 = vdwg.mxu0
    %4024 = vmatprep.subr.bf16.mxu0 %v3584
    %4025 = vmatpush1.bf16.msra.mxu0 %v3583
    %4026 = vmatprep.subr.bf16.mxu0 %v3588
    %4027 = vmatpush1.bf16.msra.mxu0 %v3587
    %4028 = vmatprep.subr.bf16.mxu0 %v3592
    %4029 = vmatpush1.bf16.msra.mxu0 %v3591
    %4030 = vmatprep.subr.bf16.mxu0 %v3596
    %4031 = vmatpush1.bf16.msra.mxu0 %v3595
    %4032 = vmatprep.subr.bf16.mxu0 %v3600
    %4033 = vmatpush1.bf16.msra.mxu0 %v3599
    %4034 = vmatprep.subr.bf16.mxu0 %v3604
    %4035 = vmatpush1.bf16.msra.mxu0 %v3603
    %4036 = vmatprep.subr.bf16.mxu0 %v3608
    %4037 = vmatpush1.bf16.msra.mxu0 %v3607
    %4038 = vmatprep.subr.bf16.mxu0 %v3612
    %4039 = vmatpush1.bf16.msra.mxu0 %v3611
    %4040 = vmatprep.subr.bf16.mxu0 %v3616
    %4041 = vmatpush1.bf16.msra.mxu0 %v3615
    %4042 = vmatprep.subr.bf16.mxu0 %v3620
    %4043 = vmatpush1.bf16.msra.mxu0 %v3619
    %4044 = vmatprep.subr.bf16.mxu0 %v3624
    %4045 = vmatpush1.bf16.msra.mxu0 %v3623
    %4046 = vmatprep.subr.bf16.mxu0 %v3628
    %4047 = vmatpush1.bf16.msra.mxu0 %v3627
    %4048 = vmatprep.subr.bf16.mxu0 %v3632
    %4049 = vmatpush1.bf16.msra.mxu0 %v3631
    %4050 = vmatprep.subr.bf16.mxu0 %v3636
    %4051 = vmatpush1.bf16.msra.mxu0 %v3635
    %4052 = vmatprep.subr.bf16.mxu0 %v3640
    %4053 = vmatpush1.bf16.msra.mxu0 %v3639
    %4054 = vmatprep.subr.bf16.mxu0 %v3644
    %4055 = vmatpush1.bf16.msra.mxu0 %v3643
    %4056 = vmatprep.mubr.bf16.mxu0 %v3574
    %4057 = vmatmul.mubr.bf16.gmra.mrb[0].mxu0 %v3573
    %v4058 = vpop.f32.mrb[0].mxu0
    %v4059 = vadd.f32 %v3851, %v4058
    %v4060 = vpop.f32.mrb[0].mxu0
    %v4061 = vadd.f32 %v3855, %v4060
    %v4062 = vpop.f32.mrb[0].mxu0
    %v4063 = vpop.f32.mrb[0].mxu0
    %4064 = vdwg.mxu0
    %4065 = vmatprep.subr.bf16.mxu0 %v3648
    %4066 = vmatpush1.bf16.msra.mxu0 %v3647
    %4067 = vmatprep.subr.bf16.mxu0 %v3652
    %4068 = vmatpush1.bf16.msra.mxu0 %v3651
    %4069 = vmatprep.subr.bf16.mxu0 %v3656
    %4070 = vmatpush1.bf16.msra.mxu0 %v3655
    %4071 = vmatprep.subr.bf16.mxu0 %v3660
    %4072 = vmatpush1.bf16.msra.mxu0 %v3659
    %4073 = vmatprep.subr.bf16.mxu0 %v3664
    %4074 = vmatpush1.bf16.msra.mxu0 %v3663
    %4075 = vmatprep.subr.bf16.mxu0 %v3668
    %4076 = vmatpush1.bf16.msra.mxu0 %v3667
    %4077 = vmatprep.subr.bf16.mxu0 %v3672
    %4078 = vmatpush1.bf16.msra.mxu0 %v3671
    %4079 = vmatprep.subr.bf16.mxu0 %v3676
    %4080 = vmatpush1.bf16.msra.mxu0 %v3675
    %4081 = vmatprep.subr.bf16.mxu0 %v3680
    %4082 = vmatpush1.bf16.msra.mxu0 %v3679
    %4083 = vmatprep.subr.bf16.mxu0 %v3684
    %4084 = vmatpush1.bf16.msra.mxu0 %v3683
    %4085 = vmatprep.subr.bf16.mxu0 %v3688
    %4086 = vmatpush1.bf16.msra.mxu0 %v3687
    %4087 = vmatprep.subr.bf16.mxu0 %v3692
    %4088 = vmatpush1.bf16.msra.mxu0 %v3691
    %4089 = vmatprep.subr.bf16.mxu0 %v3696
    %4090 = vmatpush1.bf16.msra.mxu0 %v3695
    %4091 = vmatprep.subr.bf16.mxu0 %v3700
    %4092 = vmatpush1.bf16.msra.mxu0 %v3699
    %4093 = vmatprep.subr.bf16.mxu0 %v3704
    %4094 = vmatpush1.bf16.msra.mxu0 %v3703
    %4095 = vmatprep.subr.bf16.mxu0 %v3708
    %4096 = vmatpush1.bf16.msra.mxu0 %v3707
    %4097 = vmatprep.mubr.bf16.mxu0 %v3576
    %4098 = vmatmul.mubr.bf16.gmra.mrb[0].mxu0 %v3575
    %v4099 = vpop.f32.mrb[0].mxu0
    %v4100 = vadd.f32 %v4059, %v4099
    %v4101 = vpop.f32.mrb[0].mxu0
    %v4102 = vadd.f32 %v4061, %v4101
    %v4103 = vpop.f32.mrb[0].mxu0
    %v4104 = vpop.f32.mrb[0].mxu0
    %4105 = vdwg.mxu0
    %4106 = vmatprep.subr.bf16.mxu0 %v3712
    %4107 = vmatpush1.bf16.msra.mxu0 %v3711
    %4108 = vmatprep.subr.bf16.mxu0 %v3716
    %4109 = vmatpush1.bf16.msra.mxu0 %v3715
    %4110 = vmatprep.subr.bf16.mxu0 %v3720
    %4111 = vmatpush1.bf16.msra.mxu0 %v3719
    %4112 = vmatprep.subr.bf16.mxu0 %v3724
    %4113 = vmatpush1.bf16.msra.mxu0 %v3723
    %4114 = vmatprep.subr.bf16.mxu0 %v3728
    %4115 = vmatpush1.bf16.msra.mxu0 %v3727
    %4116 = vmatprep.subr.bf16.mxu0 %v3732
    %4117 = vmatpush1.bf16.msra.mxu0 %v3731
    %4118 = vmatprep.subr.bf16.mxu0 %v3736
    %4119 = vmatpush1.bf16.msra.mxu0 %v3735
    %4120 = vmatprep.subr.bf16.mxu0 %v3740
    %4121 = vmatpush1.bf16.msra.mxu0 %v3739
    %4122 = vmatprep.subr.bf16.mxu0 %v3744
    %4123 = vmatpush1.bf16.msra.mxu0 %v3743
    %4124 = vmatprep.subr.bf16.mxu0 %v3748
    %4125 = vmatpush1.bf16.msra.mxu0 %v3747
    %4126 = vmatprep.subr.bf16.mxu0 %v3752
    %4127 = vmatpush1.bf16.msra.mxu0 %v3751
    %4128 = vmatprep.subr.bf16.mxu0 %v3756
    %4129 = vmatpush1.bf16.msra.mxu0 %v3755
    %4130 = vmatprep.subr.bf16.mxu0 %v3760
    %4131 = vmatpush1.bf16.msra.mxu0 %v3759
    %4132 = vmatprep.subr.bf16.mxu0 %v3764
    %4133 = vmatpush1.bf16.msra.mxu0 %v3763
    %4134 = vmatprep.subr.bf16.mxu0 %v3768
    %4135 = vmatpush1.bf16.msra.mxu0 %v3767
    %4136 = vmatprep.subr.bf16.mxu0 %v3772
    %4137 = vmatpush1.bf16.msra.mxu0 %v3771
    %4138 = vmatprep.mubr.bf16.mxu0 %v3578
    %4139 = vmatmul.mubr.bf16.gmra.mrb[0].mxu0 %v3577
    %v4140 = vpop.f32.mrb[0].mxu0
    %v4141 = vadd.f32 %v4100, %v4140
    %v4142 = vpop.f32.mrb[0].mxu0
    %v4143 = vadd.f32 %v4102, %v4142
    %v4144 = vpop.f32.mrb[0].mxu0
    %v4145 = vpop.f32.mrb[0].mxu0
    %4146 = vdwg.mxu0
    %4147 = vmatprep.subr.bf16.mxu0 %v3776
    %4148 = vmatpush1.bf16.msra.mxu0 %v3775
    %4149 = vmatprep.subr.bf16.mxu0 %v3780
    %4150 = vmatpush1.bf16.msra.mxu0 %v3779
    %4151 = vmatprep.subr.bf16.mxu0 %v3784
    %4152 = vmatpush1.bf16.msra.mxu0 %v3783
    %4153 = vmatprep.subr.bf16.mxu0 %v3788
    %4154 = vmatpush1.bf16.msra.mxu0 %v3787
    %4155 = vmatprep.subr.bf16.mxu0 %v3792
    %4156 = vmatpush1.bf16.msra.mxu0 %v3791
    %4157 = vmatprep.subr.bf16.mxu0 %v3796
    %4158 = vmatpush1.bf16.msra.mxu0 %v3795
    %4159 = vmatprep.subr.bf16.mxu0 %v3800
    %4160 = vmatpush1.bf16.msra.mxu0 %v3799
    %4161 = vmatprep.subr.bf16.mxu0 %v3804
    %4162 = vmatpush1.bf16.msra.mxu0 %v3803
    %4163 = vmatprep.subr.bf16.mxu0 %v3808
    %4164 = vmatpush1.bf16.msra.mxu0 %v3807
    %4165 = vmatprep.subr.bf16.mxu0 %v3812
    %4166 = vmatpush1.bf16.msra.mxu0 %v3811
    %4167 = vmatprep.subr.bf16.mxu0 %v3816
    %4168 = vmatpush1.bf16.msra.mxu0 %v3815
    %4169 = vmatprep.subr.bf16.mxu0 %v3820
    %4170 = vmatpush1.bf16.msra.mxu0 %v3819
    %4171 = vmatprep.subr.bf16.mxu0 %v3824
    %4172 = vmatpush1.bf16.msra.mxu0 %v3823
    %4173 = vmatprep.subr.bf16.mxu0 %v3828
    %4174 = vmatpush1.bf16.msra.mxu0 %v3827
    %4175 = vmatprep.subr.bf16.mxu0 %v3832
    %4176 = vmatpush1.bf16.msra.mxu0 %v3831
    %4177 = vmatprep.subr.bf16.mxu0 %v3836
    %4178 = vmatpush1.bf16.msra.mxu0 %v3835
    %4179 = vmatprep.mubr.bf16.mxu0 %v3580
    %4180 = vmatmul.mubr.bf16.gmra.mrb[0].mxu0 %v3579
    %v4181 = vpop.f32.mrb[0].mxu0
    %v4182 = vadd.f32 %v4141, %v4181
    %v4183 = vpop.f32.mrb[0].mxu0
    %v4184 = vadd.f32 %v4143, %v4183
    %v4185 = vpop.f32.mrb[0].mxu0
    %v4186 = vpop.f32.mrb[0].mxu0
    %4187 = vdwg.mxu0
    %v4188 = vmax.f32 %v4018, 0.0
    %v4189 = vmax.f32 %v4020, 0.0
    %v4190 = vmax.f32 %v4182, 0.0
    %v4191 = vmax.f32 %v4184, 0.0
    %v4192 = vpack.c.bf16 %v4188, %v4188
    %v4193 = vpack.c.bf16 %v4189, %v4189
    %v4194 = vpack.c.bf16 %v4190, %v4190
    %v4195 = vpack.c.bf16 %v4191, %v4191
    %v4196 = vld [vmem:[%s6] sm:$0xf]
    %v4197 = vld [vmem:[%s6 + $0x4] sm:$0xf]
    %v4198 = vld [vmem:[%s6 + $0x8] sm:$0xf]
    %v4199 = vld [vmem:[%s6 + $0xc] sm:$0xf]
    %v4200 = vld [vmem:[%s6 + $0x10] sm:$0xf]
    %v4201 = vld [vmem:[%s6 + $0x14] sm:$0xf]
    %v4202 = vld [vmem:[%s6 + $0x18] sm:$0xf]
    %v4203 = vld [vmem:[%s6 + $0x1c] sm:$0xf]
    %v4204 = vld [vmem:[%s6 + $0x20] sm:$0xf]
    %v4205 = vld [vmem:[%s6 + $0x24] sm:$0xf]
    %v4206 = vld [vmem:[%s6 + $0x28] sm:$0xf]
    %v4207 = vld [vmem:[%s6 + $0x2c] sm:$0xf]
    %v4208 = vld [vmem:[%s6 + $0x30] sm:$0xf]
    %v4209 = vld [vmem:[%s6 + $0x34] sm:$0xf]
    %v4210 = vld [vmem:[%s6 + $0x38] sm:$0xf]
    %v4211 = vld [vmem:[%s6 + $0x3c] sm:$0xf]
    %v4212 = vld [vmem:[%s6 + $0x40] sm:$0xf]
    %v4213 = vld [vmem:[%s6 + $0x44] sm:$0xf]
    %v4214 = vld [vmem:[%s6 + $0x48] sm:$0xf]
    %v4215 = vld [vmem:[%s6 + $0x4c] sm:$0xf]
    %v4216 = vld [vmem:[%s6 + $0x50] sm:$0xf]
    %v4217 = vld [vmem:[%s6 + $0x54] sm:$0xf]
    %v4218 = vld [vmem:[%s6 + $0x58] sm:$0xf]
    %v4219 = vld [vmem:[%s6 + $0x5c] sm:$0xf]
    %v4220 = vld [vmem:[%s6 + $0x60] sm:$0xf]
    %v4221 = vld [vmem:[%s6 + $0x64] sm:$0xf]
    %v4222 = vld [vmem:[%s6 + $0x68] sm:$0xf]
    %v4223 = vld [vmem:[%s6 + $0x6c] sm:$0xf]
    %v4224 = vld [vmem:[%s6 + $0x70] sm:$0xf]
    %v4225 = vld [vmem:[%s6 + $0x74] sm:$0xf]
    %v4226 = vld [vmem:[%s6 + $0x78] sm:$0xf]
    %v4227 = vld [vmem:[%s6 + $0x7c] sm:$0xf]
    %v4228 = vld [vmem:[%s6 + $0x80] sm:$0xf]
    %v4229 = vld [vmem:[%s6 + $0x84] sm:$0xf]
    %v4230 = vld [vmem:[%s6 + $0x88] sm:$0xf]
    %v4231 = vld [vmem:[%s6 + $0x8c] sm:$0xf]
    %v4232 = vld [vmem:[%s6 + $0x90] sm:$0xf]
    %v4233 = vld [vmem:[%s6 + $0x94] sm:$0xf]
    %v4234 = vld [vmem:[%s6 + $0x98] sm:$0xf]
    %v4235 = vld [vmem:[%s6 + $0x9c] sm:$0xf]
    %v4236 = vld [vmem:[%s6 + $0xa0] sm:$0xf]
    %v4237 = vld [vmem:[%s6 + $0xa4] sm:$0xf]
    %v4238 = vld [vmem:[%s6 + $0xa8] sm:$0xf]
    %v4239 = vld [vmem:[%s6 + $0xac] sm:$0xf]
    %v4240 = vld [vmem:[%s6 + $0xb0] sm:$0xf]
    %v4241 = vld [vmem:[%s6 + $0xb4] sm:$0xf]
    %v4242 = vld [vmem:[%s6 + $0xb8] sm:$0xf]
    %v4243 = vld [vmem:[%s6 + $0xbc] sm:$0xf]
    %v4244 = vld [vmem:[%s6 + $0xc0] sm:$0xf]
    %v4245 = vld [vmem:[%s6 + $0xc4] sm:$0xf]
    %v4246 = vld [vmem:[%s6 + $0xc8] sm:$0xf]
    %v4247 = vld [vmem:[%s6 + $0xcc] sm:$0xf]
    %v4248 = vld [vmem:[%s6 + $0xd0] sm:$0xf]
    %v4249 = vld [vmem:[%s6 + $0xd4] sm:$0xf]
    %v4250 = vld [vmem:[%s6 + $0xd8] sm:$0xf]
    %v4251 = vld [vmem:[%s6 + $0xdc] sm:$0xf]
    %v4252 = vld [vmem:[%s6 + $0xe0] sm:$0xf]
    %v4253 = vld [vmem:[%s6 + $0xe4] sm:$0xf]
    %v4254 = vld [vmem:[%s6 + $0xe8] sm:$0xf]
    %v4255 = vld [vmem:[%s6 + $0xec] sm:$0xf]
    %v4256 = vld [vmem:[%s6 + $0xf0] sm:$0xf]
    %v4257 = vld [vmem:[%s6 + $0xf4] sm:$0xf]
    %v4258 = vld [vmem:[%s6 + $0xf8] sm:$0xf]
    %v4259 = vld [vmem:[%s6 + $0xfc] sm:$0xf]
    %v4260 = vld [vmem:[%s7 + $0x6] ss:$0 sm:$0xff]
    %v4325 = vunpack.c.l.b16 %v4196
    %v4326 = vunpack.c.l.b16 %v4197
    %v4327 = vunpack.c.l.b16 %v4198
    %v4328 = vunpack.c.l.b16 %v4199
    %v4329 = vunpack.c.l.b16 %v4200
    %v4330 = vunpack.c.l.b16 %v4201
    %v4331 = vunpack.c.l.b16 %v4202
    %v4332 = vunpack.c.l.b16 %v4203
    %v4333 = vunpack.c.l.b16 %v4204
    %v4334 = vunpack.c.l.b16 %v4205
    %v4335 = vunpack.c.l.b16 %v4206
    %v4336 = vunpack.c.l.b16 %v4207
    %v4337 = vunpack.c.l.b16 %v4208
    %v4338 = vunpack.c.l.b16 %v4209
    %v4339 = vunpack.c.l.b16 %v4210
    %v4340 = vunpack.c.l.b16 %v4211
    %v4341 = vunpack.c.l.b16 %v4212
    %v4342 = vunpack.c.l.b16 %v4213
    %v4343 = vunpack.c.l.b16 %v4214
    %v4344 = vunpack.c.l.b16 %v4215
    %v4345 = vunpack.c.l.b16 %v4216
    %v4346 = vunpack.c.l.b16 %v4217
    %v4347 = vunpack.c.l.b16 %v4218
    %v4348 = vunpack.c.l.b16 %v4219
    %v4349 = vunpack.c.l.b16 %v4220
    %v4350 = vunpack.c.l.b16 %v4221
    %v4351 = vunpack.c.l.b16 %v4222
    %v4352 = vunpack.c.l.b16 %v4223
    %v4353 = vunpack.c.l.b16 %v4224
    %v4354 = vunpack.c.l.b16 %v4225
    %v4355 = vunpack.c.l.b16 %v4226
    %v4356 = vunpack.c.l.b16 %v4227
    %v4357 = vunpack.c.l.b16 %v4228
    %v4358 = vunpack.c.l.b16 %v4229
    %v4359 = vunpack.c.l.b16 %v4230
    %v4360 = vunpack.c.l.b16 %v4231
    %v4361 = vunpack.c.l.b16 %v4232
    %v4362 = vunpack.c.l.b16 %v4233
    %v4363 = vunpack.c.l.b16 %v4234
    %v4364 = vunpack.c.l.b16 %v4235
    %v4365 = vunpack.c.l.b16 %v4236
    %v4366 = vunpack.c.l.b16 %v4237
    %v4367 = vunpack.c.l.b16 %v4238
    %v4368 = vunpack.c.l.b16 %v4239
    %v4369 = vunpack.c.l.b16 %v4240
    %v4370 = vunpack.c.l.b16 %v4241
    %v4371 = vunpack.c.l.b16 %v4242
    %v4372 = vunpack.c.l.b16 %v4243
    %v4373 = vunpack.c.l.b16 %v4244
    %v4374 = vunpack.c.l.b16 %v4245
    %v4375 = vunpack.c.l.b16 %v4246
    %v4376 = vunpack.c.l.b16 %v4247
    %v4377 = vunpack.c.l.b16 %v4248
    %v4378 = vunpack.c.l.b16 %v4249
    %v4379 = vunpack.c.l.b16 %v4250
    %v4380 = vunpack.c.l.b16 %v4251
    %v4381 = vunpack.c.l.b16 %v4252
    %v4382 = vunpack.c.l.b16 %v4253
    %v4383 = vunpack.c.l.b16 %v4254
    %v4384 = vunpack.c.l.b16 %v4255
    %v4385 = vunpack.c.l.b16 %v4256
    %v4386 = vunpack.c.l.b16 %v4257
    %v4387 = vunpack.c.l.b16 %v4258
    %v4388 = vunpack.c.l.b16 %v4259
    %v4389 = vpack.c.b16 %v4326, %v4325
    %v4390 = vpack.c.b16 %v4328, %v4327
    %v4391 = vpack.c.b16 %v4330, %v4329
    %v4392 = vpack.c.b16 %v4332, %v4331
    %v4393 = vpack.c.b16 %v4334, %v4333
    %v4394 = vpack.c.b16 %v4336, %v4335
    %v4395 = vpack.c.b16 %v4338, %v4337
    %v4396 = vpack.c.b16 %v4340, %v4339
    %v4397 = vpack.c.b16 %v4342, %v4341
    %v4398 = vpack.c.b16 %v4344, %v4343
    %v4399 = vpack.c.b16 %v4346, %v4345
    %v4400 = vpack.c.b16 %v4348, %v4347
    %v4401 = vpack.c.b16 %v4350, %v4349
    %v4402 = vpack.c.b16 %v4352, %v4351
    %v4403 = vpack.c.b16 %v4354, %v4353
    %v4404 = vpack.c.b16 %v4356, %v4355
    %v4405 = vpack.c.b16 %v4358, %v4357
    %v4406 = vpack.c.b16 %v4360, %v4359
    %v4407 = vpack.c.b16 %v4362, %v4361
    %v4408 = vpack.c.b16 %v4364, %v4363
    %v4409 = vpack.c.b16 %v4366, %v4365
    %v4410 = vpack.c.b16 %v4368, %v4367
    %v4411 = vpack.c.b16 %v4370, %v4369
    %v4412 = vpack.c.b16 %v4372, %v4371
    %v4413 = vpack.c.b16 %v4374, %v4373
    %v4414 = vpack.c.b16 %v4376, %v4375
    %v4415 = vpack.c.b16 %v4378, %v4377
    %v4416 = vpack.c.b16 %v4380, %v4379
    %v4417 = vpack.c.b16 %v4382, %v4381
    %v4418 = vpack.c.b16 %v4384, %v4383
    %v4419 = vpack.c.b16 %v4386, %v4385
    %v4420 = vpack.c.b16 %v4388, %v4387
    %4453 = vmatprep.subr.bf16.mxu0 0
    %4454 = vmatpush1.bf16.msra.mxu0 %v4389
    %4455 = vmatprep.subr.bf16.mxu0 0
    %4456 = vmatpush1.bf16.msra.mxu0 %v4390
    %4457 = vmatprep.subr.bf16.mxu0 0
    %4458 = vmatpush1.bf16.msra.mxu0 %v4391
    %4459 = vmatprep.subr.bf16.mxu0 0
    %4460 = vmatpush1.bf16.msra.mxu0 %v4392
    %4461 = vmatprep.subr.bf16.mxu0 0
    %4462 = vmatpush1.bf16.msra.mxu0 %v4393
    %4463 = vmatprep.subr.bf16.mxu0 0
    %4464 = vmatpush1.bf16.msra.mxu0 %v4394
    %4465 = vmatprep.subr.bf16.mxu0 0
    %4466 = vmatpush1.bf16.msra.mxu0 %v4395
    %4467 = vmatprep.subr.bf16.mxu0 0
    %4468 = vmatpush1.bf16.msra.mxu0 %v4396
    %4469 = vmatprep.subr.bf16.mxu0 0
    %4470 = vmatpush1.bf16.msra.mxu0 %v4397
    %4471 = vmatprep.subr.bf16.mxu0 0
    %4472 = vmatpush1.bf16.msra.mxu0 %v4398
    %4473 = vmatprep.subr.bf16.mxu0 0
    %4474 = vmatpush1.bf16.msra.mxu0 %v4399
    %4475 = vmatprep.subr.bf16.mxu0 0
    %4476 = vmatpush1.bf16.msra.mxu0 %v4400
    %4477 = vmatprep.subr.bf16.mxu0 0
    %4478 = vmatpush1.bf16.msra.mxu0 %v4401
    %4479 = vmatprep.subr.bf16.mxu0 0
    %4480 = vmatpush1.bf16.msra.mxu0 %v4402
    %4481 = vmatprep.subr.bf16.mxu0 0
    %4482 = vmatpush1.bf16.msra.mxu0 %v4403
    %4483 = vmatprep.subr.bf16.mxu0 0
    %4484 = vmatpush1.bf16.msra.mxu0 %v4404
    %4485 = vmatprep.mubr.bf16.mxu0 %v4193
    %4486 = vmatmul.mubr.bf16.gmra.mrb[0].mxu0 %v4192
    %v4487 = vpop.f32.mrb[0].mxu0
    %v4488 = vadd.f32 %v4260, %v4487
    %v4489 = vpop.f32.mrb[0].mxu0
    %v4490 = vpop.f32.mrb[0].mxu0
    %v4491 = vpop.f32.mrb[0].mxu0
    %4492 = vdwg.mxu0
    %4493 = vmatprep.subr.bf16.mxu0 0
    %4494 = vmatpush1.bf16.msra.mxu0 %v4405
    %4495 = vmatprep.subr.bf16.mxu0 0
    %4496 = vmatpush1.bf16.msra.mxu0 %v4406
    %4497 = vmatprep.subr.bf16.mxu0 0
    %4498 = vmatpush1.bf16.msra.mxu0 %v4407
    %4499 = vmatprep.subr.bf16.mxu0 0
    %4500 = vmatpush1.bf16.msra.mxu0 %v4408
    %4501 = vmatprep.subr.bf16.mxu0 0
    %4502 = vmatpush1.bf16.msra.mxu0 %v4409
    %4503 = vmatprep.subr.bf16.mxu0 0
    %4504 = vmatpush1.bf16.msra.mxu0 %v4410
    %4505 = vmatprep.subr.bf16.mxu0 0
    %4506 = vmatpush1.bf16.msra.mxu0 %v4411
    %4507 = vmatprep.subr.bf16.mxu0 0
    %4508 = vmatpush1.bf16.msra.mxu0 %v4412
    %4509 = vmatprep.subr.bf16.mxu0 0
    %4510 = vmatpush1.bf16.msra.mxu0 %v4413
    %4511 = vmatprep.subr.bf16.mxu0 0
    %4512 = vmatpush1.bf16.msra.mxu0 %v4414
    %4513 = vmatprep.subr.bf16.mxu0 0
    %4514 = vmatpush1.bf16.msra.mxu0 %v4415
    %4515 = vmatprep.subr.bf16.mxu0 0
    %4516 = vmatpush1.bf16.msra.mxu0 %v4416
    %4517 = vmatprep.subr.bf16.mxu0 0
    %4518 = vmatpush1.bf16.msra.mxu0 %v4417
    %4519 = vmatprep.subr.bf16.mxu0 0
    %4520 = vmatpush1.bf16.msra.mxu0 %v4418
    %4521 = vmatprep.subr.bf16.mxu0 0
    %4522 = vmatpush1.bf16.msra.mxu0 %v4419
    %4523 = vmatprep.subr.bf16.mxu0 0
    %4524 = vmatpush1.bf16.msra.mxu0 %v4420
    %4525 = vmatprep.mubr.bf16.mxu0 %v4195
    %4526 = vmatmul.mubr.bf16.gmra.mrb[0].mxu0 %v4194
    %v4527 = vpop.f32.mrb[0].mxu0
    %v4528 = vadd.f32 %v4488, %v4527
    %v4529 = vpop.f32.mrb[0].mxu0
    %v4530 = vpop.f32.mrb[0].mxu0
    %v4531 = vpop.f32.mrb[0].mxu0
    %4532 = vdwg.mxu0
    %vm4533 = vcmask 114688
    %4534 = vst.msk [vmem:[#allocation9] sm:$0x1] %vm4533, %v4528
    // Predicated region
    $region38: #{tpu_custom_call.1} parent=1 // pred_check
      _
    $region39: #{tpu_custom_call.1} parent=1 // pred_check_branch
      %4536 = sbr.rel (0) target = $region41
    $region40: #{tpu_custom_call.1} parent=1 // pred_region
      %s4538 = ssub.s32 16, 16
      %4539 = vsyncadd [#allocation6], %s4538
      %s4541 = sshll.u32 [#allocation9], 4
      %s4542 = int_to_ptr.vmem [resolvable:$true] %s4541
      %4544 = dma.vmem_to_hbm [thread:$0]  %s4542, 16, %s8, [#allocation6]
    $region41: #{tpu_custom_call.1} parent=1 // pred_fallthru
      _
    // Predicated region
    $region42: #{tpu_custom_call.1} parent=1 // pred_check
      _
    $region43: #{tpu_custom_call.1} parent=1 // pred_check_branch
      %4546 = sbr.rel (0) target = $region45
    $region44: #{tpu_custom_call.1} parent=1 // pred_region
      %4547 = dma.done [#allocation6], 16
    $region45: #{tpu_custom_call.1} parent=1 // pred_fallthru
      _
    %4548 = vsyncpa [#allocation5], 1
    %4549 = vsyncpa [#allocation8], 1
    %4550 = vsyncpa [#allocation6], 1
  %4551 = vsyncmov [#allocation3]
  %s4552 = vpop.sfrf %4551
  %p4553 = scmp.eq.s32.totalorder %s4552, 0
  %p4554 = pneg %p4553
  %4556 = shalt.err (%p4554)

</llo_original>
